<compile_context>
chip_gen: v7x
topology: tpu7x:2x2x1
jax: 0.10.0
libtpu: 0.0.40
codegen_flags: <defaults>
</compile_context>

<pallas_src>
import jax
import jax.numpy as jnp
from jax import lax
from jax.experimental import pallas as pl
from jax.experimental.pallas import tpu as pltpu


def _round_up(x, m):
    return (x + m - 1) // m * m


def graph_clustering_loss(A, Y, *, tm_target=256, tk_target=512):
    """A: (n, n) f32/bf16 adjacency, Y: (n, C) cluster logits -> scalar f32 loss."""
    n, C = Y.shape
    assert A.shape == (n, n)
    if A.dtype != jnp.bfloat16:          # keep bf16 inputs bf16 (halves HBM bytes)
        A = A.astype(jnp.float32)
    Y = Y.astype(jnp.float32)

    # Pad node count to a lane-aligned multiple so every A block is (8,128)-legal,
    # then pick the largest 128-multiple tile sizes that divide n_pad.
    n_pad = _round_up(n, 128)
    tk = min(tk_target, n_pad)
    while n_pad % tk:
        tk -= 128
    tm = min(tm_target, n_pad)
    while n_pad % tm:
        tm -= 128

    if n_pad != n:
        pad = n_pad - n
        A = jnp.pad(A, ((0, pad), (0, pad)))   # zero rows/cols: contribute nothing
        Y = jnp.pad(Y, ((0, pad), (0, 0)))     # padded softmax rows masked in-kernel

    grid = (n_pad // tm, n_pad // tk)          # reduction axis (k) last

    def kernel(y_ref, a_ref, out_ref, ysm_ref, ay_ref, m_ref):
        i = pl.program_id(0)
        k = pl.program_id(1)
        last_i = pl.num_programs(0) - 1
        last_k = pl.num_programs(1) - 1

        # ---- prologue: softmax(Y) once into scratch; zero M accumulator ----
        @pl.when((i == 0) & (k == 0))
        def _():
            yl = y_ref[...]                                       # (n_pad, C) f32
            mx = jnp.max(yl, axis=1, keepdims=True)
            e = jnp.exp(yl - mx)
            ysm = e / jnp.sum(e, axis=1, keepdims=True)
            if n_pad != n:                                        # static check
                ridx = lax.broadcasted_iota(jnp.int32, (n_pad, C), 0)
                ysm = jnp.where(ridx < n, ysm, 0.0)               # kill padded rows
            ysm_ref[...] = ysm
            m_ref[...] = jnp.zeros_like(m_ref)

        # ---- zero the per-row-block AY accumulator at the start of each k pass
        @pl.when(k == 0)
        def _():
            ay_ref[...] = jnp.zeros_like(ay_ref)

        # ---- AY_i += A[i, k] @ Ysm[k]   (MXU, f32 accumulation) ----
        a_blk = a_ref[...]                                        # (tm, tk)
        k_start = pl.multiple_of(k * tk, tk)
        y_k = ysm_ref[pl.ds(k_start, tk), :]                      # (tk, C)
        if a_blk.dtype != jnp.float32:                            # bf16 streaming path
            y_k = y_k.astype(a_blk.dtype)
        ay_ref[...] += jnp.dot(a_blk, y_k, preferred_element_type=jnp.float32)

        # ---- fold row block into M at end of contraction: M += Ysm_i^T @ AY_i
        @pl.when(k == last_k)
        def _():
            i_start = pl.multiple_of(i * tm, tm)
            y_i = ysm_ref[pl.ds(i_start, tm), :]                  # (tm, C)
            m_ref[...] += lax.dot_general(
                y_i, ay_ref[...],
                dimension_numbers=(((0,), (0,)), ((), ())),        # contract dim 0
                preferred_element_type=jnp.float32)

        # ---- epilogue: runs exactly once at the final grid point ----
        @pl.when((i == last_i) & (k == last_k))
        def _():
            M = m_ref[...]                                        # (C, C)
            nwc = jnp.sum(ysm_ref[...], axis=0, keepdims=True)    # (1, C)
            max_ewc = (nwc * (nwc - 1.0) + 1e-08) * 0.5

            row = lax.broadcasted_iota(jnp.int32, (C, C), 0)
            col = lax.broadcasted_iota(jnp.int32, (C, C), 1)
            total_ewc = jnp.sum(jnp.where(row == col, M, 0.0),
                                axis=0, keepdims=True)            # diag(M) as (1, C)
            cohesion = jnp.sum(total_ewc / max_ewc)

            inter = jnp.sum(jnp.where(row < col, M, 0.0))
            total_edges = jnp.sum(M)        # == sum(A): softmax rows sum to 1
            coupling = inter / (total_edges + 1e-09)

            out_ref[0, 0] = -cohesion + coupling

    out = pl.pallas_call(
        kernel,
        out_shape=jax.ShapeDtypeStruct((1, 1), jnp.float32),
        grid_spec=pltpu.PrefetchScalarGridSpec(
            num_scalar_prefetch=0,
            grid=grid,
            in_specs=[
                pl.BlockSpec((n_pad, C), lambda i, k: (0, 0)),    # Y logits: resident
                pl.BlockSpec((tm, tk), lambda i, k: (i, k)),      # A: streamed tiles
            ],
            out_specs=pl.BlockSpec(memory_space=pltpu.MemorySpace.SMEM),
            scratch_shapes=[
                pltpu.VMEM((n_pad, C), jnp.float32),   # softmax(Y)
                pltpu.VMEM((tm, C), jnp.float32),      # AY row-block accumulator
                pltpu.VMEM((C, C), jnp.float32),       # M accumulator
            ],
        ),
        compiler_params=pltpu.CompilerParams(
            # Both axes carry VMEM-scratch state across grid steps (AY across k,
            # M / Ysm across i), so both must stay "arbitrary".
            # TODO(synk): for v7x megacore, split the i axis across cores with
            # per-core partial (C, C) M outputs combined in a tiny epilogue.
            dimension_semantics=("arbitrary", "arbitrary"),
            vmem_limit_bytes=32 * 1024 * 1024,
        ),
    )(Y, A)
    return out[0, 0]


def graph_clustering_loss_ref(A, Y):
    """Pure-JAX reference, mathematically identical to the PyTorch forward.

    Uses the association Y^T @ (A @ Y) (matmul is associative) so the float
    rounding path matches the tiled kernel closely.
    """
    Y = jax.nn.softmax(Y, axis=1)
    AY = A @ Y
    M = Y.T @ AY
    total_ewc = jnp.diagonal(M)
    nwc = jnp.sum(Y, axis=0)
    max_ewc = (nwc * (nwc - 1) + 1e-08) / 2
    cohesion = jnp.sum(total_ewc / max_ewc)
    C = Y.shape[1]
    inter = jnp.sum(jnp.where(jnp.triu(jnp.ones((C, C), bool), k=1), M, 0.0))
    total_edges = jnp.sum(A)
    coupling = inter / (total_edges + 1e-09)
    return -cohesion + coupling


if __name__ == "__main__":
    # Deterministic parameter init (unused in forward, matches nn.Parameter(0.5)).
    lambda_param = jnp.float32(0.5)  # noqa: F841

    key = jax.random.PRNGKey(0)
    k_a, k_y = jax.random.split(key)

    n, C = 1000, 8  # exercises padding (1000 -> 1024) and multi-block i/k grid
    # Symmetric non-negative adjacency with zero diagonal.
    A_raw = jax.random.uniform(k_a, (n, n), dtype=jnp.float32)
    A = (A_raw + A_raw.T) * 0.5
    A = A * (1.0 - jnp.eye(n, dtype=jnp.float32))
    Y = jax.random.normal(k_y, (n, C), dtype=jnp.float32)

    loss = graph_clustering_loss(A, Y)
    jax.block_until_ready(loss)

    ref = graph_clustering_loss_ref(A, Y)
    assert jnp.allclose(loss, ref, rtol=1e-4, atol=1e-4), (loss, ref)

    print("KERNEL_OK")
</pallas_src>

<mosaic_0001>
module attributes {stable_mosaic.version = 11 : i64} {
  func.func @kernel(%arg0: i32, %arg1: i32, %arg2: memref<1024x8xf32, #tpu.memory_space<vmem>>, %arg3: memref<256x512xf32, #tpu.memory_space<vmem>>, %arg4: memref<1x1xf32, #tpu.memory_space<smem>>, %arg5: memref<1024x8xf32, #tpu.memory_space<vmem>>, %arg6: memref<256x8xf32, #tpu.memory_space<vmem>>, %arg7: memref<8x8xf32, #tpu.memory_space<vmem>>) attributes {dimension_semantics = [#tpu.dimension_semantics<arbitrary>, #tpu.dimension_semantics<arbitrary>], iteration_bounds = array<i64: 4, 2>, scalar_prefetch = 0 : i64, scratch_operands = 3 : i64, tpu.core_type = #tpu.core_type<tc>, window_params = [{pipeline_mode = #tpu.pipeline_mode<synchronous>, transform_indices = @transform_0, window_bounds = array<i64: 1024, 8>}, {transform_indices = @transform_1, window_bounds = array<i64: 256, 512>}, {transform_indices = @transform_2, window_bounds = array<i64: 1, 1>}]} {
    %c0_i32 = arith.constant 0 : i32
    %0 = arith.cmpi eq, %arg0, %c0_i32 : i32
    %c0_i32_0 = arith.constant 0 : i32
    %1 = arith.cmpi eq, %arg1, %c0_i32_0 : i32
    %2 = arith.andi %0, %1 : i1
    %3 = arith.extui %2 : i1 to i32
    %c0_i32_1 = arith.constant 0 : i32
    %4 = arith.cmpi ne, %3, %c0_i32_1 : i32
    scf.if %4 {
      %c0_13 = arith.constant 0 : index
      %c0_14 = arith.constant 0 : index
      %25 = vector.load %arg2[%c0_13, %c0_14] : memref<1024x8xf32, #tpu.memory_space<vmem>>, vector<1024x8xf32>
      %cst_15 = arith.constant dense<0xFF800000> : vector<1024xf32>
      %26 = vector.multi_reduction <maximumf>, %25, %cst_15 [1] : vector<1024x8xf32> to vector<1024xf32>
      %27 = vector.shape_cast %26 : vector<1024xf32> to vector<1024x1xf32>
      %28 = vector.broadcast %27 : vector<1024x1xf32> to vector<1024x8xf32>
      %29 = arith.subf %25, %28 : vector<1024x8xf32>
      %30 = math.exp %29 : vector<1024x8xf32>
      %cst_16 = arith.constant dense<0.000000e+00> : vector<1024xf32>
      %31 = vector.multi_reduction <add>, %30, %cst_16 [1] : vector<1024x8xf32> to vector<1024xf32>
      %32 = vector.shape_cast %31 : vector<1024xf32> to vector<1024x1xf32>
      %33 = vector.broadcast %32 : vector<1024x1xf32> to vector<1024x8xf32>
      %34 = arith.divf %30, %33 : vector<1024x8xf32>
      %35 = tpu.iota {dimensions = array<i32: 0>} : vector<1024x8xi32>
      %c1000_i32 = arith.constant 1000 : i32
      %36 = vector.broadcast %c1000_i32 : i32 to vector<1024x8xi32>
      %37 = arith.cmpi slt, %35, %36 : vector<1024x8xi32>
      %cst_17 = arith.constant 0.000000e+00 : f32
      %38 = vector.broadcast %cst_17 : f32 to vector<1024x8xf32>
      %39 = arith.select %37, %34, %38 : vector<1024x8xi1>, vector<1024x8xf32>
      %c0_18 = arith.constant 0 : index
      %c0_19 = arith.constant 0 : index
      %40 = vector.load %arg5[%c0_18, %c0_19] : memref<1024x8xf32, #tpu.memory_space<vmem>>, vector<1024x8xf32>
      tpu.vector_store %arg5[%c0_18, %c0_19], %39 {strides = array<i32>} : memref<1024x8xf32, #tpu.memory_space<vmem>>, vector<1024x8xf32>,
      %cst_20 = arith.constant 0.000000e+00 : f32
      %41 = vector.broadcast %cst_20 : f32 to vector<8x8xf32>
      %c0_21 = arith.constant 0 : index
      %c0_22 = arith.constant 0 : index
      %42 = vector.load %arg7[%c0_21, %c0_22] : memref<8x8xf32, #tpu.memory_space<vmem>>, vector<8x8xf32>
      tpu.vector_store %arg7[%c0_21, %c0_22], %41 {strides = array<i32>} : memref<8x8xf32, #tpu.memory_space<vmem>>, vector<8x8xf32>,
    } else {
    }
    %c0_i32_2 = arith.constant 0 : i32
    %5 = arith.cmpi eq, %arg1, %c0_i32_2 : i32
    %6 = arith.extui %5 : i1 to i32
    %c0_i32_3 = arith.constant 0 : i32
    %7 = arith.cmpi ne, %6, %c0_i32_3 : i32
    scf.if %7 {
      %cst_13 = arith.constant 0.000000e+00 : f32
      %25 = vector.broadcast %cst_13 : f32 to vector<256x8xf32>
      %c0_14 = arith.constant 0 : index
      %c0_15 = arith.constant 0 : index
      %26 = vector.load %arg6[%c0_14, %c0_15] : memref<256x8xf32, #tpu.memory_space<vmem>>, vector<256x8xf32>
      tpu.vector_store %arg6[%c0_14, %c0_15], %25 {strides = array<i32>} : memref<256x8xf32, #tpu.memory_space<vmem>>, vector<256x8xf32>,
    } else {
    }
    %c0 = arith.constant 0 : index
    %c0_4 = arith.constant 0 : index
    %8 = vector.load %arg3[%c0, %c0_4] : memref<256x512xf32, #tpu.memory_space<vmem>>, vector<256x512xf32>
    %c512_i32 = arith.constant 512 : i32
    %9 = arith.muli %arg1, %c512_i32 : i32
    %10 = tpu.assume_multiple %9, 512 : i32
    %11 = arith.index_cast %10 : i32 to index
    %c0_5 = arith.constant 0 : index
    %12 = vector.load %arg5[%11, %c0_5] : memref<1024x8xf32, #tpu.memory_space<vmem>>, vector<512x8xf32>
    %c0_6 = arith.constant 0 : index
    %c0_7 = arith.constant 0 : index
    %13 = vector.load %arg6[%c0_6, %c0_7] : memref<256x8xf32, #tpu.memory_space<vmem>>, vector<256x8xf32>
    %cst = arith.constant dense<0.000000e+00> : vector<256x8xf32>
    %14 = tpu.matmul %8, %12, %cst {dimension_numbers = #tpu.dot_dimension_numbers<[1], [0], [0], [1], [0, 0, 1, 1], [], []>} : vector<256x512xf32>, vector<512x8xf32>, vector<256x8xf32> -> vector<256x8xf32>
    %15 = arith.addf %13, %14 : vector<256x8xf32>
    %c0_8 = arith.constant 0 : index
    %c0_9 = arith.constant 0 : index
    %16 = vector.load %arg6[%c0_8, %c0_9] : memref<256x8xf32, #tpu.memory_space<vmem>>, vector<256x8xf32>
    tpu.vector_store %arg6[%c0_8, %c0_9], %15 {strides = array<i32>} : memref<256x8xf32, #tpu.memory_space<vmem>>, vector<256x8xf32>,
    %c1_i32 = arith.constant 1 : i32
    %17 = arith.cmpi eq, %arg1, %c1_i32 : i32
    %18 = arith.extui %17 : i1 to i32
    %c0_i32_10 = arith.constant 0 : i32
    %19 = arith.cmpi ne, %18, %c0_i32_10 : i32
    scf.if %19 {
      %c256_i32 = arith.constant 256 : i32
      %25 = arith.muli %arg0, %c256_i32 : i32
      %26 = tpu.assume_multiple %25, 256 : i32
      %27 = arith.index_cast %26 : i32 to index
      %c0_13 = arith.constant 0 : index
      %28 = vector.load %arg5[%27, %c0_13] : memref<1024x8xf32, #tpu.memory_space<vmem>>, vector<256x8xf32>
      %c0_14 = arith.constant 0 : index
      %c0_15 = arith.constant 0 : index
      %29 = vector.load %arg7[%c0_14, %c0_15] : memref<8x8xf32, #tpu.memory_space<vmem>>, vector<8x8xf32>
      %c0_16 = arith.constant 0 : index
      %c0_17 = arith.constant 0 : index
      %30 = vector.load %arg6[%c0_16, %c0_17] : memref<256x8xf32, #tpu.memory_space<vmem>>, vector<256x8xf32>
      %cst_18 = arith.constant dense<0.000000e+00> : vector<8x8xf32>
      %31 = tpu.matmul %28, %30, %cst_18 {dimension_numbers = #tpu.dot_dimension_numbers<[0], [0], [1], [1], [0, 1, 1, 1], [], []>} : vector<256x8xf32>, vector<256x8xf32>, vector<8x8xf32> -> vector<8x8xf32>
      %32 = arith.addf %29, %31 : vector<8x8xf32>
      %c0_19 = arith.constant 0 : index
      %c0_20 = arith.constant 0 : index
      %33 = vector.load %arg7[%c0_19, %c0_20] : memref<8x8xf32, #tpu.memory_space<vmem>>, vector<8x8xf32>
      tpu.vector_store %arg7[%c0_19, %c0_20], %32 {strides = array<i32>} : memref<8x8xf32, #tpu.memory_space<vmem>>, vector<8x8xf32>,
    } else {
    }
    %c3_i32 = arith.constant 3 : i32
    %20 = arith.cmpi eq, %arg0, %c3_i32 : i32
    %c1_i32_11 = arith.constant 1 : i32
    %21 = arith.cmpi eq, %arg1, %c1_i32_11 : i32
    %22 = arith.andi %20, %21 : i1
    %23 = arith.extui %22 : i1 to i32
    %c0_i32_12 = arith.constant 0 : i32
    %24 = arith.cmpi ne, %23, %c0_i32_12 : i32
    scf.if %24 {
      %c0_13 = arith.constant 0 : index
      %c0_14 = arith.constant 0 : index
      %25 = vector.load %arg7[%c0_13, %c0_14] : memref<8x8xf32, #tpu.memory_space<vmem>>, vector<8x8xf32>
      %c0_15 = arith.constant 0 : index
      %c0_16 = arith.constant 0 : index
      %26 = vector.load %arg5[%c0_15, %c0_16] : memref<1024x8xf32, #tpu.memory_space<vmem>>, vector<1024x8xf32>
      %cst_17 = arith.constant dense<0.000000e+00> : vector<8xf32>
      %27 = vector.multi_reduction <add>, %26, %cst_17 [0] : vector<1024x8xf32> to vector<8xf32>
      %28 = vector.shape_cast %27 : vector<8xf32> to vector<1x8xf32>
      %cst_18 = arith.constant 1.000000e+00 : f32
      %29 = vector.broadcast %cst_18 : f32 to vector<1x8xf32>
      %30 = arith.subf %28, %29 : vector<1x8xf32>
      %31 = arith.mulf %28, %30 : vector<1x8xf32>
      %cst_19 = arith.constant 9.99999993E-9 : f32
      %32 = vector.broadcast %cst_19 : f32 to vector<1x8xf32>
      %33 = arith.addf %31, %32 : vector<1x8xf32>
      %cst_20 = arith.constant 5.000000e-01 : f32
      %34 = vector.broadcast %cst_20 : f32 to vector<1x8xf32>
      %35 = arith.mulf %33, %34 : vector<1x8xf32>
      %36 = tpu.iota {dimensions = array<i32: 0>} : vector<8x8xi32>
      %37 = tpu.iota {dimensions = array<i32: 1>} : vector<8x8xi32>
      %38 = arith.cmpi eq, %36, %37 : vector<8x8xi32>
      %cst_21 = arith.constant 0.000000e+00 : f32
      %39 = vector.broadcast %cst_21 : f32 to vector<8x8xf32>
      %40 = arith.select %38, %25, %39 : vector<8x8xi1>, vector<8x8xf32>
      %cst_22 = arith.constant dense<0.000000e+00> : vector<8xf32>
      %41 = vector.multi_reduction <add>, %40, %cst_22 [0] : vector<8x8xf32> to vector<8xf32>
      %42 = vector.shape_cast %41 : vector<8xf32> to vector<1x8xf32>
      %43 = arith.divf %42, %35 : vector<1x8xf32>
      %44 = vector.shape_cast %43 : vector<1x8xf32> to vector<1x1x8xf32>
      %cst_23 = arith.constant dense<0.000000e+00> : vector<1xf32>
      %45 = vector.multi_reduction <add>, %44, %cst_23 [1, 2] : vector<1x1x8xf32> to vector<1xf32>
      %46 = vector.shape_cast %45 : vector<1xf32> to vector<1x1x1xf32>
      %47 = vector.extract %46[0, 0, 0] : f32 from vector<1x1x1xf32>
      %48 = arith.cmpi slt, %36, %37 : vector<8x8xi32>
      %cst_24 = arith.constant 0.000000e+00 : f32
      %49 = vector.broadcast %cst_24 : f32 to vector<8x8xf32>
      %50 = arith.select %48, %25, %49 : vector<8x8xi1>, vector<8x8xf32>
      %51 = vector.shape_cast %50 : vector<8x8xf32> to vector<1x8x8xf32>
      %cst_25 = arith.constant dense<0.000000e+00> : vector<1xf32>
      %52 = vector.multi_reduction <add>, %51, %cst_25 [1, 2] : vector<1x8x8xf32> to vector<1xf32>
      %53 = vector.shape_cast %52 : vector<1xf32> to vector<1x1x1xf32>
      %54 = vector.extract %53[0, 0, 0] : f32 from vector<1x1x1xf32>
      %55 = vector.shape_cast %25 : vector<8x8xf32> to vector<1x8x8xf32>
      %cst_26 = arith.constant dense<0.000000e+00> : vector<1xf32>
      %56 = vector.multi_reduction <add>, %55, %cst_26 [1, 2] : vector<1x8x8xf32> to vector<1xf32>
      %57 = vector.shape_cast %56 : vector<1xf32> to vector<1x1x1xf32>
      %58 = vector.extract %57[0, 0, 0] : f32 from vector<1x1x1xf32>
      %cst_27 = arith.constant 9.99999971E-10 : f32
      %59 = arith.addf %58, %cst_27 : f32
      %60 = arith.divf %54, %59 : f32
      %cst_28 = arith.constant 0.000000e+00 : f32
      %61 = arith.subf %cst_28, %47 : f32
      %62 = arith.addf %61, %60 : f32
      %c0_29 = arith.constant 0 : index
      %c0_30 = arith.constant 0 : index
      %63 = memref.load %arg4[%c0_29, %c0_30] : memref<1x1xf32, #tpu.memory_space<smem>>
      memref.store %62, %arg4[%c0_29, %c0_30] : memref<1x1xf32, #tpu.memory_space<smem>>
    } else {
    }
    return
  }
  func.func @transform_0(%arg0: i32, %arg1: i32) -> (i32, i32) {
    %c0_i32 = arith.constant 0 : i32
    %c0_i32_0 = arith.constant 0 : i32
    %c0_i32_1 = arith.constant 0 : i32
    return %c0_i32, %c0_i32_0 : i32, i32
  }
  func.func @transform_1(%arg0: i32, %arg1: i32) -> (i32, i32) {
    %c0_i32 = arith.constant 0 : i32
    return %arg0, %arg1 : i32, i32
  }
  func.func @transform_2(%arg0: i32, %arg1: i32) -> (i32, i32) {
    %c0_i32 = arith.constant 0 : i32
    %c0_i32_0 = arith.constant 0 : i32
    %c0_i32_1 = arith.constant 0 : i32
    return %c0_i32, %c0_i32_0 : i32, i32
  }
}

</mosaic_0001>

<llo_original>
// kernel: tpu_custom_call.1
$region0: #{tpu_custom_call.1}
  #allocation0 [shape = 'u32[]', space=smem, size = 0x4, offset = 0x4, fixed_abs, tag = 'smem constant byte address 0x4 - core index']
  #allocation1 [shape = 'u32[144,128]{1,0:T(1,128)}', space=vmem, size = 0x12000, scoped, tag = 'internal scratch']
  #allocation2 [shape = 'f32[1024,8]{1,0:T(8,128)}', space=vmem, size = 0x80000, scoped, tag = 'scratch operand']
  #allocation3 [shape = 'f32[256,8]{1,0:T(8,128)}', space=vmem, size = 0x20000, scoped, tag = 'scratch operand']
  #allocation4 [shape = 'f32[8,8]{1,0:T(8,128)}', space=vmem, size = 0x1000, scoped, tag = 'scratch operand']
  %s0 = inlined_call_operand.vmem [shape: f32[1024,8], index: 0, kind: input, shape index: {}]
  %s1 = inlined_call_operand.hbm [shape: f32[1024,1024], index: 1, kind: input, shape index: {}]
  %s2 = inlined_call_operand.hbm [shape: f32[1,1], index: 2, kind: output, shape index: {}]
  %s3 = sld [smem:[#allocation0]]
  $region61: #{tpu_custom_call.1} parent=0
    _
  %s5 = ssub.s32 1, %s3
  %s6 = scalar_select 0, %s5, %s3
  $region1: #{tpu_custom_call.1} parent=0
    #allocation5 [shape = 'u8[1048576]{0}', space=vmem, size = 0x100000, scoped, tag = 'input window, operand 1']
    #allocation6 [shape = 's32[2]{0}', space=sflag, size = 0x8, scoped, tag = 'scoped memory for tpu_custom_call.1']
    #allocation7 [shape = 's32[2]{0}', space=sflag, size = 0x8, scoped, tag = 'scoped memory for tpu_custom_call.1']
    #allocation8 [shape = 'u8[512]{0}', space=smem, size = 0x200, scoped, tag = 'output window, operand 0, single buffered']
    %7 = vsyncpa [#allocation6], 0
    %s8 = scalar_lea.sflag [#allocation6], 1
    %9 = vsyncpa %s8, 0
    %10 = vsyncpa [#allocation7], 0
    loop: start=0, step=1, limit=10
    $region2: #{tpu_custom_call.1} parent=1 // loop_pre_header
      _
    $region3: #{tpu_custom_call.1} parent=1 // loop_header
      %s12 = sphi 0, %s16
      %p13 = scmp.ge.s32.totalorder %s12, 10
      %s19 = sphi 0, %s31
      %s20 = sphi 0, %s27
      %s21 = sphi 0, %s19
      %s22 = sphi 0, %s20
      %s23 = sphi 0, %s21
      %s24 = sphi 0, %s22
      %s32 = sphi 0, %s32
      %s34 = sphi 0, %s32
      %s35 = sphi 0, %s34
      %s49 = sphi 0, %s35
      %s57 = sphi 0, %s59
      %s60 = sphi 0, %s57
      %s61 = sphi 0, %s60
      %s77 = sphi 0, %s61
      %s81 = sphi 0, %s81
      %s83 = sphi 0, %s81
      %s84 = sphi 0, %s83
      %s98 = sphi 0, %s84
    $region4: #{tpu_custom_call.1} parent=1 // loop_header_branch
      %15 = sbr.rel (%p13) target = $region8
    $region5: #{tpu_custom_call.1} parent=1 // loop_body
      %s17 = ssub.s32 %s12, 1
      %s18 = ssub.s32 %s12, 2
      %s25 = sadd.s32 1, %s20
      %p26 = scmp.ge.s32.totalorder %s25, 2
      %s27 = scalar_select %p26, 0, %s25
      %s28 = sadd.s32 1, %s19
      %s29 = scalar_select %p26, %s28, %s19
      %p30 = scmp.ge.s32.totalorder %s29, 4
      %s31 = scalar_select %p30, 0, %s29
      %s33 = sadd.s32 %s32, 1
      %p36 = scmp.eq.s32.totalorder %s12, 7
      %p37 = scmp.ne.s32.totalorder %s32, %s34
      %p38 = scmp.eq.s32.totalorder %s12, 0
      %p39 = por %p37, %p38
      %p40 = scmp.ne.s32.totalorder %s32, %s34
      %p41 = scmp.eq.s32.totalorder %s17, 7
      %p42 = por %p40, %p41
      %p43 = scmp.ne.s32.totalorder %s34, %s35
      %p44 = scmp.eq.s32.totalorder %s17, 0
      %p45 = por %p43, %p44
      %p46 = scmp.ne.s32.totalorder %s34, %s35
      %p47 = scmp.eq.s32.totalorder %s18, 7
      %p48 = por %p46, %p47
      %p50 = scmp.ne.s32.totalorder %s35, %s49
      %p51 = scmp.eq.s32.totalorder %s18, 0
      %p52 = por %p50, %p51
      %s53 = ssub.s32 %s19, %s31
      %s54 = ssub.s32 %s20, %s27
      %s55 = sor.u32 %s53, %s54
      %p56 = scmp.eq.s32.totalorder %s55, 0
      %s58 = sadd.s32 %s57, 1
      %s59 = scalar_select %p56, %s57, %s58
      %p62 = pneg %p56
      %p63 = scmp.eq.s32.totalorder %s12, 7
      %p64 = por %p62, %p63
      %p65 = scmp.ne.s32.totalorder %s57, %s60
      %p66 = scmp.eq.s32.totalorder %s12, 0
      %p67 = por %p65, %p66
      %p68 = scmp.ne.s32.totalorder %s57, %s60
      %p69 = scmp.eq.s32.totalorder %s17, 7
      %p70 = por %p68, %p69
      %p71 = scmp.ne.s32.totalorder %s60, %s61
      %p72 = scmp.eq.s32.totalorder %s17, 0
      %p73 = por %p71, %p72
      %p74 = scmp.ne.s32.totalorder %s60, %s61
      %p75 = scmp.eq.s32.totalorder %s18, 7
      %p76 = por %p74, %p75
      %p78 = scmp.ne.s32.totalorder %s61, %s77
      %p79 = scmp.eq.s32.totalorder %s18, 0
      %p80 = por %p78, %p79
      %s82 = sadd.s32 %s81, 1
      %p85 = scmp.eq.s32.totalorder %s12, 7
      %p86 = scmp.ne.s32.totalorder %s81, %s83
      %p87 = scmp.eq.s32.totalorder %s12, 0
      %p88 = por %p86, %p87
      %p89 = scmp.ne.s32.totalorder %s81, %s83
      %p90 = scmp.eq.s32.totalorder %s17, 7
      %p91 = por %p89, %p90
      %p92 = scmp.ne.s32.totalorder %s83, %s84
      %p93 = scmp.eq.s32.totalorder %s17, 0
      %p94 = por %p92, %p93
      %p95 = scmp.ne.s32.totalorder %s83, %s84
      %p96 = scmp.eq.s32.totalorder %s18, 7
      %p97 = por %p95, %p96
      %p99 = scmp.ne.s32.totalorder %s84, %s98
      %p100 = scmp.eq.s32.totalorder %s18, 0
      %p101 = por %p99, %p100
      %p102 = scmp.le.s32.totalorder 1, %s12
      %p103 = scmp.lt.s32.totalorder %s12, 9
      %p104 = pnand %p102, %p103
      %p105 = pneg %p104
      // Predicated region
      $region9: #{tpu_custom_call.1} parent=5 // pred_check
        _
      $region10: #{tpu_custom_call.1} parent=5 // pred_check_branch
        %107 = sbr.rel (%p104) target = $region12
      $region11: #{tpu_custom_call.1} parent=5 // pred_region
        %s108 = ssub.s32 %s12, 1
        // Predicated region
        $region13: #{tpu_custom_call.1} parent=11 // pred_check
          %p109 = pneg %p45
        $region14: #{tpu_custom_call.1} parent=11 // pred_check_branch
          %111 = sbr.rel (%p109) target = $region16
        $region15: #{tpu_custom_call.1} parent=11 // pred_region
          _
        $region16: #{tpu_custom_call.1} parent=11 // pred_fallthru
          _
      $region12: #{tpu_custom_call.1} parent=5 // pred_fallthru
        _
      %p112 = scmp.lt.s32.totalorder %s12, 8
      // Predicated region
      $region17: #{tpu_custom_call.1} parent=5 // pred_check
        %p113 = pneg %p112
      $region18: #{tpu_custom_call.1} parent=5 // pred_check_branch
        %115 = sbr.rel (%p113) target = $region20
      $region19: #{tpu_custom_call.1} parent=5 // pred_region
        // Predicated region
        $region21: #{tpu_custom_call.1} parent=19 // pred_check
          %p116 = pneg %p67
        $region22: #{tpu_custom_call.1} parent=19 // pred_check_branch
          %118 = sbr.rel (%p116) target = $region24
        $region23: #{tpu_custom_call.1} parent=19 // pred_region
          %s119 = sand.u32 %s57, 1
          %s120 = scalar_lea.sflag [#allocation6], %s119
          %s121 = sand.u32 %s57, 1
          %s122 = smul.addr %s121, 1024
          %s123 = scalar_lea.vmem [#allocation5], %s122
          %s124 = smul.u32 32, %s19
          %s125 = smul.u32 4, %s20
          %s127 = ssub.s32 16384, 16384
          %128 = vsyncadd %s120, %s127
          %s129 = smul.addr %s124, 8
          %s130 = sadd.s32 %s125, %s129
          %s131 = smul.addr %s130, 128
          %s132 = scalar_lea.hbm %s1, %s131
          %s133 = sshll.u32 %s123, 4
          %s134 = int_to_ptr.vmem [resolvable:$true] %s133
          %139 = dma.hbm_to_vmem [thread:$0]  %s132, 16384, %s134, %s120, 1024, 512, 32
        $region24: #{tpu_custom_call.1} parent=19 // pred_fallthru
          _
      $region20: #{tpu_custom_call.1} parent=5 // pred_fallthru
        _
      %p140 = scmp.le.s32.totalorder 1, %s12
      %p141 = scmp.lt.s32.totalorder %s12, 9
      %p142 = pnand %p140, %p141
      %p143 = pneg %p142
      // Predicated region
      $region25: #{tpu_custom_call.1} parent=5 // pred_check
        _
      $region26: #{tpu_custom_call.1} parent=5 // pred_check_branch
        %145 = sbr.rel (%p142) target = $region28
      $region27: #{tpu_custom_call.1} parent=5 // pred_region
        %s146 = ssub.s32 %s12, 1
        %s147 = sand.u32 %s60, 1
        %s148 = scalar_lea.sflag [#allocation6], %s147
        %s149 = sand.u32 %s60, 1
        %s150 = smul.addr %s149, 1024
        %s151 = scalar_lea.vmem [#allocation5], %s150
        // Predicated region
        $region29: #{tpu_custom_call.1} parent=27 // pred_check
          %p152 = pneg %p73
        $region30: #{tpu_custom_call.1} parent=27 // pred_check_branch
          %154 = sbr.rel (%p152) target = $region32
        $region31: #{tpu_custom_call.1} parent=27 // pred_region
          %155 = dma.done %s148, 16384
        $region32: #{tpu_custom_call.1} parent=27 // pred_fallthru
          _
        %p156 = pneg %p45
        %p157 = pneg %p42
        %s158 = sand.u32 %s60, 1
        %s159 = scalar_lea.sflag [#allocation6], %s158
        %s160 = sand.u32 %s60, 1
        %s161 = smul.addr %s160, 1024
        %s162 = scalar_lea.vmem [#allocation5], %s161
        %p163 = pneg %p73
        %p164 = pneg %p70
        %p165 = pneg %p94
        %p166 = pneg %p91
        %s167 = smul.u32 32, %s21
        %s168 = smul.u32 4, %s22
        %p169 = scmp.eq.s32.totalorder %s21, 0
        %p170 = scmp.eq.s32.totalorder %s22, 0
        %p171 = pnand %p169, %p170
        %p172 = pneg %p171
        // Predicated region
        $region33: #{tpu_custom_call.1} parent=27 // pred_check
          _
        $region34: #{tpu_custom_call.1} parent=27 // pred_check_branch
          %174 = sbr.rel (%p171) target = $region36
        $region35: #{tpu_custom_call.1} parent=27 // pred_region
          %v175 = vld [vmem:[%s0] sm:$0xff]
          %v176 = vld [vmem:[%s0 + $0x8] sm:$0xff]
          %v177 = vld [vmem:[%s0 + $0x10] sm:$0xff]
          %v178 = vld [vmem:[%s0 + $0x18] sm:$0xff]
          %v179 = vld [vmem:[%s0 + $0x20] sm:$0xff]
          %v180 = vld [vmem:[%s0 + $0x28] sm:$0xff]
          %v181 = vld [vmem:[%s0 + $0x30] sm:$0xff]
          %v182 = vld [vmem:[%s0 + $0x38] sm:$0xff]
          %v183 = vld [vmem:[%s0 + $0x40] sm:$0xff]
          %v184 = vld [vmem:[%s0 + $0x48] sm:$0xff]
          %v185 = vld [vmem:[%s0 + $0x50] sm:$0xff]
          %v186 = vld [vmem:[%s0 + $0x58] sm:$0xff]
          %v187 = vld [vmem:[%s0 + $0x60] sm:$0xff]
          %v188 = vld [vmem:[%s0 + $0x68] sm:$0xff]
          %v189 = vld [vmem:[%s0 + $0x70] sm:$0xff]
          %v190 = vld [vmem:[%s0 + $0x78] sm:$0xff]
          %v191 = vld [vmem:[%s0 + $0x80] sm:$0xff]
          %v192 = vld [vmem:[%s0 + $0x88] sm:$0xff]
          %v193 = vld [vmem:[%s0 + $0x90] sm:$0xff]
          %v194 = vld [vmem:[%s0 + $0x98] sm:$0xff]
          %v195 = vld [vmem:[%s0 + $0xa0] sm:$0xff]
          %v196 = vld [vmem:[%s0 + $0xa8] sm:$0xff]
          %v197 = vld [vmem:[%s0 + $0xb0] sm:$0xff]
          %v198 = vld [vmem:[%s0 + $0xb8] sm:$0xff]
          %v199 = vld [vmem:[%s0 + $0xc0] sm:$0xff]
          %v200 = vld [vmem:[%s0 + $0xc8] sm:$0xff]
          %v201 = vld [vmem:[%s0 + $0xd0] sm:$0xff]
          %v202 = vld [vmem:[%s0 + $0xd8] sm:$0xff]
          %v203 = vld [vmem:[%s0 + $0xe0] sm:$0xff]
          %v204 = vld [vmem:[%s0 + $0xe8] sm:$0xff]
          %v205 = vld [vmem:[%s0 + $0xf0] sm:$0xff]
          %v206 = vld [vmem:[%s0 + $0xf8] sm:$0xff]
          %v207 = vld [vmem:[%s0 + $0x100] sm:$0xff]
          %v208 = vld [vmem:[%s0 + $0x108] sm:$0xff]
          %v209 = vld [vmem:[%s0 + $0x110] sm:$0xff]
          %v210 = vld [vmem:[%s0 + $0x118] sm:$0xff]
          %v211 = vld [vmem:[%s0 + $0x120] sm:$0xff]
          %v212 = vld [vmem:[%s0 + $0x128] sm:$0xff]
          %v213 = vld [vmem:[%s0 + $0x130] sm:$0xff]
          %v214 = vld [vmem:[%s0 + $0x138] sm:$0xff]
          %v215 = vld [vmem:[%s0 + $0x140] sm:$0xff]
          %v216 = vld [vmem:[%s0 + $0x148] sm:$0xff]
          %v217 = vld [vmem:[%s0 + $0x150] sm:$0xff]
          %v218 = vld [vmem:[%s0 + $0x158] sm:$0xff]
          %v219 = vld [vmem:[%s0 + $0x160] sm:$0xff]
          %v220 = vld [vmem:[%s0 + $0x168] sm:$0xff]
          %v221 = vld [vmem:[%s0 + $0x170] sm:$0xff]
          %v222 = vld [vmem:[%s0 + $0x178] sm:$0xff]
          %v223 = vld [vmem:[%s0 + $0x180] sm:$0xff]
          %v224 = vld [vmem:[%s0 + $0x188] sm:$0xff]
          %v225 = vld [vmem:[%s0 + $0x190] sm:$0xff]
          %v226 = vld [vmem:[%s0 + $0x198] sm:$0xff]
          %v227 = vld [vmem:[%s0 + $0x1a0] sm:$0xff]
          %v228 = vld [vmem:[%s0 + $0x1a8] sm:$0xff]
          %v229 = vld [vmem:[%s0 + $0x1b0] sm:$0xff]
          %v230 = vld [vmem:[%s0 + $0x1b8] sm:$0xff]
          %v231 = vld [vmem:[%s0 + $0x1c0] sm:$0xff]
          %v232 = vld [vmem:[%s0 + $0x1c8] sm:$0xff]
          %v233 = vld [vmem:[%s0 + $0x1d0] sm:$0xff]
          %v234 = vld [vmem:[%s0 + $0x1d8] sm:$0xff]
          %v235 = vld [vmem:[%s0 + $0x1e0] sm:$0xff]
          %v236 = vld [vmem:[%s0 + $0x1e8] sm:$0xff]
          %v237 = vld [vmem:[%s0 + $0x1f0] sm:$0xff]
          %v238 = vld [vmem:[%s0 + $0x1f8] sm:$0xff]
          %v239 = vld [vmem:[%s0 + $0x200] sm:$0xff]
          %v240 = vld [vmem:[%s0 + $0x208] sm:$0xff]
          %v241 = vld [vmem:[%s0 + $0x210] sm:$0xff]
          %v242 = vld [vmem:[%s0 + $0x218] sm:$0xff]
          %v243 = vld [vmem:[%s0 + $0x220] sm:$0xff]
          %v244 = vld [vmem:[%s0 + $0x228] sm:$0xff]
          %v245 = vld [vmem:[%s0 + $0x230] sm:$0xff]
          %v246 = vld [vmem:[%s0 + $0x238] sm:$0xff]
          %v247 = vld [vmem:[%s0 + $0x240] sm:$0xff]
          %v248 = vld [vmem:[%s0 + $0x248] sm:$0xff]
          %v249 = vld [vmem:[%s0 + $0x250] sm:$0xff]
          %v250 = vld [vmem:[%s0 + $0x258] sm:$0xff]
          %v251 = vld [vmem:[%s0 + $0x260] sm:$0xff]
          %v252 = vld [vmem:[%s0 + $0x268] sm:$0xff]
          %v253 = vld [vmem:[%s0 + $0x270] sm:$0xff]
          %v254 = vld [vmem:[%s0 + $0x278] sm:$0xff]
          %v255 = vld [vmem:[%s0 + $0x280] sm:$0xff]
          %v256 = vld [vmem:[%s0 + $0x288] sm:$0xff]
          %v257 = vld [vmem:[%s0 + $0x290] sm:$0xff]
          %v258 = vld [vmem:[%s0 + $0x298] sm:$0xff]
          %v259 = vld [vmem:[%s0 + $0x2a0] sm:$0xff]
          %v260 = vld [vmem:[%s0 + $0x2a8] sm:$0xff]
          %v261 = vld [vmem:[%s0 + $0x2b0] sm:$0xff]
          %v262 = vld [vmem:[%s0 + $0x2b8] sm:$0xff]
          %v263 = vld [vmem:[%s0 + $0x2c0] sm:$0xff]
          %v264 = vld [vmem:[%s0 + $0x2c8] sm:$0xff]
          %v265 = vld [vmem:[%s0 + $0x2d0] sm:$0xff]
          %v266 = vld [vmem:[%s0 + $0x2d8] sm:$0xff]
          %v267 = vld [vmem:[%s0 + $0x2e0] sm:$0xff]
          %v268 = vld [vmem:[%s0 + $0x2e8] sm:$0xff]
          %v269 = vld [vmem:[%s0 + $0x2f0] sm:$0xff]
          %v270 = vld [vmem:[%s0 + $0x2f8] sm:$0xff]
          %v271 = vld [vmem:[%s0 + $0x300] sm:$0xff]
          %v272 = vld [vmem:[%s0 + $0x308] sm:$0xff]
          %v273 = vld [vmem:[%s0 + $0x310] sm:$0xff]
          %v274 = vld [vmem:[%s0 + $0x318] sm:$0xff]
          %v275 = vld [vmem:[%s0 + $0x320] sm:$0xff]
          %v276 = vld [vmem:[%s0 + $0x328] sm:$0xff]
          %v277 = vld [vmem:[%s0 + $0x330] sm:$0xff]
          %v278 = vld [vmem:[%s0 + $0x338] sm:$0xff]
          %v279 = vld [vmem:[%s0 + $0x340] sm:$0xff]
          %v280 = vld [vmem:[%s0 + $0x348] sm:$0xff]
          %v281 = vld [vmem:[%s0 + $0x350] sm:$0xff]
          %v282 = vld [vmem:[%s0 + $0x358] sm:$0xff]
          %v283 = vld [vmem:[%s0 + $0x360] sm:$0xff]
          %v284 = vld [vmem:[%s0 + $0x368] sm:$0xff]
          %v285 = vld [vmem:[%s0 + $0x370] sm:$0xff]
          %v286 = vld [vmem:[%s0 + $0x378] sm:$0xff]
          %v287 = vld [vmem:[%s0 + $0x380] sm:$0xff]
          %v288 = vld [vmem:[%s0 + $0x388] sm:$0xff]
          %v289 = vld [vmem:[%s0 + $0x390] sm:$0xff]
          %v290 = vld [vmem:[%s0 + $0x398] sm:$0xff]
          %v291 = vld [vmem:[%s0 + $0x3a0] sm:$0xff]
          %v292 = vld [vmem:[%s0 + $0x3a8] sm:$0xff]
          %v293 = vld [vmem:[%s0 + $0x3b0] sm:$0xff]
          %v294 = vld [vmem:[%s0 + $0x3b8] sm:$0xff]
          %v295 = vld [vmem:[%s0 + $0x3c0] sm:$0xff]
          %v296 = vld [vmem:[%s0 + $0x3c8] sm:$0xff]
          %v297 = vld [vmem:[%s0 + $0x3d0] sm:$0xff]
          %v298 = vld [vmem:[%s0 + $0x3d8] sm:$0xff]
          %v299 = vld [vmem:[%s0 + $0x3e0] sm:$0xff]
          %v300 = vld [vmem:[%s0 + $0x3e8] sm:$0xff]
          %v301 = vld [vmem:[%s0 + $0x3f0] sm:$0xff]
          %v302 = vld [vmem:[%s0 + $0x3f8] sm:$0xff]
          %vm303 = vcmask 64512
          %v304 = vsel %vm303, %v175, -inf
          %305 = vmax.xlane.f32.xlu0 %v304
          %v306 = vpop.xlane.xlu0 %305
          %v307 = vsel %vm303, %v176, -inf
          %308 = vmax.xlane.f32.xlu0 %v307
          %v309 = vpop.xlane.xlu0 %308
          %v310 = vsel %vm303, %v177, -inf
          %311 = vmax.xlane.f32.xlu0 %v310
          %v312 = vpop.xlane.xlu0 %311
          %v313 = vsel %vm303, %v178, -inf
          %314 = vmax.xlane.f32.xlu0 %v313
          %v315 = vpop.xlane.xlu0 %314
          %v316 = vsel %vm303, %v179, -inf
          %317 = vmax.xlane.f32.xlu0 %v316
          %v318 = vpop.xlane.xlu0 %317
          %v319 = vsel %vm303, %v180, -inf
          %320 = vmax.xlane.f32.xlu0 %v319
          %v321 = vpop.xlane.xlu0 %320
          %v322 = vsel %vm303, %v181, -inf
          %323 = vmax.xlane.f32.xlu0 %v322
          %v324 = vpop.xlane.xlu0 %323
          %v325 = vsel %vm303, %v182, -inf
          %326 = vmax.xlane.f32.xlu0 %v325
          %v327 = vpop.xlane.xlu0 %326
          %v328 = vsel %vm303, %v183, -inf
          %329 = vmax.xlane.f32.xlu0 %v328
          %v330 = vpop.xlane.xlu0 %329
          %v331 = vsel %vm303, %v184, -inf
          %332 = vmax.xlane.f32.xlu0 %v331
          %v333 = vpop.xlane.xlu0 %332
          %v334 = vsel %vm303, %v185, -inf
          %335 = vmax.xlane.f32.xlu0 %v334
          %v336 = vpop.xlane.xlu0 %335
          %v337 = vsel %vm303, %v186, -inf
          %338 = vmax.xlane.f32.xlu0 %v337
          %v339 = vpop.xlane.xlu0 %338
          %v340 = vsel %vm303, %v187, -inf
          %341 = vmax.xlane.f32.xlu0 %v340
          %v342 = vpop.xlane.xlu0 %341
          %v343 = vsel %vm303, %v188, -inf
          %344 = vmax.xlane.f32.xlu0 %v343
          %v345 = vpop.xlane.xlu0 %344
          %v346 = vsel %vm303, %v189, -inf
          %347 = vmax.xlane.f32.xlu0 %v346
          %v348 = vpop.xlane.xlu0 %347
          %v349 = vsel %vm303, %v190, -inf
          %350 = vmax.xlane.f32.xlu0 %v349
          %v351 = vpop.xlane.xlu0 %350
          %v352 = vsel %vm303, %v191, -inf
          %353 = vmax.xlane.f32.xlu0 %v352
          %v354 = vpop.xlane.xlu0 %353
          %v355 = vsel %vm303, %v192, -inf
          %356 = vmax.xlane.f32.xlu0 %v355
          %v357 = vpop.xlane.xlu0 %356
          %v358 = vsel %vm303, %v193, -inf
          %359 = vmax.xlane.f32.xlu0 %v358
          %v360 = vpop.xlane.xlu0 %359
          %v361 = vsel %vm303, %v194, -inf
          %362 = vmax.xlane.f32.xlu0 %v361
          %v363 = vpop.xlane.xlu0 %362
          %v364 = vsel %vm303, %v195, -inf
          %365 = vmax.xlane.f32.xlu0 %v364
          %v366 = vpop.xlane.xlu0 %365
          %v367 = vsel %vm303, %v196, -inf
          %368 = vmax.xlane.f32.xlu0 %v367
          %v369 = vpop.xlane.xlu0 %368
          %v370 = vsel %vm303, %v197, -inf
          %371 = vmax.xlane.f32.xlu0 %v370
          %v372 = vpop.xlane.xlu0 %371
          %v373 = vsel %vm303, %v198, -inf
          %374 = vmax.xlane.f32.xlu0 %v373
          %v375 = vpop.xlane.xlu0 %374
          %v376 = vsel %vm303, %v199, -inf
          %377 = vmax.xlane.f32.xlu0 %v376
          %v378 = vpop.xlane.xlu0 %377
          %v379 = vsel %vm303, %v200, -inf
          %380 = vmax.xlane.f32.xlu0 %v379
          %v381 = vpop.xlane.xlu0 %380
          %v382 = vsel %vm303, %v201, -inf
          %383 = vmax.xlane.f32.xlu0 %v382
          %v384 = vpop.xlane.xlu0 %383
          %v385 = vsel %vm303, %v202, -inf
          %386 = vmax.xlane.f32.xlu0 %v385
          %v387 = vpop.xlane.xlu0 %386
          %v388 = vsel %vm303, %v203, -inf
          %389 = vmax.xlane.f32.xlu0 %v388
          %v390 = vpop.xlane.xlu0 %389
          %v391 = vsel %vm303, %v204, -inf
          %392 = vmax.xlane.f32.xlu0 %v391
          %v393 = vpop.xlane.xlu0 %392
          %v394 = vsel %vm303, %v205, -inf
          %395 = vmax.xlane.f32.xlu0 %v394
          %v396 = vpop.xlane.xlu0 %395
          %v397 = vsel %vm303, %v206, -inf
          %398 = vmax.xlane.f32.xlu0 %v397
          %v399 = vpop.xlane.xlu0 %398
          %v400 = vsel %vm303, %v207, -inf
          %401 = vmax.xlane.f32.xlu0 %v400
          %v402 = vpop.xlane.xlu0 %401
          %v403 = vsel %vm303, %v208, -inf
          %404 = vmax.xlane.f32.xlu0 %v403
          %v405 = vpop.xlane.xlu0 %404
          %v406 = vsel %vm303, %v209, -inf
          %407 = vmax.xlane.f32.xlu0 %v406
          %v408 = vpop.xlane.xlu0 %407
          %v409 = vsel %vm303, %v210, -inf
          %410 = vmax.xlane.f32.xlu0 %v409
          %v411 = vpop.xlane.xlu0 %410
          %v412 = vsel %vm303, %v211, -inf
          %413 = vmax.xlane.f32.xlu0 %v412
          %v414 = vpop.xlane.xlu0 %413
          %v415 = vsel %vm303, %v212, -inf
          %416 = vmax.xlane.f32.xlu0 %v415
          %v417 = vpop.xlane.xlu0 %416
          %v418 = vsel %vm303, %v213, -inf
          %419 = vmax.xlane.f32.xlu0 %v418
          %v420 = vpop.xlane.xlu0 %419
          %v421 = vsel %vm303, %v214, -inf
          %422 = vmax.xlane.f32.xlu0 %v421
          %v423 = vpop.xlane.xlu0 %422
          %v424 = vsel %vm303, %v215, -inf
          %425 = vmax.xlane.f32.xlu0 %v424
          %v426 = vpop.xlane.xlu0 %425
          %v427 = vsel %vm303, %v216, -inf
          %428 = vmax.xlane.f32.xlu0 %v427
          %v429 = vpop.xlane.xlu0 %428
          %v430 = vsel %vm303, %v217, -inf
          %431 = vmax.xlane.f32.xlu0 %v430
          %v432 = vpop.xlane.xlu0 %431
          %v433 = vsel %vm303, %v218, -inf
          %434 = vmax.xlane.f32.xlu0 %v433
          %v435 = vpop.xlane.xlu0 %434
          %v436 = vsel %vm303, %v219, -inf
          %437 = vmax.xlane.f32.xlu0 %v436
          %v438 = vpop.xlane.xlu0 %437
          %v439 = vsel %vm303, %v220, -inf
          %440 = vmax.xlane.f32.xlu0 %v439
          %v441 = vpop.xlane.xlu0 %440
          %v442 = vsel %vm303, %v221, -inf
          %443 = vmax.xlane.f32.xlu0 %v442
          %v444 = vpop.xlane.xlu0 %443
          %v445 = vsel %vm303, %v222, -inf
          %446 = vmax.xlane.f32.xlu0 %v445
          %v447 = vpop.xlane.xlu0 %446
          %v448 = vsel %vm303, %v223, -inf
          %449 = vmax.xlane.f32.xlu0 %v448
          %v450 = vpop.xlane.xlu0 %449
          %v451 = vsel %vm303, %v224, -inf
          %452 = vmax.xlane.f32.xlu0 %v451
          %v453 = vpop.xlane.xlu0 %452
          %v454 = vsel %vm303, %v225, -inf
          %455 = vmax.xlane.f32.xlu0 %v454
          %v456 = vpop.xlane.xlu0 %455
          %v457 = vsel %vm303, %v226, -inf
          %458 = vmax.xlane.f32.xlu0 %v457
          %v459 = vpop.xlane.xlu0 %458
          %v460 = vsel %vm303, %v227, -inf
          %461 = vmax.xlane.f32.xlu0 %v460
          %v462 = vpop.xlane.xlu0 %461
          %v463 = vsel %vm303, %v228, -inf
          %464 = vmax.xlane.f32.xlu0 %v463
          %v465 = vpop.xlane.xlu0 %464
          %v466 = vsel %vm303, %v229, -inf
          %467 = vmax.xlane.f32.xlu0 %v466
          %v468 = vpop.xlane.xlu0 %467
          %v469 = vsel %vm303, %v230, -inf
          %470 = vmax.xlane.f32.xlu0 %v469
          %v471 = vpop.xlane.xlu0 %470
          %v472 = vsel %vm303, %v231, -inf
          %473 = vmax.xlane.f32.xlu0 %v472
          %v474 = vpop.xlane.xlu0 %473
          %v475 = vsel %vm303, %v232, -inf
          %476 = vmax.xlane.f32.xlu0 %v475
          %v477 = vpop.xlane.xlu0 %476
          %v478 = vsel %vm303, %v233, -inf
          %479 = vmax.xlane.f32.xlu0 %v478
          %v480 = vpop.xlane.xlu0 %479
          %v481 = vsel %vm303, %v234, -inf
          %482 = vmax.xlane.f32.xlu0 %v481
          %v483 = vpop.xlane.xlu0 %482
          %v484 = vsel %vm303, %v235, -inf
          %485 = vmax.xlane.f32.xlu0 %v484
          %v486 = vpop.xlane.xlu0 %485
          %v487 = vsel %vm303, %v236, -inf
          %488 = vmax.xlane.f32.xlu0 %v487
          %v489 = vpop.xlane.xlu0 %488
          %v490 = vsel %vm303, %v237, -inf
          %491 = vmax.xlane.f32.xlu0 %v490
          %v492 = vpop.xlane.xlu0 %491
          %v493 = vsel %vm303, %v238, -inf
          %494 = vmax.xlane.f32.xlu0 %v493
          %v495 = vpop.xlane.xlu0 %494
          %v496 = vsel %vm303, %v239, -inf
          %497 = vmax.xlane.f32.xlu0 %v496
          %v498 = vpop.xlane.xlu0 %497
          %v499 = vsel %vm303, %v240, -inf
          %500 = vmax.xlane.f32.xlu0 %v499
          %v501 = vpop.xlane.xlu0 %500
          %v502 = vsel %vm303, %v241, -inf
          %503 = vmax.xlane.f32.xlu0 %v502
          %v504 = vpop.xlane.xlu0 %503
          %v505 = vsel %vm303, %v242, -inf
          %506 = vmax.xlane.f32.xlu0 %v505
          %v507 = vpop.xlane.xlu0 %506
          %v508 = vsel %vm303, %v243, -inf
          %509 = vmax.xlane.f32.xlu0 %v508
          %v510 = vpop.xlane.xlu0 %509
          %v511 = vsel %vm303, %v244, -inf
          %512 = vmax.xlane.f32.xlu0 %v511
          %v513 = vpop.xlane.xlu0 %512
          %v514 = vsel %vm303, %v245, -inf
          %515 = vmax.xlane.f32.xlu0 %v514
          %v516 = vpop.xlane.xlu0 %515
          %v517 = vsel %vm303, %v246, -inf
          %518 = vmax.xlane.f32.xlu0 %v517
          %v519 = vpop.xlane.xlu0 %518
          %v520 = vsel %vm303, %v247, -inf
          %521 = vmax.xlane.f32.xlu0 %v520
          %v522 = vpop.xlane.xlu0 %521
          %v523 = vsel %vm303, %v248, -inf
          %524 = vmax.xlane.f32.xlu0 %v523
          %v525 = vpop.xlane.xlu0 %524
          %v526 = vsel %vm303, %v249, -inf
          %527 = vmax.xlane.f32.xlu0 %v526
          %v528 = vpop.xlane.xlu0 %527
          %v529 = vsel %vm303, %v250, -inf
          %530 = vmax.xlane.f32.xlu0 %v529
          %v531 = vpop.xlane.xlu0 %530
          %v532 = vsel %vm303, %v251, -inf
          %533 = vmax.xlane.f32.xlu0 %v532
          %v534 = vpop.xlane.xlu0 %533
          %v535 = vsel %vm303, %v252, -inf
          %536 = vmax.xlane.f32.xlu0 %v535
          %v537 = vpop.xlane.xlu0 %536
          %v538 = vsel %vm303, %v253, -inf
          %539 = vmax.xlane.f32.xlu0 %v538
          %v540 = vpop.xlane.xlu0 %539
          %v541 = vsel %vm303, %v254, -inf
          %542 = vmax.xlane.f32.xlu0 %v541
          %v543 = vpop.xlane.xlu0 %542
          %v544 = vsel %vm303, %v255, -inf
          %545 = vmax.xlane.f32.xlu0 %v544
          %v546 = vpop.xlane.xlu0 %545
          %v547 = vsel %vm303, %v256, -inf
          %548 = vmax.xlane.f32.xlu0 %v547
          %v549 = vpop.xlane.xlu0 %548
          %v550 = vsel %vm303, %v257, -inf
          %551 = vmax.xlane.f32.xlu0 %v550
          %v552 = vpop.xlane.xlu0 %551
          %v553 = vsel %vm303, %v258, -inf
          %554 = vmax.xlane.f32.xlu0 %v553
          %v555 = vpop.xlane.xlu0 %554
          %v556 = vsel %vm303, %v259, -inf
          %557 = vmax.xlane.f32.xlu0 %v556
          %v558 = vpop.xlane.xlu0 %557
          %v559 = vsel %vm303, %v260, -inf
          %560 = vmax.xlane.f32.xlu0 %v559
          %v561 = vpop.xlane.xlu0 %560
          %v562 = vsel %vm303, %v261, -inf
          %563 = vmax.xlane.f32.xlu0 %v562
          %v564 = vpop.xlane.xlu0 %563
          %v565 = vsel %vm303, %v262, -inf
          %566 = vmax.xlane.f32.xlu0 %v565
          %v567 = vpop.xlane.xlu0 %566
          %v568 = vsel %vm303, %v263, -inf
          %569 = vmax.xlane.f32.xlu0 %v568
          %v570 = vpop.xlane.xlu0 %569
          %v571 = vsel %vm303, %v264, -inf
          %572 = vmax.xlane.f32.xlu0 %v571
          %v573 = vpop.xlane.xlu0 %572
          %v574 = vsel %vm303, %v265, -inf
          %575 = vmax.xlane.f32.xlu0 %v574
          %v576 = vpop.xlane.xlu0 %575
          %v577 = vsel %vm303, %v266, -inf
          %578 = vmax.xlane.f32.xlu0 %v577
          %v579 = vpop.xlane.xlu0 %578
          %v580 = vsel %vm303, %v267, -inf
          %581 = vmax.xlane.f32.xlu0 %v580
          %v582 = vpop.xlane.xlu0 %581
          %v583 = vsel %vm303, %v268, -inf
          %584 = vmax.xlane.f32.xlu0 %v583
          %v585 = vpop.xlane.xlu0 %584
          %v586 = vsel %vm303, %v269, -inf
          %587 = vmax.xlane.f32.xlu0 %v586
          %v588 = vpop.xlane.xlu0 %587
          %v589 = vsel %vm303, %v270, -inf
          %590 = vmax.xlane.f32.xlu0 %v589
          %v591 = vpop.xlane.xlu0 %590
          %v592 = vsel %vm303, %v271, -inf
          %593 = vmax.xlane.f32.xlu0 %v592
          %v594 = vpop.xlane.xlu0 %593
          %v595 = vsel %vm303, %v272, -inf
          %596 = vmax.xlane.f32.xlu0 %v595
          %v597 = vpop.xlane.xlu0 %596
          %v598 = vsel %vm303, %v273, -inf
          %599 = vmax.xlane.f32.xlu0 %v598
          %v600 = vpop.xlane.xlu0 %599
          %v601 = vsel %vm303, %v274, -inf
          %602 = vmax.xlane.f32.xlu0 %v601
          %v603 = vpop.xlane.xlu0 %602
          %v604 = vsel %vm303, %v275, -inf
          %605 = vmax.xlane.f32.xlu0 %v604
          %v606 = vpop.xlane.xlu0 %605
          %v607 = vsel %vm303, %v276, -inf
          %608 = vmax.xlane.f32.xlu0 %v607
          %v609 = vpop.xlane.xlu0 %608
          %v610 = vsel %vm303, %v277, -inf
          %611 = vmax.xlane.f32.xlu0 %v610
          %v612 = vpop.xlane.xlu0 %611
          %v613 = vsel %vm303, %v278, -inf
          %614 = vmax.xlane.f32.xlu0 %v613
          %v615 = vpop.xlane.xlu0 %614
          %v616 = vsel %vm303, %v279, -inf
          %617 = vmax.xlane.f32.xlu0 %v616
          %v618 = vpop.xlane.xlu0 %617
          %v619 = vsel %vm303, %v280, -inf
          %620 = vmax.xlane.f32.xlu0 %v619
          %v621 = vpop.xlane.xlu0 %620
          %v622 = vsel %vm303, %v281, -inf
          %623 = vmax.xlane.f32.xlu0 %v622
          %v624 = vpop.xlane.xlu0 %623
          %v625 = vsel %vm303, %v282, -inf
          %626 = vmax.xlane.f32.xlu0 %v625
          %v627 = vpop.xlane.xlu0 %626
          %v628 = vsel %vm303, %v283, -inf
          %629 = vmax.xlane.f32.xlu0 %v628
          %v630 = vpop.xlane.xlu0 %629
          %v631 = vsel %vm303, %v284, -inf
          %632 = vmax.xlane.f32.xlu0 %v631
          %v633 = vpop.xlane.xlu0 %632
          %v634 = vsel %vm303, %v285, -inf
          %635 = vmax.xlane.f32.xlu0 %v634
          %v636 = vpop.xlane.xlu0 %635
          %v637 = vsel %vm303, %v286, -inf
          %638 = vmax.xlane.f32.xlu0 %v637
          %v639 = vpop.xlane.xlu0 %638
          %v640 = vsel %vm303, %v287, -inf
          %641 = vmax.xlane.f32.xlu0 %v640
          %v642 = vpop.xlane.xlu0 %641
          %v643 = vsel %vm303, %v288, -inf
          %644 = vmax.xlane.f32.xlu0 %v643
          %v645 = vpop.xlane.xlu0 %644
          %v646 = vsel %vm303, %v289, -inf
          %647 = vmax.xlane.f32.xlu0 %v646
          %v648 = vpop.xlane.xlu0 %647
          %v649 = vsel %vm303, %v290, -inf
          %650 = vmax.xlane.f32.xlu0 %v649
          %v651 = vpop.xlane.xlu0 %650
          %v652 = vsel %vm303, %v291, -inf
          %653 = vmax.xlane.f32.xlu0 %v652
          %v654 = vpop.xlane.xlu0 %653
          %v655 = vsel %vm303, %v292, -inf
          %656 = vmax.xlane.f32.xlu0 %v655
          %v657 = vpop.xlane.xlu0 %656
          %v658 = vsel %vm303, %v293, -inf
          %659 = vmax.xlane.f32.xlu0 %v658
          %v660 = vpop.xlane.xlu0 %659
          %v661 = vsel %vm303, %v294, -inf
          %662 = vmax.xlane.f32.xlu0 %v661
          %v663 = vpop.xlane.xlu0 %662
          %v664 = vsel %vm303, %v295, -inf
          %665 = vmax.xlane.f32.xlu0 %v664
          %v666 = vpop.xlane.xlu0 %665
          %v667 = vsel %vm303, %v296, -inf
          %668 = vmax.xlane.f32.xlu0 %v667
          %v669 = vpop.xlane.xlu0 %668
          %v670 = vsel %vm303, %v297, -inf
          %671 = vmax.xlane.f32.xlu0 %v670
          %v672 = vpop.xlane.xlu0 %671
          %v673 = vsel %vm303, %v298, -inf
          %674 = vmax.xlane.f32.xlu0 %v673
          %v675 = vpop.xlane.xlu0 %674
          %v676 = vsel %vm303, %v299, -inf
          %677 = vmax.xlane.f32.xlu0 %v676
          %v678 = vpop.xlane.xlu0 %677
          %v679 = vsel %vm303, %v300, -inf
          %680 = vmax.xlane.f32.xlu0 %v679
          %v681 = vpop.xlane.xlu0 %680
          %v682 = vsel %vm303, %v301, -inf
          %683 = vmax.xlane.f32.xlu0 %v682
          %v684 = vpop.xlane.xlu0 %683
          %v685 = vsel %vm303, %v302, -inf
          %686 = vmax.xlane.f32.xlu0 %v685
          %v687 = vpop.xlane.xlu0 %686
          %v688 = vsub.f32 %v175, %v306
          %v689 = vsub.f32 %v176, %v309
          %v690 = vsub.f32 %v177, %v312
          %v691 = vsub.f32 %v178, %v315
          %v692 = vsub.f32 %v179, %v318
          %v693 = vsub.f32 %v180, %v321
          %v694 = vsub.f32 %v181, %v324
          %v695 = vsub.f32 %v182, %v327
          %v696 = vsub.f32 %v183, %v330
          %v697 = vsub.f32 %v184, %v333
          %v698 = vsub.f32 %v185, %v336
          %v699 = vsub.f32 %v186, %v339
          %v700 = vsub.f32 %v187, %v342
          %v701 = vsub.f32 %v188, %v345
          %v702 = vsub.f32 %v189, %v348
          %v703 = vsub.f32 %v190, %v351
          %v704 = vsub.f32 %v191, %v354
          %v705 = vsub.f32 %v192, %v357
          %v706 = vsub.f32 %v193, %v360
          %v707 = vsub.f32 %v194, %v363
          %v708 = vsub.f32 %v195, %v366
          %v709 = vsub.f32 %v196, %v369
          %v710 = vsub.f32 %v197, %v372
          %v711 = vsub.f32 %v198, %v375
          %v712 = vsub.f32 %v199, %v378
          %v713 = vsub.f32 %v200, %v381
          %v714 = vsub.f32 %v201, %v384
          %v715 = vsub.f32 %v202, %v387
          %v716 = vsub.f32 %v203, %v390
          %v717 = vsub.f32 %v204, %v393
          %v718 = vsub.f32 %v205, %v396
          %v719 = vsub.f32 %v206, %v399
          %v720 = vsub.f32 %v207, %v402
          %v721 = vsub.f32 %v208, %v405
          %v722 = vsub.f32 %v209, %v408
          %v723 = vsub.f32 %v210, %v411
          %v724 = vsub.f32 %v211, %v414
          %v725 = vsub.f32 %v212, %v417
          %v726 = vsub.f32 %v213, %v420
          %v727 = vsub.f32 %v214, %v423
          %v728 = vsub.f32 %v215, %v426
          %v729 = vsub.f32 %v216, %v429
          %v730 = vsub.f32 %v217, %v432
          %v731 = vsub.f32 %v218, %v435
          %v732 = vsub.f32 %v219, %v438
          %v733 = vsub.f32 %v220, %v441
          %v734 = vsub.f32 %v221, %v444
          %v735 = vsub.f32 %v222, %v447
          %v736 = vsub.f32 %v223, %v450
          %v737 = vsub.f32 %v224, %v453
          %v738 = vsub.f32 %v225, %v456
          %v739 = vsub.f32 %v226, %v459
          %v740 = vsub.f32 %v227, %v462
          %v741 = vsub.f32 %v228, %v465
          %v742 = vsub.f32 %v229, %v468
          %v743 = vsub.f32 %v230, %v471
          %v744 = vsub.f32 %v231, %v474
          %v745 = vsub.f32 %v232, %v477
          %v746 = vsub.f32 %v233, %v480
          %v747 = vsub.f32 %v234, %v483
          %v748 = vsub.f32 %v235, %v486
          %v749 = vsub.f32 %v236, %v489
          %v750 = vsub.f32 %v237, %v492
          %v751 = vsub.f32 %v238, %v495
          %v752 = vsub.f32 %v239, %v498
          %v753 = vsub.f32 %v240, %v501
          %v754 = vsub.f32 %v241, %v504
          %v755 = vsub.f32 %v242, %v507
          %v756 = vsub.f32 %v243, %v510
          %v757 = vsub.f32 %v244, %v513
          %v758 = vsub.f32 %v245, %v516
          %v759 = vsub.f32 %v246, %v519
          %v760 = vsub.f32 %v247, %v522
          %v761 = vsub.f32 %v248, %v525
          %v762 = vsub.f32 %v249, %v528
          %v763 = vsub.f32 %v250, %v531
          %v764 = vsub.f32 %v251, %v534
          %v765 = vsub.f32 %v252, %v537
          %v766 = vsub.f32 %v253, %v540
          %v767 = vsub.f32 %v254, %v543
          %v768 = vsub.f32 %v255, %v546
          %v769 = vsub.f32 %v256, %v549
          %v770 = vsub.f32 %v257, %v552
          %v771 = vsub.f32 %v258, %v555
          %v772 = vsub.f32 %v259, %v558
          %v773 = vsub.f32 %v260, %v561
          %v774 = vsub.f32 %v261, %v564
          %v775 = vsub.f32 %v262, %v567
          %v776 = vsub.f32 %v263, %v570
          %v777 = vsub.f32 %v264, %v573
          %v778 = vsub.f32 %v265, %v576
          %v779 = vsub.f32 %v266, %v579
          %v780 = vsub.f32 %v267, %v582
          %v781 = vsub.f32 %v268, %v585
          %v782 = vsub.f32 %v269, %v588
          %v783 = vsub.f32 %v270, %v591
          %v784 = vsub.f32 %v271, %v594
          %v785 = vsub.f32 %v272, %v597
          %v786 = vsub.f32 %v273, %v600
          %v787 = vsub.f32 %v274, %v603
          %v788 = vsub.f32 %v275, %v606
          %v789 = vsub.f32 %v276, %v609
          %v790 = vsub.f32 %v277, %v612
          %v791 = vsub.f32 %v278, %v615
          %v792 = vsub.f32 %v279, %v618
          %v793 = vsub.f32 %v280, %v621
          %v794 = vsub.f32 %v281, %v624
          %v795 = vsub.f32 %v282, %v627
          %v796 = vsub.f32 %v283, %v630
          %v797 = vsub.f32 %v284, %v633
          %v798 = vsub.f32 %v285, %v636
          %v799 = vsub.f32 %v286, %v639
          %v800 = vsub.f32 %v287, %v642
          %v801 = vsub.f32 %v288, %v645
          %v802 = vsub.f32 %v289, %v648
          %v803 = vsub.f32 %v290, %v651
          %v804 = vsub.f32 %v291, %v654
          %v805 = vsub.f32 %v292, %v657
          %v806 = vsub.f32 %v293, %v660
          %v807 = vsub.f32 %v294, %v663
          %v808 = vsub.f32 %v295, %v666
          %v809 = vsub.f32 %v296, %v669
          %v810 = vsub.f32 %v297, %v672
          %v811 = vsub.f32 %v298, %v675
          %v812 = vsub.f32 %v299, %v678
          %v813 = vsub.f32 %v300, %v681
          %v814 = vsub.f32 %v301, %v684
          %v815 = vsub.f32 %v302, %v687
          %v816 = vmul.f32 %v688, 1.442695
          %v817 = vpow.pop %v816
          %v818 = vmul.f32 %v689, 1.442695
          %v819 = vpow.pop %v818
          %v820 = vmul.f32 %v690, 1.442695
          %v821 = vpow.pop %v820
          %v822 = vmul.f32 %v691, 1.442695
          %v823 = vpow.pop %v822
          %v824 = vmul.f32 %v692, 1.442695
          %v825 = vpow.pop %v824
          %v826 = vmul.f32 %v693, 1.442695
          %v827 = vpow.pop %v826
          %v828 = vmul.f32 %v694, 1.442695
          %v829 = vpow.pop %v828
          %v830 = vmul.f32 %v695, 1.442695
          %v831 = vpow.pop %v830
          %v832 = vmul.f32 %v696, 1.442695
          %v833 = vpow.pop %v832
          %v834 = vmul.f32 %v697, 1.442695
          %v835 = vpow.pop %v834
          %v836 = vmul.f32 %v698, 1.442695
          %v837 = vpow.pop %v836
          %v838 = vmul.f32 %v699, 1.442695
          %v839 = vpow.pop %v838
          %v840 = vmul.f32 %v700, 1.442695
          %v841 = vpow.pop %v840
          %v842 = vmul.f32 %v701, 1.442695
          %v843 = vpow.pop %v842
          %v844 = vmul.f32 %v702, 1.442695
          %v845 = vpow.pop %v844
          %v846 = vmul.f32 %v703, 1.442695
          %v847 = vpow.pop %v846
          %v848 = vmul.f32 %v704, 1.442695
          %v849 = vpow.pop %v848
          %v850 = vmul.f32 %v705, 1.442695
          %v851 = vpow.pop %v850
          %v852 = vmul.f32 %v706, 1.442695
          %v853 = vpow.pop %v852
          %v854 = vmul.f32 %v707, 1.442695
          %v855 = vpow.pop %v854
          %v856 = vmul.f32 %v708, 1.442695
          %v857 = vpow.pop %v856
          %v858 = vmul.f32 %v709, 1.442695
          %v859 = vpow.pop %v858
          %v860 = vmul.f32 %v710, 1.442695
          %v861 = vpow.pop %v860
          %v862 = vmul.f32 %v711, 1.442695
          %v863 = vpow.pop %v862
          %v864 = vmul.f32 %v712, 1.442695
          %v865 = vpow.pop %v864
          %v866 = vmul.f32 %v713, 1.442695
          %v867 = vpow.pop %v866
          %v868 = vmul.f32 %v714, 1.442695
          %v869 = vpow.pop %v868
          %v870 = vmul.f32 %v715, 1.442695
          %v871 = vpow.pop %v870
          %v872 = vmul.f32 %v716, 1.442695
          %v873 = vpow.pop %v872
          %v874 = vmul.f32 %v717, 1.442695
          %v875 = vpow.pop %v874
          %v876 = vmul.f32 %v718, 1.442695
          %v877 = vpow.pop %v876
          %v878 = vmul.f32 %v719, 1.442695
          %v879 = vpow.pop %v878
          %v880 = vmul.f32 %v720, 1.442695
          %v881 = vpow.pop %v880
          %v882 = vmul.f32 %v721, 1.442695
          %v883 = vpow.pop %v882
          %v884 = vmul.f32 %v722, 1.442695
          %v885 = vpow.pop %v884
          %v886 = vmul.f32 %v723, 1.442695
          %v887 = vpow.pop %v886
          %v888 = vmul.f32 %v724, 1.442695
          %v889 = vpow.pop %v888
          %v890 = vmul.f32 %v725, 1.442695
          %v891 = vpow.pop %v890
          %v892 = vmul.f32 %v726, 1.442695
          %v893 = vpow.pop %v892
          %v894 = vmul.f32 %v727, 1.442695
          %v895 = vpow.pop %v894
          %v896 = vmul.f32 %v728, 1.442695
          %v897 = vpow.pop %v896
          %v898 = vmul.f32 %v729, 1.442695
          %v899 = vpow.pop %v898
          %v900 = vmul.f32 %v730, 1.442695
          %v901 = vpow.pop %v900
          %v902 = vmul.f32 %v731, 1.442695
          %v903 = vpow.pop %v902
          %v904 = vmul.f32 %v732, 1.442695
          %v905 = vpow.pop %v904
          %v906 = vmul.f32 %v733, 1.442695
          %v907 = vpow.pop %v906
          %v908 = vmul.f32 %v734, 1.442695
          %v909 = vpow.pop %v908
          %v910 = vmul.f32 %v735, 1.442695
          %v911 = vpow.pop %v910
          %v912 = vmul.f32 %v736, 1.442695
          %v913 = vpow.pop %v912
          %v914 = vmul.f32 %v737, 1.442695
          %v915 = vpow.pop %v914
          %v916 = vmul.f32 %v738, 1.442695
          %v917 = vpow.pop %v916
          %v918 = vmul.f32 %v739, 1.442695
          %v919 = vpow.pop %v918
          %v920 = vmul.f32 %v740, 1.442695
          %v921 = vpow.pop %v920
          %v922 = vmul.f32 %v741, 1.442695
          %v923 = vpow.pop %v922
          %v924 = vmul.f32 %v742, 1.442695
          %v925 = vpow.pop %v924
          %v926 = vmul.f32 %v743, 1.442695
          %v927 = vpow.pop %v926
          %v928 = vmul.f32 %v744, 1.442695
          %v929 = vpow.pop %v928
          %v930 = vmul.f32 %v745, 1.442695
          %v931 = vpow.pop %v930
          %v932 = vmul.f32 %v746, 1.442695
          %v933 = vpow.pop %v932
          %v934 = vmul.f32 %v747, 1.442695
          %v935 = vpow.pop %v934
          %v936 = vmul.f32 %v748, 1.442695
          %v937 = vpow.pop %v936
          %v938 = vmul.f32 %v749, 1.442695
          %v939 = vpow.pop %v938
          %v940 = vmul.f32 %v750, 1.442695
          %v941 = vpow.pop %v940
          %v942 = vmul.f32 %v751, 1.442695
          %v943 = vpow.pop %v942
          %v944 = vmul.f32 %v752, 1.442695
          %v945 = vpow.pop %v944
          %v946 = vmul.f32 %v753, 1.442695
          %v947 = vpow.pop %v946
          %v948 = vmul.f32 %v754, 1.442695
          %v949 = vpow.pop %v948
          %v950 = vmul.f32 %v755, 1.442695
          %v951 = vpow.pop %v950
          %v952 = vmul.f32 %v756, 1.442695
          %v953 = vpow.pop %v952
          %v954 = vmul.f32 %v757, 1.442695
          %v955 = vpow.pop %v954
          %v956 = vmul.f32 %v758, 1.442695
          %v957 = vpow.pop %v956
          %v958 = vmul.f32 %v759, 1.442695
          %v959 = vpow.pop %v958
          %v960 = vmul.f32 %v760, 1.442695
          %v961 = vpow.pop %v960
          %v962 = vmul.f32 %v761, 1.442695
          %v963 = vpow.pop %v962
          %v964 = vmul.f32 %v762, 1.442695
          %v965 = vpow.pop %v964
          %v966 = vmul.f32 %v763, 1.442695
          %v967 = vpow.pop %v966
          %v968 = vmul.f32 %v764, 1.442695
          %v969 = vpow.pop %v968
          %v970 = vmul.f32 %v765, 1.442695
          %v971 = vpow.pop %v970
          %v972 = vmul.f32 %v766, 1.442695
          %v973 = vpow.pop %v972
          %v974 = vmul.f32 %v767, 1.442695
          %v975 = vpow.pop %v974
          %v976 = vmul.f32 %v768, 1.442695
          %v977 = vpow.pop %v976
          %v978 = vmul.f32 %v769, 1.442695
          %v979 = vpow.pop %v978
          %v980 = vmul.f32 %v770, 1.442695
          %v981 = vpow.pop %v980
          %v982 = vmul.f32 %v771, 1.442695
          %v983 = vpow.pop %v982
          %v984 = vmul.f32 %v772, 1.442695
          %v985 = vpow.pop %v984
          %v986 = vmul.f32 %v773, 1.442695
          %v987 = vpow.pop %v986
          %v988 = vmul.f32 %v774, 1.442695
          %v989 = vpow.pop %v988
          %v990 = vmul.f32 %v775, 1.442695
          %v991 = vpow.pop %v990
          %v992 = vmul.f32 %v776, 1.442695
          %v993 = vpow.pop %v992
          %v994 = vmul.f32 %v777, 1.442695
          %v995 = vpow.pop %v994
          %v996 = vmul.f32 %v778, 1.442695
          %v997 = vpow.pop %v996
          %v998 = vmul.f32 %v779, 1.442695
          %v999 = vpow.pop %v998
          %v1000 = vmul.f32 %v780, 1.442695
          %v1001 = vpow.pop %v1000
          %v1002 = vmul.f32 %v781, 1.442695
          %v1003 = vpow.pop %v1002
          %v1004 = vmul.f32 %v782, 1.442695
          %v1005 = vpow.pop %v1004
          %v1006 = vmul.f32 %v783, 1.442695
          %v1007 = vpow.pop %v1006
          %v1008 = vmul.f32 %v784, 1.442695
          %v1009 = vpow.pop %v1008
          %v1010 = vmul.f32 %v785, 1.442695
          %v1011 = vpow.pop %v1010
          %v1012 = vmul.f32 %v786, 1.442695
          %v1013 = vpow.pop %v1012
          %v1014 = vmul.f32 %v787, 1.442695
          %v1015 = vpow.pop %v1014
          %v1016 = vmul.f32 %v788, 1.442695
          %v1017 = vpow.pop %v1016
          %v1018 = vmul.f32 %v789, 1.442695
          %v1019 = vpow.pop %v1018
          %v1020 = vmul.f32 %v790, 1.442695
          %v1021 = vpow.pop %v1020
          %v1022 = vmul.f32 %v791, 1.442695
          %v1023 = vpow.pop %v1022
          %v1024 = vmul.f32 %v792, 1.442695
          %v1025 = vpow.pop %v1024
          %v1026 = vmul.f32 %v793, 1.442695
          %v1027 = vpow.pop %v1026
          %v1028 = vmul.f32 %v794, 1.442695
          %v1029 = vpow.pop %v1028
          %v1030 = vmul.f32 %v795, 1.442695
          %v1031 = vpow.pop %v1030
          %v1032 = vmul.f32 %v796, 1.442695
          %v1033 = vpow.pop %v1032
          %v1034 = vmul.f32 %v797, 1.442695
          %v1035 = vpow.pop %v1034
          %v1036 = vmul.f32 %v798, 1.442695
          %v1037 = vpow.pop %v1036
          %v1038 = vmul.f32 %v799, 1.442695
          %v1039 = vpow.pop %v1038
          %v1040 = vmul.f32 %v800, 1.442695
          %v1041 = vpow.pop %v1040
          %v1042 = vmul.f32 %v801, 1.442695
          %v1043 = vpow.pop %v1042
          %v1044 = vmul.f32 %v802, 1.442695
          %v1045 = vpow.pop %v1044
          %v1046 = vmul.f32 %v803, 1.442695
          %v1047 = vpow.pop %v1046
          %v1048 = vmul.f32 %v804, 1.442695
          %v1049 = vpow.pop %v1048
          %v1050 = vmul.f32 %v805, 1.442695
          %v1051 = vpow.pop %v1050
          %v1052 = vmul.f32 %v806, 1.442695
          %v1053 = vpow.pop %v1052
          %v1054 = vmul.f32 %v807, 1.442695
          %v1055 = vpow.pop %v1054
          %v1056 = vmul.f32 %v808, 1.442695
          %v1057 = vpow.pop %v1056
          %v1058 = vmul.f32 %v809, 1.442695
          %v1059 = vpow.pop %v1058
          %v1060 = vmul.f32 %v810, 1.442695
          %v1061 = vpow.pop %v1060
          %v1062 = vmul.f32 %v811, 1.442695
          %v1063 = vpow.pop %v1062
          %v1064 = vmul.f32 %v812, 1.442695
          %v1065 = vpow.pop %v1064
          %v1066 = vmul.f32 %v813, 1.442695
          %v1067 = vpow.pop %v1066
          %v1068 = vmul.f32 %v814, 1.442695
          %v1069 = vpow.pop %v1068
          %v1070 = vmul.f32 %v815, 1.442695
          %v1071 = vpow.pop %v1070
          %v1072 = vsel %vm303, %v817, 0.0
          %1073 = vadd.xlane.f32.xlu0 %v1072
          %v1074 = vpop.xlane.xlu0 %1073
          %v1075 = vsel %vm303, %v819, 0.0
          %1076 = vadd.xlane.f32.xlu0 %v1075
          %v1077 = vpop.xlane.xlu0 %1076
          %v1078 = vsel %vm303, %v821, 0.0
          %1079 = vadd.xlane.f32.xlu0 %v1078
          %v1080 = vpop.xlane.xlu0 %1079
          %v1081 = vsel %vm303, %v823, 0.0
          %1082 = vadd.xlane.f32.xlu0 %v1081
          %v1083 = vpop.xlane.xlu0 %1082
          %v1084 = vsel %vm303, %v825, 0.0
          %1085 = vadd.xlane.f32.xlu0 %v1084
          %v1086 = vpop.xlane.xlu0 %1085
          %v1087 = vsel %vm303, %v827, 0.0
          %1088 = vadd.xlane.f32.xlu0 %v1087
          %v1089 = vpop.xlane.xlu0 %1088
          %v1090 = vsel %vm303, %v829, 0.0
          %1091 = vadd.xlane.f32.xlu0 %v1090
          %v1092 = vpop.xlane.xlu0 %1091
          %v1093 = vsel %vm303, %v831, 0.0
          %1094 = vadd.xlane.f32.xlu0 %v1093
          %v1095 = vpop.xlane.xlu0 %1094
          %v1096 = vsel %vm303, %v833, 0.0
          %1097 = vadd.xlane.f32.xlu0 %v1096
          %v1098 = vpop.xlane.xlu0 %1097
          %v1099 = vsel %vm303, %v835, 0.0
          %1100 = vadd.xlane.f32.xlu0 %v1099
          %v1101 = vpop.xlane.xlu0 %1100
          %v1102 = vsel %vm303, %v837, 0.0
          %1103 = vadd.xlane.f32.xlu0 %v1102
          %v1104 = vpop.xlane.xlu0 %1103
          %v1105 = vsel %vm303, %v839, 0.0
          %1106 = vadd.xlane.f32.xlu0 %v1105
          %v1107 = vpop.xlane.xlu0 %1106
          %v1108 = vsel %vm303, %v841, 0.0
          %1109 = vadd.xlane.f32.xlu0 %v1108
          %v1110 = vpop.xlane.xlu0 %1109
          %v1111 = vsel %vm303, %v843, 0.0
          %1112 = vadd.xlane.f32.xlu0 %v1111
          %v1113 = vpop.xlane.xlu0 %1112
          %v1114 = vsel %vm303, %v845, 0.0
          %1115 = vadd.xlane.f32.xlu0 %v1114
          %v1116 = vpop.xlane.xlu0 %1115
          %v1117 = vsel %vm303, %v847, 0.0
          %1118 = vadd.xlane.f32.xlu0 %v1117
          %v1119 = vpop.xlane.xlu0 %1118
          %v1120 = vsel %vm303, %v849, 0.0
          %1121 = vadd.xlane.f32.xlu0 %v1120
          %v1122 = vpop.xlane.xlu0 %1121
          %v1123 = vsel %vm303, %v851, 0.0
          %1124 = vadd.xlane.f32.xlu0 %v1123
          %v1125 = vpop.xlane.xlu0 %1124
          %v1126 = vsel %vm303, %v853, 0.0
          %1127 = vadd.xlane.f32.xlu0 %v1126
          %v1128 = vpop.xlane.xlu0 %1127
          %v1129 = vsel %vm303, %v855, 0.0
          %1130 = vadd.xlane.f32.xlu0 %v1129
          %v1131 = vpop.xlane.xlu0 %1130
          %v1132 = vsel %vm303, %v857, 0.0
          %1133 = vadd.xlane.f32.xlu0 %v1132
          %v1134 = vpop.xlane.xlu0 %1133
          %v1135 = vsel %vm303, %v859, 0.0
          %1136 = vadd.xlane.f32.xlu0 %v1135
          %v1137 = vpop.xlane.xlu0 %1136
          %v1138 = vsel %vm303, %v861, 0.0
          %1139 = vadd.xlane.f32.xlu0 %v1138
          %v1140 = vpop.xlane.xlu0 %1139
          %v1141 = vsel %vm303, %v863, 0.0
          %1142 = vadd.xlane.f32.xlu0 %v1141
          %v1143 = vpop.xlane.xlu0 %1142
          %v1144 = vsel %vm303, %v865, 0.0
          %1145 = vadd.xlane.f32.xlu0 %v1144
          %v1146 = vpop.xlane.xlu0 %1145
          %v1147 = vsel %vm303, %v867, 0.0
          %1148 = vadd.xlane.f32.xlu0 %v1147
          %v1149 = vpop.xlane.xlu0 %1148
          %v1150 = vsel %vm303, %v869, 0.0
          %1151 = vadd.xlane.f32.xlu0 %v1150
          %v1152 = vpop.xlane.xlu0 %1151
          %v1153 = vsel %vm303, %v871, 0.0
          %1154 = vadd.xlane.f32.xlu0 %v1153
          %v1155 = vpop.xlane.xlu0 %1154
          %v1156 = vsel %vm303, %v873, 0.0
          %1157 = vadd.xlane.f32.xlu0 %v1156
          %v1158 = vpop.xlane.xlu0 %1157
          %v1159 = vsel %vm303, %v875, 0.0
          %1160 = vadd.xlane.f32.xlu0 %v1159
          %v1161 = vpop.xlane.xlu0 %1160
          %v1162 = vsel %vm303, %v877, 0.0
          %1163 = vadd.xlane.f32.xlu0 %v1162
          %v1164 = vpop.xlane.xlu0 %1163
          %v1165 = vsel %vm303, %v879, 0.0
          %1166 = vadd.xlane.f32.xlu0 %v1165
          %v1167 = vpop.xlane.xlu0 %1166
          %v1168 = vsel %vm303, %v881, 0.0
          %1169 = vadd.xlane.f32.xlu0 %v1168
          %v1170 = vpop.xlane.xlu0 %1169
          %v1171 = vsel %vm303, %v883, 0.0
          %1172 = vadd.xlane.f32.xlu0 %v1171
          %v1173 = vpop.xlane.xlu0 %1172
          %v1174 = vsel %vm303, %v885, 0.0
          %1175 = vadd.xlane.f32.xlu0 %v1174
          %v1176 = vpop.xlane.xlu0 %1175
          %v1177 = vsel %vm303, %v887, 0.0
          %1178 = vadd.xlane.f32.xlu0 %v1177
          %v1179 = vpop.xlane.xlu0 %1178
          %v1180 = vsel %vm303, %v889, 0.0
          %1181 = vadd.xlane.f32.xlu0 %v1180
          %v1182 = vpop.xlane.xlu0 %1181
          %v1183 = vsel %vm303, %v891, 0.0
          %1184 = vadd.xlane.f32.xlu0 %v1183
          %v1185 = vpop.xlane.xlu0 %1184
          %v1186 = vsel %vm303, %v893, 0.0
          %1187 = vadd.xlane.f32.xlu0 %v1186
          %v1188 = vpop.xlane.xlu0 %1187
          %v1189 = vsel %vm303, %v895, 0.0
          %1190 = vadd.xlane.f32.xlu0 %v1189
          %v1191 = vpop.xlane.xlu0 %1190
          %v1192 = vsel %vm303, %v897, 0.0
          %1193 = vadd.xlane.f32.xlu0 %v1192
          %v1194 = vpop.xlane.xlu0 %1193
          %v1195 = vsel %vm303, %v899, 0.0
          %1196 = vadd.xlane.f32.xlu0 %v1195
          %v1197 = vpop.xlane.xlu0 %1196
          %v1198 = vsel %vm303, %v901, 0.0
          %1199 = vadd.xlane.f32.xlu0 %v1198
          %v1200 = vpop.xlane.xlu0 %1199
          %v1201 = vsel %vm303, %v903, 0.0
          %1202 = vadd.xlane.f32.xlu0 %v1201
          %v1203 = vpop.xlane.xlu0 %1202
          %v1204 = vsel %vm303, %v905, 0.0
          %1205 = vadd.xlane.f32.xlu0 %v1204
          %v1206 = vpop.xlane.xlu0 %1205
          %v1207 = vsel %vm303, %v907, 0.0
          %1208 = vadd.xlane.f32.xlu0 %v1207
          %v1209 = vpop.xlane.xlu0 %1208
          %v1210 = vsel %vm303, %v909, 0.0
          %1211 = vadd.xlane.f32.xlu0 %v1210
          %v1212 = vpop.xlane.xlu0 %1211
          %v1213 = vsel %vm303, %v911, 0.0
          %1214 = vadd.xlane.f32.xlu0 %v1213
          %v1215 = vpop.xlane.xlu0 %1214
          %v1216 = vsel %vm303, %v913, 0.0
          %1217 = vadd.xlane.f32.xlu0 %v1216
          %v1218 = vpop.xlane.xlu0 %1217
          %v1219 = vsel %vm303, %v915, 0.0
          %1220 = vadd.xlane.f32.xlu0 %v1219
          %v1221 = vpop.xlane.xlu0 %1220
          %v1222 = vsel %vm303, %v917, 0.0
          %1223 = vadd.xlane.f32.xlu0 %v1222
          %v1224 = vpop.xlane.xlu0 %1223
          %v1225 = vsel %vm303, %v919, 0.0
          %1226 = vadd.xlane.f32.xlu0 %v1225
          %v1227 = vpop.xlane.xlu0 %1226
          %v1228 = vsel %vm303, %v921, 0.0
          %1229 = vadd.xlane.f32.xlu0 %v1228
          %v1230 = vpop.xlane.xlu0 %1229
          %v1231 = vsel %vm303, %v923, 0.0
          %1232 = vadd.xlane.f32.xlu0 %v1231
          %v1233 = vpop.xlane.xlu0 %1232
          %v1234 = vsel %vm303, %v925, 0.0
          %1235 = vadd.xlane.f32.xlu0 %v1234
          %v1236 = vpop.xlane.xlu0 %1235
          %v1237 = vsel %vm303, %v927, 0.0
          %1238 = vadd.xlane.f32.xlu0 %v1237
          %v1239 = vpop.xlane.xlu0 %1238
          %v1240 = vsel %vm303, %v929, 0.0
          %1241 = vadd.xlane.f32.xlu0 %v1240
          %v1242 = vpop.xlane.xlu0 %1241
          %v1243 = vsel %vm303, %v931, 0.0
          %1244 = vadd.xlane.f32.xlu0 %v1243
          %v1245 = vpop.xlane.xlu0 %1244
          %v1246 = vsel %vm303, %v933, 0.0
          %1247 = vadd.xlane.f32.xlu0 %v1246
          %v1248 = vpop.xlane.xlu0 %1247
          %v1249 = vsel %vm303, %v935, 0.0
          %1250 = vadd.xlane.f32.xlu0 %v1249
          %v1251 = vpop.xlane.xlu0 %1250
          %v1252 = vsel %vm303, %v937, 0.0
          %1253 = vadd.xlane.f32.xlu0 %v1252
          %v1254 = vpop.xlane.xlu0 %1253
          %v1255 = vsel %vm303, %v939, 0.0
          %1256 = vadd.xlane.f32.xlu0 %v1255
          %v1257 = vpop.xlane.xlu0 %1256
          %v1258 = vsel %vm303, %v941, 0.0
          %1259 = vadd.xlane.f32.xlu0 %v1258
          %v1260 = vpop.xlane.xlu0 %1259
          %v1261 = vsel %vm303, %v943, 0.0
          %1262 = vadd.xlane.f32.xlu0 %v1261
          %v1263 = vpop.xlane.xlu0 %1262
          %v1264 = vsel %vm303, %v945, 0.0
          %1265 = vadd.xlane.f32.xlu0 %v1264
          %v1266 = vpop.xlane.xlu0 %1265
          %v1267 = vsel %vm303, %v947, 0.0
          %1268 = vadd.xlane.f32.xlu0 %v1267
          %v1269 = vpop.xlane.xlu0 %1268
          %v1270 = vsel %vm303, %v949, 0.0
          %1271 = vadd.xlane.f32.xlu0 %v1270
          %v1272 = vpop.xlane.xlu0 %1271
          %v1273 = vsel %vm303, %v951, 0.0
          %1274 = vadd.xlane.f32.xlu0 %v1273
          %v1275 = vpop.xlane.xlu0 %1274
          %v1276 = vsel %vm303, %v953, 0.0
          %1277 = vadd.xlane.f32.xlu0 %v1276
          %v1278 = vpop.xlane.xlu0 %1277
          %v1279 = vsel %vm303, %v955, 0.0
          %1280 = vadd.xlane.f32.xlu0 %v1279
          %v1281 = vpop.xlane.xlu0 %1280
          %v1282 = vsel %vm303, %v957, 0.0
          %1283 = vadd.xlane.f32.xlu0 %v1282
          %v1284 = vpop.xlane.xlu0 %1283
          %v1285 = vsel %vm303, %v959, 0.0
          %1286 = vadd.xlane.f32.xlu0 %v1285
          %v1287 = vpop.xlane.xlu0 %1286
          %v1288 = vsel %vm303, %v961, 0.0
          %1289 = vadd.xlane.f32.xlu0 %v1288
          %v1290 = vpop.xlane.xlu0 %1289
          %v1291 = vsel %vm303, %v963, 0.0
          %1292 = vadd.xlane.f32.xlu0 %v1291
          %v1293 = vpop.xlane.xlu0 %1292
          %v1294 = vsel %vm303, %v965, 0.0
          %1295 = vadd.xlane.f32.xlu0 %v1294
          %v1296 = vpop.xlane.xlu0 %1295
          %v1297 = vsel %vm303, %v967, 0.0
          %1298 = vadd.xlane.f32.xlu0 %v1297
          %v1299 = vpop.xlane.xlu0 %1298
          %v1300 = vsel %vm303, %v969, 0.0
          %1301 = vadd.xlane.f32.xlu0 %v1300
          %v1302 = vpop.xlane.xlu0 %1301
          %v1303 = vsel %vm303, %v971, 0.0
          %1304 = vadd.xlane.f32.xlu0 %v1303
          %v1305 = vpop.xlane.xlu0 %1304
          %v1306 = vsel %vm303, %v973, 0.0
          %1307 = vadd.xlane.f32.xlu0 %v1306
          %v1308 = vpop.xlane.xlu0 %1307
          %v1309 = vsel %vm303, %v975, 0.0
          %1310 = vadd.xlane.f32.xlu0 %v1309
          %v1311 = vpop.xlane.xlu0 %1310
          %v1312 = vsel %vm303, %v977, 0.0
          %1313 = vadd.xlane.f32.xlu0 %v1312
          %v1314 = vpop.xlane.xlu0 %1313
          %v1315 = vsel %vm303, %v979, 0.0
          %1316 = vadd.xlane.f32.xlu0 %v1315
          %v1317 = vpop.xlane.xlu0 %1316
          %v1318 = vsel %vm303, %v981, 0.0
          %1319 = vadd.xlane.f32.xlu0 %v1318
          %v1320 = vpop.xlane.xlu0 %1319
          %v1321 = vsel %vm303, %v983, 0.0
          %1322 = vadd.xlane.f32.xlu0 %v1321
          %v1323 = vpop.xlane.xlu0 %1322
          %v1324 = vsel %vm303, %v985, 0.0
          %1325 = vadd.xlane.f32.xlu0 %v1324
          %v1326 = vpop.xlane.xlu0 %1325
          %v1327 = vsel %vm303, %v987, 0.0
          %1328 = vadd.xlane.f32.xlu0 %v1327
          %v1329 = vpop.xlane.xlu0 %1328
          %v1330 = vsel %vm303, %v989, 0.0
          %1331 = vadd.xlane.f32.xlu0 %v1330
          %v1332 = vpop.xlane.xlu0 %1331
          %v1333 = vsel %vm303, %v991, 0.0
          %1334 = vadd.xlane.f32.xlu0 %v1333
          %v1335 = vpop.xlane.xlu0 %1334
          %v1336 = vsel %vm303, %v993, 0.0
          %1337 = vadd.xlane.f32.xlu0 %v1336
          %v1338 = vpop.xlane.xlu0 %1337
          %v1339 = vsel %vm303, %v995, 0.0
          %1340 = vadd.xlane.f32.xlu0 %v1339
          %v1341 = vpop.xlane.xlu0 %1340
          %v1342 = vsel %vm303, %v997, 0.0
          %1343 = vadd.xlane.f32.xlu0 %v1342
          %v1344 = vpop.xlane.xlu0 %1343
          %v1345 = vsel %vm303, %v999, 0.0
          %1346 = vadd.xlane.f32.xlu0 %v1345
          %v1347 = vpop.xlane.xlu0 %1346
          %v1348 = vsel %vm303, %v1001, 0.0
          %1349 = vadd.xlane.f32.xlu0 %v1348
          %v1350 = vpop.xlane.xlu0 %1349
          %v1351 = vsel %vm303, %v1003, 0.0
          %1352 = vadd.xlane.f32.xlu0 %v1351
          %v1353 = vpop.xlane.xlu0 %1352
          %v1354 = vsel %vm303, %v1005, 0.0
          %1355 = vadd.xlane.f32.xlu0 %v1354
          %v1356 = vpop.xlane.xlu0 %1355
          %v1357 = vsel %vm303, %v1007, 0.0
          %1358 = vadd.xlane.f32.xlu0 %v1357
          %v1359 = vpop.xlane.xlu0 %1358
          %v1360 = vsel %vm303, %v1009, 0.0
          %1361 = vadd.xlane.f32.xlu0 %v1360
          %v1362 = vpop.xlane.xlu0 %1361
          %v1363 = vsel %vm303, %v1011, 0.0
          %1364 = vadd.xlane.f32.xlu0 %v1363
          %v1365 = vpop.xlane.xlu0 %1364
          %v1366 = vsel %vm303, %v1013, 0.0
          %1367 = vadd.xlane.f32.xlu0 %v1366
          %v1368 = vpop.xlane.xlu0 %1367
          %v1369 = vsel %vm303, %v1015, 0.0
          %1370 = vadd.xlane.f32.xlu0 %v1369
          %v1371 = vpop.xlane.xlu0 %1370
          %v1372 = vsel %vm303, %v1017, 0.0
          %1373 = vadd.xlane.f32.xlu0 %v1372
          %v1374 = vpop.xlane.xlu0 %1373
          %v1375 = vsel %vm303, %v1019, 0.0
          %1376 = vadd.xlane.f32.xlu0 %v1375
          %v1377 = vpop.xlane.xlu0 %1376
          %v1378 = vsel %vm303, %v1021, 0.0
          %1379 = vadd.xlane.f32.xlu0 %v1378
          %v1380 = vpop.xlane.xlu0 %1379
          %v1381 = vsel %vm303, %v1023, 0.0
          %1382 = vadd.xlane.f32.xlu0 %v1381
          %v1383 = vpop.xlane.xlu0 %1382
          %v1384 = vsel %vm303, %v1025, 0.0
          %1385 = vadd.xlane.f32.xlu0 %v1384
          %v1386 = vpop.xlane.xlu0 %1385
          %v1387 = vsel %vm303, %v1027, 0.0
          %1388 = vadd.xlane.f32.xlu0 %v1387
          %v1389 = vpop.xlane.xlu0 %1388
          %v1390 = vsel %vm303, %v1029, 0.0
          %1391 = vadd.xlane.f32.xlu0 %v1390
          %v1392 = vpop.xlane.xlu0 %1391
          %v1393 = vsel %vm303, %v1031, 0.0
          %1394 = vadd.xlane.f32.xlu0 %v1393
          %v1395 = vpop.xlane.xlu0 %1394
          %v1396 = vsel %vm303, %v1033, 0.0
          %1397 = vadd.xlane.f32.xlu0 %v1396
          %v1398 = vpop.xlane.xlu0 %1397
          %v1399 = vsel %vm303, %v1035, 0.0
          %1400 = vadd.xlane.f32.xlu0 %v1399
          %v1401 = vpop.xlane.xlu0 %1400
          %v1402 = vsel %vm303, %v1037, 0.0
          %1403 = vadd.xlane.f32.xlu0 %v1402
          %v1404 = vpop.xlane.xlu0 %1403
          %v1405 = vsel %vm303, %v1039, 0.0
          %1406 = vadd.xlane.f32.xlu0 %v1405
          %v1407 = vpop.xlane.xlu0 %1406
          %v1408 = vsel %vm303, %v1041, 0.0
          %1409 = vadd.xlane.f32.xlu0 %v1408
          %v1410 = vpop.xlane.xlu0 %1409
          %v1411 = vsel %vm303, %v1043, 0.0
          %1412 = vadd.xlane.f32.xlu0 %v1411
          %v1413 = vpop.xlane.xlu0 %1412
          %v1414 = vsel %vm303, %v1045, 0.0
          %1415 = vadd.xlane.f32.xlu0 %v1414
          %v1416 = vpop.xlane.xlu0 %1415
          %v1417 = vsel %vm303, %v1047, 0.0
          %1418 = vadd.xlane.f32.xlu0 %v1417
          %v1419 = vpop.xlane.xlu0 %1418
          %v1420 = vsel %vm303, %v1049, 0.0
          %1421 = vadd.xlane.f32.xlu0 %v1420
          %v1422 = vpop.xlane.xlu0 %1421
          %v1423 = vsel %vm303, %v1051, 0.0
          %1424 = vadd.xlane.f32.xlu0 %v1423
          %v1425 = vpop.xlane.xlu0 %1424
          %v1426 = vsel %vm303, %v1053, 0.0
          %1427 = vadd.xlane.f32.xlu0 %v1426
          %v1428 = vpop.xlane.xlu0 %1427
          %v1429 = vsel %vm303, %v1055, 0.0
          %1430 = vadd.xlane.f32.xlu0 %v1429
          %v1431 = vpop.xlane.xlu0 %1430
          %v1432 = vsel %vm303, %v1057, 0.0
          %1433 = vadd.xlane.f32.xlu0 %v1432
          %v1434 = vpop.xlane.xlu0 %1433
          %v1435 = vsel %vm303, %v1059, 0.0
          %1436 = vadd.xlane.f32.xlu0 %v1435
          %v1437 = vpop.xlane.xlu0 %1436
          %v1438 = vsel %vm303, %v1061, 0.0
          %1439 = vadd.xlane.f32.xlu0 %v1438
          %v1440 = vpop.xlane.xlu0 %1439
          %v1441 = vsel %vm303, %v1063, 0.0
          %1442 = vadd.xlane.f32.xlu0 %v1441
          %v1443 = vpop.xlane.xlu0 %1442
          %v1444 = vsel %vm303, %v1065, 0.0
          %1445 = vadd.xlane.f32.xlu0 %v1444
          %v1446 = vpop.xlane.xlu0 %1445
          %v1447 = vsel %vm303, %v1067, 0.0
          %1448 = vadd.xlane.f32.xlu0 %v1447
          %v1449 = vpop.xlane.xlu0 %1448
          %v1450 = vsel %vm303, %v1069, 0.0
          %1451 = vadd.xlane.f32.xlu0 %v1450
          %v1452 = vpop.xlane.xlu0 %1451
          %v1453 = vsel %vm303, %v1071, 0.0
          %1454 = vadd.xlane.f32.xlu0 %v1453
          %v1455 = vpop.xlane.xlu0 %1454
          %v1456 = vrcp.pop %v1074
          %v1457 = vmul.f32 %v817, %v1456
          %v1458 = vrcp.pop %v1077
          %v1459 = vmul.f32 %v819, %v1458
          %v1460 = vrcp.pop %v1080
          %v1461 = vmul.f32 %v821, %v1460
          %v1462 = vrcp.pop %v1083
          %v1463 = vmul.f32 %v823, %v1462
          %v1464 = vrcp.pop %v1086
          %v1465 = vmul.f32 %v825, %v1464
          %v1466 = vrcp.pop %v1089
          %v1467 = vmul.f32 %v827, %v1466
          %v1468 = vrcp.pop %v1092
          %v1469 = vmul.f32 %v829, %v1468
          %v1470 = vrcp.pop %v1095
          %v1471 = vmul.f32 %v831, %v1470
          %v1472 = vrcp.pop %v1098
          %v1473 = vmul.f32 %v833, %v1472
          %v1474 = vrcp.pop %v1101
          %v1475 = vmul.f32 %v835, %v1474
          %v1476 = vrcp.pop %v1104
          %v1477 = vmul.f32 %v837, %v1476
          %v1478 = vrcp.pop %v1107
          %v1479 = vmul.f32 %v839, %v1478
          %v1480 = vrcp.pop %v1110
          %v1481 = vmul.f32 %v841, %v1480
          %v1482 = vrcp.pop %v1113
          %v1483 = vmul.f32 %v843, %v1482
          %v1484 = vrcp.pop %v1116
          %v1485 = vmul.f32 %v845, %v1484
          %v1486 = vrcp.pop %v1119
          %v1487 = vmul.f32 %v847, %v1486
          %v1488 = vrcp.pop %v1122
          %v1489 = vmul.f32 %v849, %v1488
          %v1490 = vrcp.pop %v1125
          %v1491 = vmul.f32 %v851, %v1490
          %v1492 = vrcp.pop %v1128
          %v1493 = vmul.f32 %v853, %v1492
          %v1494 = vrcp.pop %v1131
          %v1495 = vmul.f32 %v855, %v1494
          %v1496 = vrcp.pop %v1134
          %v1497 = vmul.f32 %v857, %v1496
          %v1498 = vrcp.pop %v1137
          %v1499 = vmul.f32 %v859, %v1498
          %v1500 = vrcp.pop %v1140
          %v1501 = vmul.f32 %v861, %v1500
          %v1502 = vrcp.pop %v1143
          %v1503 = vmul.f32 %v863, %v1502
          %v1504 = vrcp.pop %v1146
          %v1505 = vmul.f32 %v865, %v1504
          %v1506 = vrcp.pop %v1149
          %v1507 = vmul.f32 %v867, %v1506
          %v1508 = vrcp.pop %v1152
          %v1509 = vmul.f32 %v869, %v1508
          %v1510 = vrcp.pop %v1155
          %v1511 = vmul.f32 %v871, %v1510
          %v1512 = vrcp.pop %v1158
          %v1513 = vmul.f32 %v873, %v1512
          %v1514 = vrcp.pop %v1161
          %v1515 = vmul.f32 %v875, %v1514
          %v1516 = vrcp.pop %v1164
          %v1517 = vmul.f32 %v877, %v1516
          %v1518 = vrcp.pop %v1167
          %v1519 = vmul.f32 %v879, %v1518
          %v1520 = vrcp.pop %v1170
          %v1521 = vmul.f32 %v881, %v1520
          %v1522 = vrcp.pop %v1173
          %v1523 = vmul.f32 %v883, %v1522
          %v1524 = vrcp.pop %v1176
          %v1525 = vmul.f32 %v885, %v1524
          %v1526 = vrcp.pop %v1179
          %v1527 = vmul.f32 %v887, %v1526
          %v1528 = vrcp.pop %v1182
          %v1529 = vmul.f32 %v889, %v1528
          %v1530 = vrcp.pop %v1185
          %v1531 = vmul.f32 %v891, %v1530
          %v1532 = vrcp.pop %v1188
          %v1533 = vmul.f32 %v893, %v1532
          %v1534 = vrcp.pop %v1191
          %v1535 = vmul.f32 %v895, %v1534
          %v1536 = vrcp.pop %v1194
          %v1537 = vmul.f32 %v897, %v1536
          %v1538 = vrcp.pop %v1197
          %v1539 = vmul.f32 %v899, %v1538
          %v1540 = vrcp.pop %v1200
          %v1541 = vmul.f32 %v901, %v1540
          %v1542 = vrcp.pop %v1203
          %v1543 = vmul.f32 %v903, %v1542
          %v1544 = vrcp.pop %v1206
          %v1545 = vmul.f32 %v905, %v1544
          %v1546 = vrcp.pop %v1209
          %v1547 = vmul.f32 %v907, %v1546
          %v1548 = vrcp.pop %v1212
          %v1549 = vmul.f32 %v909, %v1548
          %v1550 = vrcp.pop %v1215
          %v1551 = vmul.f32 %v911, %v1550
          %v1552 = vrcp.pop %v1218
          %v1553 = vmul.f32 %v913, %v1552
          %v1554 = vrcp.pop %v1221
          %v1555 = vmul.f32 %v915, %v1554
          %v1556 = vrcp.pop %v1224
          %v1557 = vmul.f32 %v917, %v1556
          %v1558 = vrcp.pop %v1227
          %v1559 = vmul.f32 %v919, %v1558
          %v1560 = vrcp.pop %v1230
          %v1561 = vmul.f32 %v921, %v1560
          %v1562 = vrcp.pop %v1233
          %v1563 = vmul.f32 %v923, %v1562
          %v1564 = vrcp.pop %v1236
          %v1565 = vmul.f32 %v925, %v1564
          %v1566 = vrcp.pop %v1239
          %v1567 = vmul.f32 %v927, %v1566
          %v1568 = vrcp.pop %v1242
          %v1569 = vmul.f32 %v929, %v1568
          %v1570 = vrcp.pop %v1245
          %v1571 = vmul.f32 %v931, %v1570
          %v1572 = vrcp.pop %v1248
          %v1573 = vmul.f32 %v933, %v1572
          %v1574 = vrcp.pop %v1251
          %v1575 = vmul.f32 %v935, %v1574
          %v1576 = vrcp.pop %v1254
          %v1577 = vmul.f32 %v937, %v1576
          %v1578 = vrcp.pop %v1257
          %v1579 = vmul.f32 %v939, %v1578
          %v1580 = vrcp.pop %v1260
          %v1581 = vmul.f32 %v941, %v1580
          %v1582 = vrcp.pop %v1263
          %v1583 = vmul.f32 %v943, %v1582
          %v1584 = vrcp.pop %v1266
          %v1585 = vmul.f32 %v945, %v1584
          %v1586 = vrcp.pop %v1269
          %v1587 = vmul.f32 %v947, %v1586
          %v1588 = vrcp.pop %v1272
          %v1589 = vmul.f32 %v949, %v1588
          %v1590 = vrcp.pop %v1275
          %v1591 = vmul.f32 %v951, %v1590
          %v1592 = vrcp.pop %v1278
          %v1593 = vmul.f32 %v953, %v1592
          %v1594 = vrcp.pop %v1281
          %v1595 = vmul.f32 %v955, %v1594
          %v1596 = vrcp.pop %v1284
          %v1597 = vmul.f32 %v957, %v1596
          %v1598 = vrcp.pop %v1287
          %v1599 = vmul.f32 %v959, %v1598
          %v1600 = vrcp.pop %v1290
          %v1601 = vmul.f32 %v961, %v1600
          %v1602 = vrcp.pop %v1293
          %v1603 = vmul.f32 %v963, %v1602
          %v1604 = vrcp.pop %v1296
          %v1605 = vmul.f32 %v965, %v1604
          %v1606 = vrcp.pop %v1299
          %v1607 = vmul.f32 %v967, %v1606
          %v1608 = vrcp.pop %v1302
          %v1609 = vmul.f32 %v969, %v1608
          %v1610 = vrcp.pop %v1305
          %v1611 = vmul.f32 %v971, %v1610
          %v1612 = vrcp.pop %v1308
          %v1613 = vmul.f32 %v973, %v1612
          %v1614 = vrcp.pop %v1311
          %v1615 = vmul.f32 %v975, %v1614
          %v1616 = vrcp.pop %v1314
          %v1617 = vmul.f32 %v977, %v1616
          %v1618 = vrcp.pop %v1317
          %v1619 = vmul.f32 %v979, %v1618
          %v1620 = vrcp.pop %v1320
          %v1621 = vmul.f32 %v981, %v1620
          %v1622 = vrcp.pop %v1323
          %v1623 = vmul.f32 %v983, %v1622
          %v1624 = vrcp.pop %v1326
          %v1625 = vmul.f32 %v985, %v1624
          %v1626 = vrcp.pop %v1329
          %v1627 = vmul.f32 %v987, %v1626
          %v1628 = vrcp.pop %v1332
          %v1629 = vmul.f32 %v989, %v1628
          %v1630 = vrcp.pop %v1335
          %v1631 = vmul.f32 %v991, %v1630
          %v1632 = vrcp.pop %v1338
          %v1633 = vmul.f32 %v993, %v1632
          %v1634 = vrcp.pop %v1341
          %v1635 = vmul.f32 %v995, %v1634
          %v1636 = vrcp.pop %v1344
          %v1637 = vmul.f32 %v997, %v1636
          %v1638 = vrcp.pop %v1347
          %v1639 = vmul.f32 %v999, %v1638
          %v1640 = vrcp.pop %v1350
          %v1641 = vmul.f32 %v1001, %v1640
          %v1642 = vrcp.pop %v1353
          %v1643 = vmul.f32 %v1003, %v1642
          %v1644 = vrcp.pop %v1356
          %v1645 = vmul.f32 %v1005, %v1644
          %v1646 = vrcp.pop %v1359
          %v1647 = vmul.f32 %v1007, %v1646
          %v1648 = vrcp.pop %v1362
          %v1649 = vmul.f32 %v1009, %v1648
          %v1650 = vrcp.pop %v1365
          %v1651 = vmul.f32 %v1011, %v1650
          %v1652 = vrcp.pop %v1368
          %v1653 = vmul.f32 %v1013, %v1652
          %v1654 = vrcp.pop %v1371
          %v1655 = vmul.f32 %v1015, %v1654
          %v1656 = vrcp.pop %v1374
          %v1657 = vmul.f32 %v1017, %v1656
          %v1658 = vrcp.pop %v1377
          %v1659 = vmul.f32 %v1019, %v1658
          %v1660 = vrcp.pop %v1380
          %v1661 = vmul.f32 %v1021, %v1660
          %v1662 = vrcp.pop %v1383
          %v1663 = vmul.f32 %v1023, %v1662
          %v1664 = vrcp.pop %v1386
          %v1665 = vmul.f32 %v1025, %v1664
          %v1666 = vrcp.pop %v1389
          %v1667 = vmul.f32 %v1027, %v1666
          %v1668 = vrcp.pop %v1392
          %v1669 = vmul.f32 %v1029, %v1668
          %v1670 = vrcp.pop %v1395
          %v1671 = vmul.f32 %v1031, %v1670
          %v1672 = vrcp.pop %v1398
          %v1673 = vmul.f32 %v1033, %v1672
          %v1674 = vrcp.pop %v1401
          %v1675 = vmul.f32 %v1035, %v1674
          %v1676 = vrcp.pop %v1404
          %v1677 = vmul.f32 %v1037, %v1676
          %v1678 = vrcp.pop %v1407
          %v1679 = vmul.f32 %v1039, %v1678
          %v1680 = vrcp.pop %v1410
          %v1681 = vmul.f32 %v1041, %v1680
          %v1682 = vrcp.pop %v1413
          %v1683 = vmul.f32 %v1043, %v1682
          %v1684 = vrcp.pop %v1416
          %v1685 = vmul.f32 %v1045, %v1684
          %v1686 = vrcp.pop %v1419
          %v1687 = vmul.f32 %v1047, %v1686
          %v1688 = vrcp.pop %v1422
          %v1689 = vmul.f32 %v1049, %v1688
          %v1690 = vrcp.pop %v1425
          %v1691 = vmul.f32 %v1051, %v1690
          %v1692 = vrcp.pop %v1428
          %v1693 = vmul.f32 %v1053, %v1692
          %v1694 = vrcp.pop %v1431
          %v1695 = vmul.f32 %v1055, %v1694
          %v1696 = vrcp.pop %v1434
          %v1697 = vmul.f32 %v1057, %v1696
          %v1698 = vrcp.pop %v1437
          %v1699 = vmul.f32 %v1059, %v1698
          %v1700 = vrcp.pop %v1440
          %v1701 = vmul.f32 %v1061, %v1700
          %v1702 = vrcp.pop %v1443
          %v1703 = vmul.f32 %v1063, %v1702
          %v1704 = vrcp.pop %v1446
          %v1705 = vmul.f32 %v1065, %v1704
          %v1706 = vrcp.pop %v1449
          %v1707 = vmul.f32 %v1067, %v1706
          %v1708 = vrcp.pop %v1452
          %v1709 = vmul.f32 %v1069, %v1708
          %v1710 = vrcp.pop %v1455
          %v1711 = vmul.f32 %v1071, %v1710
          %v1712 = vlaneseq
          %v1713 = vshrl.u32 %v1712, 7
          %v1714 = vadd.s32 %v1713, 8
          %v1715 = vadd.s32 %v1713, 16
          %v1716 = vadd.s32 %v1713, 24
          %v1717 = vadd.s32 %v1713, 32
          %v1718 = vadd.s32 %v1713, 40
          %v1719 = vadd.s32 %v1713, 48
          %v1720 = vadd.s32 %v1713, 56
          %v1721 = vadd.s32 %v1713, 64
          %v1722 = vadd.s32 %v1713, 72
          %v1723 = vadd.s32 %v1713, 80
          %v1724 = vadd.s32 %v1713, 88
          %v1725 = vadd.s32 %v1713, 96
          %v1726 = vadd.s32 %v1713, 104
          %v1727 = vadd.s32 %v1713, 112
          %v1728 = vadd.s32 %v1713, 120
          %v1729 = vadd.s32 %v1713, 128
          %v1730 = vadd.s32 %v1713, 136
          %v1731 = vadd.s32 %v1713, 144
          %v1732 = vadd.s32 %v1713, 152
          %v1733 = vadd.s32 %v1713, 160
          %v1734 = vadd.s32 %v1713, 168
          %v1735 = vadd.s32 %v1713, 176
          %v1736 = vadd.s32 %v1713, 184
          %v1737 = vadd.s32 %v1713, 192
          %v1738 = vadd.s32 %v1713, 200
          %v1739 = vadd.s32 %v1713, 208
          %v1740 = vadd.s32 %v1713, 216
          %v1741 = vadd.s32 %v1713, 224
          %v1742 = vadd.s32 %v1713, 232
          %v1743 = vadd.s32 %v1713, 240
          %v1744 = vadd.s32 %v1713, 248
          %v1745 = vadd.s32 %v1713, 256
          %v1746 = vadd.s32 %v1713, 264
          %v1747 = vadd.s32 %v1713, 272
          %v1748 = vadd.s32 %v1713, 280
          %v1749 = vadd.s32 %v1713, 288
          %v1750 = vadd.s32 %v1713, 296
          %v1751 = vadd.s32 %v1713, 304
          %v1752 = vadd.s32 %v1713, 312
          %v1753 = vadd.s32 %v1713, 320
          %v1754 = vadd.s32 %v1713, 328
          %v1755 = vadd.s32 %v1713, 336
          %v1756 = vadd.s32 %v1713, 344
          %v1757 = vadd.s32 %v1713, 352
          %v1758 = vadd.s32 %v1713, 360
          %v1759 = vadd.s32 %v1713, 368
          %v1760 = vadd.s32 %v1713, 376
          %v1761 = vadd.s32 %v1713, 384
          %v1762 = vadd.s32 %v1713, 392
          %v1763 = vadd.s32 %v1713, 400
          %v1764 = vadd.s32 %v1713, 408
          %v1765 = vadd.s32 %v1713, 416
          %v1766 = vadd.s32 %v1713, 424
          %v1767 = vadd.s32 %v1713, 432
          %v1768 = vadd.s32 %v1713, 440
          %v1769 = vadd.s32 %v1713, 448
          %v1770 = vadd.s32 %v1713, 456
          %v1771 = vadd.s32 %v1713, 464
          %v1772 = vadd.s32 %v1713, 472
          %v1773 = vadd.s32 %v1713, 480
          %v1774 = vadd.s32 %v1713, 488
          %v1775 = vadd.s32 %v1713, 496
          %v1776 = vadd.s32 %v1713, 504
          %v1777 = vadd.s32 %v1713, 512
          %v1778 = vadd.s32 %v1713, 520
          %v1779 = vadd.s32 %v1713, 528
          %v1780 = vadd.s32 %v1713, 536
          %v1781 = vadd.s32 %v1713, 544
          %v1782 = vadd.s32 %v1713, 552
          %v1783 = vadd.s32 %v1713, 560
          %v1784 = vadd.s32 %v1713, 568
          %v1785 = vadd.s32 %v1713, 576
          %v1786 = vadd.s32 %v1713, 584
          %v1787 = vadd.s32 %v1713, 592
          %v1788 = vadd.s32 %v1713, 600
          %v1789 = vadd.s32 %v1713, 608
          %v1790 = vadd.s32 %v1713, 616
          %v1791 = vadd.s32 %v1713, 624
          %v1792 = vadd.s32 %v1713, 632
          %v1793 = vadd.s32 %v1713, 640
          %v1794 = vadd.s32 %v1713, 648
          %v1795 = vadd.s32 %v1713, 656
          %v1796 = vadd.s32 %v1713, 664
          %v1797 = vadd.s32 %v1713, 672
          %v1798 = vadd.s32 %v1713, 680
          %v1799 = vadd.s32 %v1713, 688
          %v1800 = vadd.s32 %v1713, 696
          %v1801 = vadd.s32 %v1713, 704
          %v1802 = vadd.s32 %v1713, 712
          %v1803 = vadd.s32 %v1713, 720
          %v1804 = vadd.s32 %v1713, 728
          %v1805 = vadd.s32 %v1713, 736
          %v1806 = vadd.s32 %v1713, 744
          %v1807 = vadd.s32 %v1713, 752
          %v1808 = vadd.s32 %v1713, 760
          %v1809 = vadd.s32 %v1713, 768
          %v1810 = vadd.s32 %v1713, 776
          %v1811 = vadd.s32 %v1713, 784
          %v1812 = vadd.s32 %v1713, 792
          %v1813 = vadd.s32 %v1713, 800
          %v1814 = vadd.s32 %v1713, 808
          %v1815 = vadd.s32 %v1713, 816
          %v1816 = vadd.s32 %v1713, 824
          %v1817 = vadd.s32 %v1713, 832
          %v1818 = vadd.s32 %v1713, 840
          %v1819 = vadd.s32 %v1713, 848
          %v1820 = vadd.s32 %v1713, 856
          %v1821 = vadd.s32 %v1713, 864
          %v1822 = vadd.s32 %v1713, 872
          %v1823 = vadd.s32 %v1713, 880
          %v1824 = vadd.s32 %v1713, 888
          %v1825 = vadd.s32 %v1713, 896
          %v1826 = vadd.s32 %v1713, 904
          %v1827 = vadd.s32 %v1713, 912
          %v1828 = vadd.s32 %v1713, 920
          %v1829 = vadd.s32 %v1713, 928
          %v1830 = vadd.s32 %v1713, 936
          %v1831 = vadd.s32 %v1713, 944
          %v1832 = vadd.s32 %v1713, 952
          %v1833 = vadd.s32 %v1713, 960
          %v1834 = vadd.s32 %v1713, 968
          %v1835 = vadd.s32 %v1713, 976
          %v1836 = vadd.s32 %v1713, 984
          %v1837 = vadd.s32 %v1713, 992
          %v1838 = vadd.s32 %v1713, 1000
          %v1839 = vadd.s32 %v1713, 1008
          %v1840 = vadd.s32 %v1713, 1016
          %vm1841 = vcmp.lt.s32.totalorder %v1713, 1000
          %vm1842 = vcmp.lt.s32.totalorder %v1714, 1000
          %vm1843 = vcmp.lt.s32.totalorder %v1715, 1000
          %vm1844 = vcmp.lt.s32.totalorder %v1716, 1000
          %vm1845 = vcmp.lt.s32.totalorder %v1717, 1000
          %vm1846 = vcmp.lt.s32.totalorder %v1718, 1000
          %vm1847 = vcmp.lt.s32.totalorder %v1719, 1000
          %vm1848 = vcmp.lt.s32.totalorder %v1720, 1000
          %vm1849 = vcmp.lt.s32.totalorder %v1721, 1000
          %vm1850 = vcmp.lt.s32.totalorder %v1722, 1000
          %vm1851 = vcmp.lt.s32.totalorder %v1723, 1000
          %vm1852 = vcmp.lt.s32.totalorder %v1724, 1000
          %vm1853 = vcmp.lt.s32.totalorder %v1725, 1000
          %vm1854 = vcmp.lt.s32.totalorder %v1726, 1000
          %vm1855 = vcmp.lt.s32.totalorder %v1727, 1000
          %vm1856 = vcmp.lt.s32.totalorder %v1728, 1000
          %vm1857 = vcmp.lt.s32.totalorder %v1729, 1000
          %vm1858 = vcmp.lt.s32.totalorder %v1730, 1000
          %vm1859 = vcmp.lt.s32.totalorder %v1731, 1000
          %vm1860 = vcmp.lt.s32.totalorder %v1732, 1000
          %vm1861 = vcmp.lt.s32.totalorder %v1733, 1000
          %vm1862 = vcmp.lt.s32.totalorder %v1734, 1000
          %vm1863 = vcmp.lt.s32.totalorder %v1735, 1000
          %vm1864 = vcmp.lt.s32.totalorder %v1736, 1000
          %vm1865 = vcmp.lt.s32.totalorder %v1737, 1000
          %vm1866 = vcmp.lt.s32.totalorder %v1738, 1000
          %vm1867 = vcmp.lt.s32.totalorder %v1739, 1000
          %vm1868 = vcmp.lt.s32.totalorder %v1740, 1000
          %vm1869 = vcmp.lt.s32.totalorder %v1741, 1000
          %vm1870 = vcmp.lt.s32.totalorder %v1742, 1000
          %vm1871 = vcmp.lt.s32.totalorder %v1743, 1000
          %vm1872 = vcmp.lt.s32.totalorder %v1744, 1000
          %vm1873 = vcmp.lt.s32.totalorder %v1745, 1000
          %vm1874 = vcmp.lt.s32.totalorder %v1746, 1000
          %vm1875 = vcmp.lt.s32.totalorder %v1747, 1000
          %vm1876 = vcmp.lt.s32.totalorder %v1748, 1000
          %vm1877 = vcmp.lt.s32.totalorder %v1749, 1000
          %vm1878 = vcmp.lt.s32.totalorder %v1750, 1000
          %vm1879 = vcmp.lt.s32.totalorder %v1751, 1000
          %vm1880 = vcmp.lt.s32.totalorder %v1752, 1000
          %vm1881 = vcmp.lt.s32.totalorder %v1753, 1000
          %vm1882 = vcmp.lt.s32.totalorder %v1754, 1000
          %vm1883 = vcmp.lt.s32.totalorder %v1755, 1000
          %vm1884 = vcmp.lt.s32.totalorder %v1756, 1000
          %vm1885 = vcmp.lt.s32.totalorder %v1757, 1000
          %vm1886 = vcmp.lt.s32.totalorder %v1758, 1000
          %vm1887 = vcmp.lt.s32.totalorder %v1759, 1000
          %vm1888 = vcmp.lt.s32.totalorder %v1760, 1000
          %vm1889 = vcmp.lt.s32.totalorder %v1761, 1000
          %vm1890 = vcmp.lt.s32.totalorder %v1762, 1000
          %vm1891 = vcmp.lt.s32.totalorder %v1763, 1000
          %vm1892 = vcmp.lt.s32.totalorder %v1764, 1000
          %vm1893 = vcmp.lt.s32.totalorder %v1765, 1000
          %vm1894 = vcmp.lt.s32.totalorder %v1766, 1000
          %vm1895 = vcmp.lt.s32.totalorder %v1767, 1000
          %vm1896 = vcmp.lt.s32.totalorder %v1768, 1000
          %vm1897 = vcmp.lt.s32.totalorder %v1769, 1000
          %vm1898 = vcmp.lt.s32.totalorder %v1770, 1000
          %vm1899 = vcmp.lt.s32.totalorder %v1771, 1000
          %vm1900 = vcmp.lt.s32.totalorder %v1772, 1000
          %vm1901 = vcmp.lt.s32.totalorder %v1773, 1000
          %vm1902 = vcmp.lt.s32.totalorder %v1774, 1000
          %vm1903 = vcmp.lt.s32.totalorder %v1775, 1000
          %vm1904 = vcmp.lt.s32.totalorder %v1776, 1000
          %vm1905 = vcmp.lt.s32.totalorder %v1777, 1000
          %vm1906 = vcmp.lt.s32.totalorder %v1778, 1000
          %vm1907 = vcmp.lt.s32.totalorder %v1779, 1000
          %vm1908 = vcmp.lt.s32.totalorder %v1780, 1000
          %vm1909 = vcmp.lt.s32.totalorder %v1781, 1000
          %vm1910 = vcmp.lt.s32.totalorder %v1782, 1000
          %vm1911 = vcmp.lt.s32.totalorder %v1783, 1000
          %vm1912 = vcmp.lt.s32.totalorder %v1784, 1000
          %vm1913 = vcmp.lt.s32.totalorder %v1785, 1000
          %vm1914 = vcmp.lt.s32.totalorder %v1786, 1000
          %vm1915 = vcmp.lt.s32.totalorder %v1787, 1000
          %vm1916 = vcmp.lt.s32.totalorder %v1788, 1000
          %vm1917 = vcmp.lt.s32.totalorder %v1789, 1000
          %vm1918 = vcmp.lt.s32.totalorder %v1790, 1000
          %vm1919 = vcmp.lt.s32.totalorder %v1791, 1000
          %vm1920 = vcmp.lt.s32.totalorder %v1792, 1000
          %vm1921 = vcmp.lt.s32.totalorder %v1793, 1000
          %vm1922 = vcmp.lt.s32.totalorder %v1794, 1000
          %vm1923 = vcmp.lt.s32.totalorder %v1795, 1000
          %vm1924 = vcmp.lt.s32.totalorder %v1796, 1000
          %vm1925 = vcmp.lt.s32.totalorder %v1797, 1000
          %vm1926 = vcmp.lt.s32.totalorder %v1798, 1000
          %vm1927 = vcmp.lt.s32.totalorder %v1799, 1000
          %vm1928 = vcmp.lt.s32.totalorder %v1800, 1000
          %vm1929 = vcmp.lt.s32.totalorder %v1801, 1000
          %vm1930 = vcmp.lt.s32.totalorder %v1802, 1000
          %vm1931 = vcmp.lt.s32.totalorder %v1803, 1000
          %vm1932 = vcmp.lt.s32.totalorder %v1804, 1000
          %vm1933 = vcmp.lt.s32.totalorder %v1805, 1000
          %vm1934 = vcmp.lt.s32.totalorder %v1806, 1000
          %vm1935 = vcmp.lt.s32.totalorder %v1807, 1000
          %vm1936 = vcmp.lt.s32.totalorder %v1808, 1000
          %vm1937 = vcmp.lt.s32.totalorder %v1809, 1000
          %vm1938 = vcmp.lt.s32.totalorder %v1810, 1000
          %vm1939 = vcmp.lt.s32.totalorder %v1811, 1000
          %vm1940 = vcmp.lt.s32.totalorder %v1812, 1000
          %vm1941 = vcmp.lt.s32.totalorder %v1813, 1000
          %vm1942 = vcmp.lt.s32.totalorder %v1814, 1000
          %vm1943 = vcmp.lt.s32.totalorder %v1815, 1000
          %vm1944 = vcmp.lt.s32.totalorder %v1816, 1000
          %vm1945 = vcmp.lt.s32.totalorder %v1817, 1000
          %vm1946 = vcmp.lt.s32.totalorder %v1818, 1000
          %vm1947 = vcmp.lt.s32.totalorder %v1819, 1000
          %vm1948 = vcmp.lt.s32.totalorder %v1820, 1000
          %vm1949 = vcmp.lt.s32.totalorder %v1821, 1000
          %vm1950 = vcmp.lt.s32.totalorder %v1822, 1000
          %vm1951 = vcmp.lt.s32.totalorder %v1823, 1000
          %vm1952 = vcmp.lt.s32.totalorder %v1824, 1000
          %vm1953 = vcmp.lt.s32.totalorder %v1825, 1000
          %vm1954 = vcmp.lt.s32.totalorder %v1826, 1000
          %vm1955 = vcmp.lt.s32.totalorder %v1827, 1000
          %vm1956 = vcmp.lt.s32.totalorder %v1828, 1000
          %vm1957 = vcmp.lt.s32.totalorder %v1829, 1000
          %vm1958 = vcmp.lt.s32.totalorder %v1830, 1000
          %vm1959 = vcmp.lt.s32.totalorder %v1831, 1000
          %vm1960 = vcmp.lt.s32.totalorder %v1832, 1000
          %vm1961 = vcmp.lt.s32.totalorder %v1833, 1000
          %vm1962 = vcmp.lt.s32.totalorder %v1834, 1000
          %vm1963 = vcmp.lt.s32.totalorder %v1835, 1000
          %vm1964 = vcmp.lt.s32.totalorder %v1836, 1000
          %vm1965 = vcmp.lt.s32.totalorder %v1837, 1000
          %vm1966 = vcmp.lt.s32.totalorder %v1838, 1000
          %vm1967 = vcmp.lt.s32.totalorder %v1839, 1000
          %vm1968 = vcmp.lt.s32.totalorder %v1840, 1000
          %v1969 = vsel %vm1841, %v1457, 0.0
          %v1970 = vsel %vm1842, %v1459, 0.0
          %v1971 = vsel %vm1843, %v1461, 0.0
          %v1972 = vsel %vm1844, %v1463, 0.0
          %v1973 = vsel %vm1845, %v1465, 0.0
          %v1974 = vsel %vm1846, %v1467, 0.0
          %v1975 = vsel %vm1847, %v1469, 0.0
          %v1976 = vsel %vm1848, %v1471, 0.0
          %v1977 = vsel %vm1849, %v1473, 0.0
          %v1978 = vsel %vm1850, %v1475, 0.0
          %v1979 = vsel %vm1851, %v1477, 0.0
          %v1980 = vsel %vm1852, %v1479, 0.0
          %v1981 = vsel %vm1853, %v1481, 0.0
          %v1982 = vsel %vm1854, %v1483, 0.0
          %v1983 = vsel %vm1855, %v1485, 0.0
          %v1984 = vsel %vm1856, %v1487, 0.0
          %v1985 = vsel %vm1857, %v1489, 0.0
          %v1986 = vsel %vm1858, %v1491, 0.0
          %v1987 = vsel %vm1859, %v1493, 0.0
          %v1988 = vsel %vm1860, %v1495, 0.0
          %v1989 = vsel %vm1861, %v1497, 0.0
          %v1990 = vsel %vm1862, %v1499, 0.0
          %v1991 = vsel %vm1863, %v1501, 0.0
          %v1992 = vsel %vm1864, %v1503, 0.0
          %v1993 = vsel %vm1865, %v1505, 0.0
          %v1994 = vsel %vm1866, %v1507, 0.0
          %v1995 = vsel %vm1867, %v1509, 0.0
          %v1996 = vsel %vm1868, %v1511, 0.0
          %v1997 = vsel %vm1869, %v1513, 0.0
          %v1998 = vsel %vm1870, %v1515, 0.0
          %v1999 = vsel %vm1871, %v1517, 0.0
          %v2000 = vsel %vm1872, %v1519, 0.0
          %v2001 = vsel %vm1873, %v1521, 0.0
          %v2002 = vsel %vm1874, %v1523, 0.0
          %v2003 = vsel %vm1875, %v1525, 0.0
          %v2004 = vsel %vm1876, %v1527, 0.0
          %v2005 = vsel %vm1877, %v1529, 0.0
          %v2006 = vsel %vm1878, %v1531, 0.0
          %v2007 = vsel %vm1879, %v1533, 0.0
          %v2008 = vsel %vm1880, %v1535, 0.0
          %v2009 = vsel %vm1881, %v1537, 0.0
          %v2010 = vsel %vm1882, %v1539, 0.0
          %v2011 = vsel %vm1883, %v1541, 0.0
          %v2012 = vsel %vm1884, %v1543, 0.0
          %v2013 = vsel %vm1885, %v1545, 0.0
          %v2014 = vsel %vm1886, %v1547, 0.0
          %v2015 = vsel %vm1887, %v1549, 0.0
          %v2016 = vsel %vm1888, %v1551, 0.0
          %v2017 = vsel %vm1889, %v1553, 0.0
          %v2018 = vsel %vm1890, %v1555, 0.0
          %v2019 = vsel %vm1891, %v1557, 0.0
          %v2020 = vsel %vm1892, %v1559, 0.0
          %v2021 = vsel %vm1893, %v1561, 0.0
          %v2022 = vsel %vm1894, %v1563, 0.0
          %v2023 = vsel %vm1895, %v1565, 0.0
          %v2024 = vsel %vm1896, %v1567, 0.0
          %v2025 = vsel %vm1897, %v1569, 0.0
          %v2026 = vsel %vm1898, %v1571, 0.0
          %v2027 = vsel %vm1899, %v1573, 0.0
          %v2028 = vsel %vm1900, %v1575, 0.0
          %v2029 = vsel %vm1901, %v1577, 0.0
          %v2030 = vsel %vm1902, %v1579, 0.0
          %v2031 = vsel %vm1903, %v1581, 0.0
          %v2032 = vsel %vm1904, %v1583, 0.0
          %v2033 = vsel %vm1905, %v1585, 0.0
          %v2034 = vsel %vm1906, %v1587, 0.0
          %v2035 = vsel %vm1907, %v1589, 0.0
          %v2036 = vsel %vm1908, %v1591, 0.0
          %v2037 = vsel %vm1909, %v1593, 0.0
          %v2038 = vsel %vm1910, %v1595, 0.0
          %v2039 = vsel %vm1911, %v1597, 0.0
          %v2040 = vsel %vm1912, %v1599, 0.0
          %v2041 = vsel %vm1913, %v1601, 0.0
          %v2042 = vsel %vm1914, %v1603, 0.0
          %v2043 = vsel %vm1915, %v1605, 0.0
          %v2044 = vsel %vm1916, %v1607, 0.0
          %v2045 = vsel %vm1917, %v1609, 0.0
          %v2046 = vsel %vm1918, %v1611, 0.0
          %v2047 = vsel %vm1919, %v1613, 0.0
          %v2048 = vsel %vm1920, %v1615, 0.0
          %v2049 = vsel %vm1921, %v1617, 0.0
          %v2050 = vsel %vm1922, %v1619, 0.0
          %v2051 = vsel %vm1923, %v1621, 0.0
          %v2052 = vsel %vm1924, %v1623, 0.0
          %v2053 = vsel %vm1925, %v1625, 0.0
          %v2054 = vsel %vm1926, %v1627, 0.0
          %v2055 = vsel %vm1927, %v1629, 0.0
          %v2056 = vsel %vm1928, %v1631, 0.0
          %v2057 = vsel %vm1929, %v1633, 0.0
          %v2058 = vsel %vm1930, %v1635, 0.0
          %v2059 = vsel %vm1931, %v1637, 0.0
          %v2060 = vsel %vm1932, %v1639, 0.0
          %v2061 = vsel %vm1933, %v1641, 0.0
          %v2062 = vsel %vm1934, %v1643, 0.0
          %v2063 = vsel %vm1935, %v1645, 0.0
          %v2064 = vsel %vm1936, %v1647, 0.0
          %v2065 = vsel %vm1937, %v1649, 0.0
          %v2066 = vsel %vm1938, %v1651, 0.0
          %v2067 = vsel %vm1939, %v1653, 0.0
          %v2068 = vsel %vm1940, %v1655, 0.0
          %v2069 = vsel %vm1941, %v1657, 0.0
          %v2070 = vsel %vm1942, %v1659, 0.0
          %v2071 = vsel %vm1943, %v1661, 0.0
          %v2072 = vsel %vm1944, %v1663, 0.0
          %v2073 = vsel %vm1945, %v1665, 0.0
          %v2074 = vsel %vm1946, %v1667, 0.0
          %v2075 = vsel %vm1947, %v1669, 0.0
          %v2076 = vsel %vm1948, %v1671, 0.0
          %v2077 = vsel %vm1949, %v1673, 0.0
          %v2078 = vsel %vm1950, %v1675, 0.0
          %v2079 = vsel %vm1951, %v1677, 0.0
          %v2080 = vsel %vm1952, %v1679, 0.0
          %v2081 = vsel %vm1953, %v1681, 0.0
          %v2082 = vsel %vm1954, %v1683, 0.0
          %v2083 = vsel %vm1955, %v1685, 0.0
          %v2084 = vsel %vm1956, %v1687, 0.0
          %v2085 = vsel %vm1957, %v1689, 0.0
          %v2086 = vsel %vm1958, %v1691, 0.0
          %v2087 = vsel %vm1959, %v1693, 0.0
          %v2088 = vsel %vm1960, %v1695, 0.0
          %v2089 = vsel %vm1961, %v1697, 0.0
          %v2090 = vsel %vm1962, %v1699, 0.0
          %v2091 = vsel %vm1963, %v1701, 0.0
          %v2092 = vsel %vm1964, %v1703, 0.0
          %v2093 = vsel %vm1965, %v1705, 0.0
          %v2094 = vsel %vm1966, %v1707, 0.0
          %v2095 = vsel %vm1967, %v1709, 0.0
          %v2096 = vsel %vm1968, %v1711, 0.0
          %2097 = vst.msk [vmem:[#allocation2] sm:$0xff] %vm303, %v1969
          %2098 = vst.msk [vmem:[#allocation2 + $0x8] sm:$0xff] %vm303, %v1970
          %2099 = vst.msk [vmem:[#allocation2 + $0x10] sm:$0xff] %vm303, %v1971
          %2100 = vst.msk [vmem:[#allocation2 + $0x18] sm:$0xff] %vm303, %v1972
          %2101 = vst.msk [vmem:[#allocation2 + $0x20] sm:$0xff] %vm303, %v1973
          %2102 = vst.msk [vmem:[#allocation2 + $0x28] sm:$0xff] %vm303, %v1974
          %2103 = vst.msk [vmem:[#allocation2 + $0x30] sm:$0xff] %vm303, %v1975
          %2104 = vst.msk [vmem:[#allocation2 + $0x38] sm:$0xff] %vm303, %v1976
          %2105 = vst.msk [vmem:[#allocation2 + $0x40] sm:$0xff] %vm303, %v1977
          %2106 = vst.msk [vmem:[#allocation2 + $0x48] sm:$0xff] %vm303, %v1978
          %2107 = vst.msk [vmem:[#allocation2 + $0x50] sm:$0xff] %vm303, %v1979
          %2108 = vst.msk [vmem:[#allocation2 + $0x58] sm:$0xff] %vm303, %v1980
          %2109 = vst.msk [vmem:[#allocation2 + $0x60] sm:$0xff] %vm303, %v1981
          %2110 = vst.msk [vmem:[#allocation2 + $0x68] sm:$0xff] %vm303, %v1982
          %2111 = vst.msk [vmem:[#allocation2 + $0x70] sm:$0xff] %vm303, %v1983
          %2112 = vst.msk [vmem:[#allocation2 + $0x78] sm:$0xff] %vm303, %v1984
          %2113 = vst.msk [vmem:[#allocation2 + $0x80] sm:$0xff] %vm303, %v1985
          %2114 = vst.msk [vmem:[#allocation2 + $0x88] sm:$0xff] %vm303, %v1986
          %2115 = vst.msk [vmem:[#allocation2 + $0x90] sm:$0xff] %vm303, %v1987
          %2116 = vst.msk [vmem:[#allocation2 + $0x98] sm:$0xff] %vm303, %v1988
          %2117 = vst.msk [vmem:[#allocation2 + $0xa0] sm:$0xff] %vm303, %v1989
          %2118 = vst.msk [vmem:[#allocation2 + $0xa8] sm:$0xff] %vm303, %v1990
          %2119 = vst.msk [vmem:[#allocation2 + $0xb0] sm:$0xff] %vm303, %v1991
          %2120 = vst.msk [vmem:[#allocation2 + $0xb8] sm:$0xff] %vm303, %v1992
          %2121 = vst.msk [vmem:[#allocation2 + $0xc0] sm:$0xff] %vm303, %v1993
          %2122 = vst.msk [vmem:[#allocation2 + $0xc8] sm:$0xff] %vm303, %v1994
          %2123 = vst.msk [vmem:[#allocation2 + $0xd0] sm:$0xff] %vm303, %v1995
          %2124 = vst.msk [vmem:[#allocation2 + $0xd8] sm:$0xff] %vm303, %v1996
          %2125 = vst.msk [vmem:[#allocation2 + $0xe0] sm:$0xff] %vm303, %v1997
          %2126 = vst.msk [vmem:[#allocation2 + $0xe8] sm:$0xff] %vm303, %v1998
          %2127 = vst.msk [vmem:[#allocation2 + $0xf0] sm:$0xff] %vm303, %v1999
          %2128 = vst.msk [vmem:[#allocation2 + $0xf8] sm:$0xff] %vm303, %v2000
          %2129 = vst.msk [vmem:[#allocation2 + $0x100] sm:$0xff] %vm303, %v2001
          %2130 = vst.msk [vmem:[#allocation2 + $0x108] sm:$0xff] %vm303, %v2002
          %2131 = vst.msk [vmem:[#allocation2 + $0x110] sm:$0xff] %vm303, %v2003
          %2132 = vst.msk [vmem:[#allocation2 + $0x118] sm:$0xff] %vm303, %v2004
          %2133 = vst.msk [vmem:[#allocation2 + $0x120] sm:$0xff] %vm303, %v2005
          %2134 = vst.msk [vmem:[#allocation2 + $0x128] sm:$0xff] %vm303, %v2006
          %2135 = vst.msk [vmem:[#allocation2 + $0x130] sm:$0xff] %vm303, %v2007
          %2136 = vst.msk [vmem:[#allocation2 + $0x138] sm:$0xff] %vm303, %v2008
          %2137 = vst.msk [vmem:[#allocation2 + $0x140] sm:$0xff] %vm303, %v2009
          %2138 = vst.msk [vmem:[#allocation2 + $0x148] sm:$0xff] %vm303, %v2010
          %2139 = vst.msk [vmem:[#allocation2 + $0x150] sm:$0xff] %vm303, %v2011
          %2140 = vst.msk [vmem:[#allocation2 + $0x158] sm:$0xff] %vm303, %v2012
          %2141 = vst.msk [vmem:[#allocation2 + $0x160] sm:$0xff] %vm303, %v2013
          %2142 = vst.msk [vmem:[#allocation2 + $0x168] sm:$0xff] %vm303, %v2014
          %2143 = vst.msk [vmem:[#allocation2 + $0x170] sm:$0xff] %vm303, %v2015
          %2144 = vst.msk [vmem:[#allocation2 + $0x178] sm:$0xff] %vm303, %v2016
          %2145 = vst.msk [vmem:[#allocation2 + $0x180] sm:$0xff] %vm303, %v2017
          %2146 = vst.msk [vmem:[#allocation2 + $0x188] sm:$0xff] %vm303, %v2018
          %2147 = vst.msk [vmem:[#allocation2 + $0x190] sm:$0xff] %vm303, %v2019
          %2148 = vst.msk [vmem:[#allocation2 + $0x198] sm:$0xff] %vm303, %v2020
          %2149 = vst.msk [vmem:[#allocation2 + $0x1a0] sm:$0xff] %vm303, %v2021
          %2150 = vst.msk [vmem:[#allocation2 + $0x1a8] sm:$0xff] %vm303, %v2022
          %2151 = vst.msk [vmem:[#allocation2 + $0x1b0] sm:$0xff] %vm303, %v2023
          %2152 = vst.msk [vmem:[#allocation2 + $0x1b8] sm:$0xff] %vm303, %v2024
          %2153 = vst.msk [vmem:[#allocation2 + $0x1c0] sm:$0xff] %vm303, %v2025
          %2154 = vst.msk [vmem:[#allocation2 + $0x1c8] sm:$0xff] %vm303, %v2026
          %2155 = vst.msk [vmem:[#allocation2 + $0x1d0] sm:$0xff] %vm303, %v2027
          %2156 = vst.msk [vmem:[#allocation2 + $0x1d8] sm:$0xff] %vm303, %v2028
          %2157 = vst.msk [vmem:[#allocation2 + $0x1e0] sm:$0xff] %vm303, %v2029
          %2158 = vst.msk [vmem:[#allocation2 + $0x1e8] sm:$0xff] %vm303, %v2030
          %2159 = vst.msk [vmem:[#allocation2 + $0x1f0] sm:$0xff] %vm303, %v2031
          %2160 = vst.msk [vmem:[#allocation2 + $0x1f8] sm:$0xff] %vm303, %v2032
          %2161 = vst.msk [vmem:[#allocation2 + $0x200] sm:$0xff] %vm303, %v2033
          %2162 = vst.msk [vmem:[#allocation2 + $0x208] sm:$0xff] %vm303, %v2034
          %2163 = vst.msk [vmem:[#allocation2 + $0x210] sm:$0xff] %vm303, %v2035
          %2164 = vst.msk [vmem:[#allocation2 + $0x218] sm:$0xff] %vm303, %v2036
          %2165 = vst.msk [vmem:[#allocation2 + $0x220] sm:$0xff] %vm303, %v2037
          %2166 = vst.msk [vmem:[#allocation2 + $0x228] sm:$0xff] %vm303, %v2038
          %2167 = vst.msk [vmem:[#allocation2 + $0x230] sm:$0xff] %vm303, %v2039
          %2168 = vst.msk [vmem:[#allocation2 + $0x238] sm:$0xff] %vm303, %v2040
          %2169 = vst.msk [vmem:[#allocation2 + $0x240] sm:$0xff] %vm303, %v2041
          %2170 = vst.msk [vmem:[#allocation2 + $0x248] sm:$0xff] %vm303, %v2042
          %2171 = vst.msk [vmem:[#allocation2 + $0x250] sm:$0xff] %vm303, %v2043
          %2172 = vst.msk [vmem:[#allocation2 + $0x258] sm:$0xff] %vm303, %v2044
          %2173 = vst.msk [vmem:[#allocation2 + $0x260] sm:$0xff] %vm303, %v2045
          %2174 = vst.msk [vmem:[#allocation2 + $0x268] sm:$0xff] %vm303, %v2046
          %2175 = vst.msk [vmem:[#allocation2 + $0x270] sm:$0xff] %vm303, %v2047
          %2176 = vst.msk [vmem:[#allocation2 + $0x278] sm:$0xff] %vm303, %v2048
          %2177 = vst.msk [vmem:[#allocation2 + $0x280] sm:$0xff] %vm303, %v2049
          %2178 = vst.msk [vmem:[#allocation2 + $0x288] sm:$0xff] %vm303, %v2050
          %2179 = vst.msk [vmem:[#allocation2 + $0x290] sm:$0xff] %vm303, %v2051
          %2180 = vst.msk [vmem:[#allocation2 + $0x298] sm:$0xff] %vm303, %v2052
          %2181 = vst.msk [vmem:[#allocation2 + $0x2a0] sm:$0xff] %vm303, %v2053
          %2182 = vst.msk [vmem:[#allocation2 + $0x2a8] sm:$0xff] %vm303, %v2054
          %2183 = vst.msk [vmem:[#allocation2 + $0x2b0] sm:$0xff] %vm303, %v2055
          %2184 = vst.msk [vmem:[#allocation2 + $0x2b8] sm:$0xff] %vm303, %v2056
          %2185 = vst.msk [vmem:[#allocation2 + $0x2c0] sm:$0xff] %vm303, %v2057
          %2186 = vst.msk [vmem:[#allocation2 + $0x2c8] sm:$0xff] %vm303, %v2058
          %2187 = vst.msk [vmem:[#allocation2 + $0x2d0] sm:$0xff] %vm303, %v2059
          %2188 = vst.msk [vmem:[#allocation2 + $0x2d8] sm:$0xff] %vm303, %v2060
          %2189 = vst.msk [vmem:[#allocation2 + $0x2e0] sm:$0xff] %vm303, %v2061
          %2190 = vst.msk [vmem:[#allocation2 + $0x2e8] sm:$0xff] %vm303, %v2062
          %2191 = vst.msk [vmem:[#allocation2 + $0x2f0] sm:$0xff] %vm303, %v2063
          %2192 = vst.msk [vmem:[#allocation2 + $0x2f8] sm:$0xff] %vm303, %v2064
          %2193 = vst.msk [vmem:[#allocation2 + $0x300] sm:$0xff] %vm303, %v2065
          %2194 = vst.msk [vmem:[#allocation2 + $0x308] sm:$0xff] %vm303, %v2066
          %2195 = vst.msk [vmem:[#allocation2 + $0x310] sm:$0xff] %vm303, %v2067
          %2196 = vst.msk [vmem:[#allocation2 + $0x318] sm:$0xff] %vm303, %v2068
          %2197 = vst.msk [vmem:[#allocation2 + $0x320] sm:$0xff] %vm303, %v2069
          %2198 = vst.msk [vmem:[#allocation2 + $0x328] sm:$0xff] %vm303, %v2070
          %2199 = vst.msk [vmem:[#allocation2 + $0x330] sm:$0xff] %vm303, %v2071
          %2200 = vst.msk [vmem:[#allocation2 + $0x338] sm:$0xff] %vm303, %v2072
          %2201 = vst.msk [vmem:[#allocation2 + $0x340] sm:$0xff] %vm303, %v2073
          %2202 = vst.msk [vmem:[#allocation2 + $0x348] sm:$0xff] %vm303, %v2074
          %2203 = vst.msk [vmem:[#allocation2 + $0x350] sm:$0xff] %vm303, %v2075
          %2204 = vst.msk [vmem:[#allocation2 + $0x358] sm:$0xff] %vm303, %v2076
          %2205 = vst.msk [vmem:[#allocation2 + $0x360] sm:$0xff] %vm303, %v2077
          %2206 = vst.msk [vmem:[#allocation2 + $0x368] sm:$0xff] %vm303, %v2078
          %2207 = vst.msk [vmem:[#allocation2 + $0x370] sm:$0xff] %vm303, %v2079
          %2208 = vst.msk [vmem:[#allocation2 + $0x378] sm:$0xff] %vm303, %v2080
          %2209 = vst.msk [vmem:[#allocation2 + $0x380] sm:$0xff] %vm303, %v2081
          %2210 = vst.msk [vmem:[#allocation2 + $0x388] sm:$0xff] %vm303, %v2082
          %2211 = vst.msk [vmem:[#allocation2 + $0x390] sm:$0xff] %vm303, %v2083
          %2212 = vst.msk [vmem:[#allocation2 + $0x398] sm:$0xff] %vm303, %v2084
          %2213 = vst.msk [vmem:[#allocation2 + $0x3a0] sm:$0xff] %vm303, %v2085
          %2214 = vst.msk [vmem:[#allocation2 + $0x3a8] sm:$0xff] %vm303, %v2086
          %2215 = vst.msk [vmem:[#allocation2 + $0x3b0] sm:$0xff] %vm303, %v2087
          %2216 = vst.msk [vmem:[#allocation2 + $0x3b8] sm:$0xff] %vm303, %v2088
          %2217 = vst.msk [vmem:[#allocation2 + $0x3c0] sm:$0xff] %vm303, %v2089
          %2218 = vst.msk [vmem:[#allocation2 + $0x3c8] sm:$0xff] %vm303, %v2090
          %2219 = vst.msk [vmem:[#allocation2 + $0x3d0] sm:$0xff] %vm303, %v2091
          %2220 = vst.msk [vmem:[#allocation2 + $0x3d8] sm:$0xff] %vm303, %v2092
          %2221 = vst.msk [vmem:[#allocation2 + $0x3e0] sm:$0xff] %vm303, %v2093
          %2222 = vst.msk [vmem:[#allocation2 + $0x3e8] sm:$0xff] %vm303, %v2094
          %2223 = vst.msk [vmem:[#allocation2 + $0x3f0] sm:$0xff] %vm303, %v2095
          %2224 = vst.msk [vmem:[#allocation2 + $0x3f8] sm:$0xff] %vm303, %v2096
          %2225 = vst.msk [vmem:[#allocation4] sm:$0xff] %vm303, 0.0
        $region36: #{tpu_custom_call.1} parent=27 // pred_fallthru
          _
        // Predicated region
        $region37: #{tpu_custom_call.1} parent=27 // pred_check
          %p2226 = pneg %p170
        $region38: #{tpu_custom_call.1} parent=27 // pred_check_branch
          %2228 = sbr.rel (%p2226) target = $region40
        $region39: #{tpu_custom_call.1} parent=27 // pred_region
          %vm2229 = vcmask 64512
          %2230 = vst.msk [vmem:[#allocation3] sm:$0xff] %vm2229, 0.0
          %2231 = vst.msk [vmem:[#allocation3 + $0x8] sm:$0xff] %vm2229, 0.0
          %2232 = vst.msk [vmem:[#allocation3 + $0x10] sm:$0xff] %vm2229, 0.0
          %2233 = vst.msk [vmem:[#allocation3 + $0x18] sm:$0xff] %vm2229, 0.0
          %2234 = vst.msk [vmem:[#allocation3 + $0x20] sm:$0xff] %vm2229, 0.0
          %2235 = vst.msk [vmem:[#allocation3 + $0x28] sm:$0xff] %vm2229, 0.0
          %2236 = vst.msk [vmem:[#allocation3 + $0x30] sm:$0xff] %vm2229, 0.0
          %2237 = vst.msk [vmem:[#allocation3 + $0x38] sm:$0xff] %vm2229, 0.0
          %2238 = vst.msk [vmem:[#allocation3 + $0x40] sm:$0xff] %vm2229, 0.0
          %2239 = vst.msk [vmem:[#allocation3 + $0x48] sm:$0xff] %vm2229, 0.0
          %2240 = vst.msk [vmem:[#allocation3 + $0x50] sm:$0xff] %vm2229, 0.0
          %2241 = vst.msk [vmem:[#allocation3 + $0x58] sm:$0xff] %vm2229, 0.0
          %2242 = vst.msk [vmem:[#allocation3 + $0x60] sm:$0xff] %vm2229, 0.0
          %2243 = vst.msk [vmem:[#allocation3 + $0x68] sm:$0xff] %vm2229, 0.0
          %2244 = vst.msk [vmem:[#allocation3 + $0x70] sm:$0xff] %vm2229, 0.0
          %2245 = vst.msk [vmem:[#allocation3 + $0x78] sm:$0xff] %vm2229, 0.0
          %2246 = vst.msk [vmem:[#allocation3 + $0x80] sm:$0xff] %vm2229, 0.0
          %2247 = vst.msk [vmem:[#allocation3 + $0x88] sm:$0xff] %vm2229, 0.0
          %2248 = vst.msk [vmem:[#allocation3 + $0x90] sm:$0xff] %vm2229, 0.0
          %2249 = vst.msk [vmem:[#allocation3 + $0x98] sm:$0xff] %vm2229, 0.0
          %2250 = vst.msk [vmem:[#allocation3 + $0xa0] sm:$0xff] %vm2229, 0.0
          %2251 = vst.msk [vmem:[#allocation3 + $0xa8] sm:$0xff] %vm2229, 0.0
          %2252 = vst.msk [vmem:[#allocation3 + $0xb0] sm:$0xff] %vm2229, 0.0
          %2253 = vst.msk [vmem:[#allocation3 + $0xb8] sm:$0xff] %vm2229, 0.0
          %2254 = vst.msk [vmem:[#allocation3 + $0xc0] sm:$0xff] %vm2229, 0.0
          %2255 = vst.msk [vmem:[#allocation3 + $0xc8] sm:$0xff] %vm2229, 0.0
          %2256 = vst.msk [vmem:[#allocation3 + $0xd0] sm:$0xff] %vm2229, 0.0
          %2257 = vst.msk [vmem:[#allocation3 + $0xd8] sm:$0xff] %vm2229, 0.0
          %2258 = vst.msk [vmem:[#allocation3 + $0xe0] sm:$0xff] %vm2229, 0.0
          %2259 = vst.msk [vmem:[#allocation3 + $0xe8] sm:$0xff] %vm2229, 0.0
          %2260 = vst.msk [vmem:[#allocation3 + $0xf0] sm:$0xff] %vm2229, 0.0
          %2261 = vst.msk [vmem:[#allocation3 + $0xf8] sm:$0xff] %vm2229, 0.0
        $region40: #{tpu_custom_call.1} parent=27 // pred_fallthru
          _
        %v2262 = vld [vmem:[%s151] sm:$0xff]
        %v2263 = vld [vmem:[%s151 + $0x8] sm:$0xff]
        %v2264 = vld [vmem:[%s151 + $0x10] sm:$0xff]
        %v2265 = vld [vmem:[%s151 + $0x18] sm:$0xff]
        %v2266 = vld [vmem:[%s151 + $0x20] sm:$0xff]
        %v2267 = vld [vmem:[%s151 + $0x28] sm:$0xff]
        %v2268 = vld [vmem:[%s151 + $0x30] sm:$0xff]
        %v2269 = vld [vmem:[%s151 + $0x38] sm:$0xff]
        %v2270 = vld [vmem:[%s151 + $0x40] sm:$0xff]
        %v2271 = vld [vmem:[%s151 + $0x48] sm:$0xff]
        %v2272 = vld [vmem:[%s151 + $0x50] sm:$0xff]
        %v2273 = vld [vmem:[%s151 + $0x58] sm:$0xff]
        %v2274 = vld [vmem:[%s151 + $0x60] sm:$0xff]
        %v2275 = vld [vmem:[%s151 + $0x68] sm:$0xff]
        %v2276 = vld [vmem:[%s151 + $0x70] sm:$0xff]
        %v2277 = vld [vmem:[%s151 + $0x78] sm:$0xff]
        %v2278 = vld [vmem:[%s151 + $0x80] sm:$0xff]
        %v2279 = vld [vmem:[%s151 + $0x88] sm:$0xff]
        %v2280 = vld [vmem:[%s151 + $0x90] sm:$0xff]
        %v2281 = vld [vmem:[%s151 + $0x98] sm:$0xff]
        %v2282 = vld [vmem:[%s151 + $0xa0] sm:$0xff]
        %v2283 = vld [vmem:[%s151 + $0xa8] sm:$0xff]
        %v2284 = vld [vmem:[%s151 + $0xb0] sm:$0xff]
        %v2285 = vld [vmem:[%s151 + $0xb8] sm:$0xff]
        %v2286 = vld [vmem:[%s151 + $0xc0] sm:$0xff]
        %v2287 = vld [vmem:[%s151 + $0xc8] sm:$0xff]
        %v2288 = vld [vmem:[%s151 + $0xd0] sm:$0xff]
        %v2289 = vld [vmem:[%s151 + $0xd8] sm:$0xff]
        %v2290 = vld [vmem:[%s151 + $0xe0] sm:$0xff]
        %v2291 = vld [vmem:[%s151 + $0xe8] sm:$0xff]
        %v2292 = vld [vmem:[%s151 + $0xf0] sm:$0xff]
        %v2293 = vld [vmem:[%s151 + $0xf8] sm:$0xff]
        %v2294 = vld [vmem:[%s151 + $0x100] sm:$0xff]
        %v2295 = vld [vmem:[%s151 + $0x108] sm:$0xff]
        %v2296 = vld [vmem:[%s151 + $0x110] sm:$0xff]
        %v2297 = vld [vmem:[%s151 + $0x118] sm:$0xff]
        %v2298 = vld [vmem:[%s151 + $0x120] sm:$0xff]
        %v2299 = vld [vmem:[%s151 + $0x128] sm:$0xff]
        %v2300 = vld [vmem:[%s151 + $0x130] sm:$0xff]
        %v2301 = vld [vmem:[%s151 + $0x138] sm:$0xff]
        %v2302 = vld [vmem:[%s151 + $0x140] sm:$0xff]
        %v2303 = vld [vmem:[%s151 + $0x148] sm:$0xff]
        %v2304 = vld [vmem:[%s151 + $0x150] sm:$0xff]
        %v2305 = vld [vmem:[%s151 + $0x158] sm:$0xff]
        %v2306 = vld [vmem:[%s151 + $0x160] sm:$0xff]
        %v2307 = vld [vmem:[%s151 + $0x168] sm:$0xff]
        %v2308 = vld [vmem:[%s151 + $0x170] sm:$0xff]
        %v2309 = vld [vmem:[%s151 + $0x178] sm:$0xff]
        %v2310 = vld [vmem:[%s151 + $0x180] sm:$0xff]
        %v2311 = vld [vmem:[%s151 + $0x188] sm:$0xff]
        %v2312 = vld [vmem:[%s151 + $0x190] sm:$0xff]
        %v2313 = vld [vmem:[%s151 + $0x198] sm:$0xff]
        %v2314 = vld [vmem:[%s151 + $0x1a0] sm:$0xff]
        %v2315 = vld [vmem:[%s151 + $0x1a8] sm:$0xff]
        %v2316 = vld [vmem:[%s151 + $0x1b0] sm:$0xff]
        %v2317 = vld [vmem:[%s151 + $0x1b8] sm:$0xff]
        %v2318 = vld [vmem:[%s151 + $0x1c0] sm:$0xff]
        %v2319 = vld [vmem:[%s151 + $0x1c8] sm:$0xff]
        %v2320 = vld [vmem:[%s151 + $0x1d0] sm:$0xff]
        %v2321 = vld [vmem:[%s151 + $0x1d8] sm:$0xff]
        %v2322 = vld [vmem:[%s151 + $0x1e0] sm:$0xff]
        %v2323 = vld [vmem:[%s151 + $0x1e8] sm:$0xff]
        %v2324 = vld [vmem:[%s151 + $0x1f0] sm:$0xff]
        %v2325 = vld [vmem:[%s151 + $0x1f8] sm:$0xff]
        %v2326 = vld [vmem:[%s151 + $0x200] sm:$0xff]
        %v2327 = vld [vmem:[%s151 + $0x208] sm:$0xff]
        %v2328 = vld [vmem:[%s151 + $0x210] sm:$0xff]
        %v2329 = vld [vmem:[%s151 + $0x218] sm:$0xff]
        %v2330 = vld [vmem:[%s151 + $0x220] sm:$0xff]
        %v2331 = vld [vmem:[%s151 + $0x228] sm:$0xff]
        %v2332 = vld [vmem:[%s151 + $0x230] sm:$0xff]
        %v2333 = vld [vmem:[%s151 + $0x238] sm:$0xff]
        %v2334 = vld [vmem:[%s151 + $0x240] sm:$0xff]
        %v2335 = vld [vmem:[%s151 + $0x248] sm:$0xff]
        %v2336 = vld [vmem:[%s151 + $0x250] sm:$0xff]
        %v2337 = vld [vmem:[%s151 + $0x258] sm:$0xff]
        %v2338 = vld [vmem:[%s151 + $0x260] sm:$0xff]
        %v2339 = vld [vmem:[%s151 + $0x268] sm:$0xff]
        %v2340 = vld [vmem:[%s151 + $0x270] sm:$0xff]
        %v2341 = vld [vmem:[%s151 + $0x278] sm:$0xff]
        %v2342 = vld [vmem:[%s151 + $0x280] sm:$0xff]
        %v2343 = vld [vmem:[%s151 + $0x288] sm:$0xff]
        %v2344 = vld [vmem:[%s151 + $0x290] sm:$0xff]
        %v2345 = vld [vmem:[%s151 + $0x298] sm:$0xff]
        %v2346 = vld [vmem:[%s151 + $0x2a0] sm:$0xff]
        %v2347 = vld [vmem:[%s151 + $0x2a8] sm:$0xff]
        %v2348 = vld [vmem:[%s151 + $0x2b0] sm:$0xff]
        %v2349 = vld [vmem:[%s151 + $0x2b8] sm:$0xff]
        %v2350 = vld [vmem:[%s151 + $0x2c0] sm:$0xff]
        %v2351 = vld [vmem:[%s151 + $0x2c8] sm:$0xff]
        %v2352 = vld [vmem:[%s151 + $0x2d0] sm:$0xff]
        %v2353 = vld [vmem:[%s151 + $0x2d8] sm:$0xff]
        %v2354 = vld [vmem:[%s151 + $0x2e0] sm:$0xff]
        %v2355 = vld [vmem:[%s151 + $0x2e8] sm:$0xff]
        %v2356 = vld [vmem:[%s151 + $0x2f0] sm:$0xff]
        %v2357 = vld [vmem:[%s151 + $0x2f8] sm:$0xff]
        %v2358 = vld [vmem:[%s151 + $0x300] sm:$0xff]
        %v2359 = vld [vmem:[%s151 + $0x308] sm:$0xff]
        %v2360 = vld [vmem:[%s151 + $0x310] sm:$0xff]
        %v2361 = vld [vmem:[%s151 + $0x318] sm:$0xff]
        %v2362 = vld [vmem:[%s151 + $0x320] sm:$0xff]
        %v2363 = vld [vmem:[%s151 + $0x328] sm:$0xff]
        %v2364 = vld [vmem:[%s151 + $0x330] sm:$0xff]
        %v2365 = vld [vmem:[%s151 + $0x338] sm:$0xff]
        %v2366 = vld [vmem:[%s151 + $0x340] sm:$0xff]
        %v2367 = vld [vmem:[%s151 + $0x348] sm:$0xff]
        %v2368 = vld [vmem:[%s151 + $0x350] sm:$0xff]
        %v2369 = vld [vmem:[%s151 + $0x358] sm:$0xff]
        %v2370 = vld [vmem:[%s151 + $0x360] sm:$0xff]
        %v2371 = vld [vmem:[%s151 + $0x368] sm:$0xff]
        %v2372 = vld [vmem:[%s151 + $0x370] sm:$0xff]
        %v2373 = vld [vmem:[%s151 + $0x378] sm:$0xff]
        %v2374 = vld [vmem:[%s151 + $0x380] sm:$0xff]
        %v2375 = vld [vmem:[%s151 + $0x388] sm:$0xff]
        %v2376 = vld [vmem:[%s151 + $0x390] sm:$0xff]
        %v2377 = vld [vmem:[%s151 + $0x398] sm:$0xff]
        %v2378 = vld [vmem:[%s151 + $0x3a0] sm:$0xff]
        %v2379 = vld [vmem:[%s151 + $0x3a8] sm:$0xff]
        %v2380 = vld [vmem:[%s151 + $0x3b0] sm:$0xff]
        %v2381 = vld [vmem:[%s151 + $0x3b8] sm:$0xff]
        %v2382 = vld [vmem:[%s151 + $0x3c0] sm:$0xff]
        %v2383 = vld [vmem:[%s151 + $0x3c8] sm:$0xff]
        %v2384 = vld [vmem:[%s151 + $0x3d0] sm:$0xff]
        %v2385 = vld [vmem:[%s151 + $0x3d8] sm:$0xff]
        %v2386 = vld [vmem:[%s151 + $0x3e0] sm:$0xff]
        %v2387 = vld [vmem:[%s151 + $0x3e8] sm:$0xff]
        %v2388 = vld [vmem:[%s151 + $0x3f0] sm:$0xff]
        %v2389 = vld [vmem:[%s151 + $0x3f8] sm:$0xff]
        %s2390 = smul.u32 %s22, 512
        %s2391 = scalar_lea.vmem [#allocation2], %s2390
        %v2392 = vld [vmem:[%s2391] sm:$0xff]
        %v2393 = vld [vmem:[%s2391 + $0x8] sm:$0xff]
        %v2394 = vld [vmem:[%s2391 + $0x10] sm:$0xff]
        %v2395 = vld [vmem:[%s2391 + $0x18] sm:$0xff]
        %v2396 = vld [vmem:[%s2391 + $0x20] sm:$0xff]
        %v2397 = vld [vmem:[%s2391 + $0x28] sm:$0xff]
        %v2398 = vld [vmem:[%s2391 + $0x30] sm:$0xff]
        %v2399 = vld [vmem:[%s2391 + $0x38] sm:$0xff]
        %v2400 = vld [vmem:[%s2391 + $0x40] sm:$0xff]
        %v2401 = vld [vmem:[%s2391 + $0x48] sm:$0xff]
        %v2402 = vld [vmem:[%s2391 + $0x50] sm:$0xff]
        %v2403 = vld [vmem:[%s2391 + $0x58] sm:$0xff]
        %v2404 = vld [vmem:[%s2391 + $0x60] sm:$0xff]
        %v2405 = vld [vmem:[%s2391 + $0x68] sm:$0xff]
        %v2406 = vld [vmem:[%s2391 + $0x70] sm:$0xff]
        %v2407 = vld [vmem:[%s2391 + $0x78] sm:$0xff]
        %v2408 = vld [vmem:[%s2391 + $0x80] sm:$0xff]
        %v2409 = vld [vmem:[%s2391 + $0x88] sm:$0xff]
        %v2410 = vld [vmem:[%s2391 + $0x90] sm:$0xff]
        %v2411 = vld [vmem:[%s2391 + $0x98] sm:$0xff]
        %v2412 = vld [vmem:[%s2391 + $0xa0] sm:$0xff]
        %v2413 = vld [vmem:[%s2391 + $0xa8] sm:$0xff]
        %v2414 = vld [vmem:[%s2391 + $0xb0] sm:$0xff]
        %v2415 = vld [vmem:[%s2391 + $0xb8] sm:$0xff]
        %v2416 = vld [vmem:[%s2391 + $0xc0] sm:$0xff]
        %v2417 = vld [vmem:[%s2391 + $0xc8] sm:$0xff]
        %v2418 = vld [vmem:[%s2391 + $0xd0] sm:$0xff]
        %v2419 = vld [vmem:[%s2391 + $0xd8] sm:$0xff]
        %v2420 = vld [vmem:[%s2391 + $0xe0] sm:$0xff]
        %v2421 = vld [vmem:[%s2391 + $0xe8] sm:$0xff]
        %v2422 = vld [vmem:[%s2391 + $0xf0] sm:$0xff]
        %v2423 = vld [vmem:[%s2391 + $0xf8] sm:$0xff]
        %v2424 = vld [vmem:[%s2391 + $0x100] sm:$0xff]
        %v2425 = vld [vmem:[%s2391 + $0x108] sm:$0xff]
        %v2426 = vld [vmem:[%s2391 + $0x110] sm:$0xff]
        %v2427 = vld [vmem:[%s2391 + $0x118] sm:$0xff]
        %v2428 = vld [vmem:[%s2391 + $0x120] sm:$0xff]
        %v2429 = vld [vmem:[%s2391 + $0x128] sm:$0xff]
        %v2430 = vld [vmem:[%s2391 + $0x130] sm:$0xff]
        %v2431 = vld [vmem:[%s2391 + $0x138] sm:$0xff]
        %v2432 = vld [vmem:[%s2391 + $0x140] sm:$0xff]
        %v2433 = vld [vmem:[%s2391 + $0x148] sm:$0xff]
        %v2434 = vld [vmem:[%s2391 + $0x150] sm:$0xff]
        %v2435 = vld [vmem:[%s2391 + $0x158] sm:$0xff]
        %v2436 = vld [vmem:[%s2391 + $0x160] sm:$0xff]
        %v2437 = vld [vmem:[%s2391 + $0x168] sm:$0xff]
        %v2438 = vld [vmem:[%s2391 + $0x170] sm:$0xff]
        %v2439 = vld [vmem:[%s2391 + $0x178] sm:$0xff]
        %v2440 = vld [vmem:[%s2391 + $0x180] sm:$0xff]
        %v2441 = vld [vmem:[%s2391 + $0x188] sm:$0xff]
        %v2442 = vld [vmem:[%s2391 + $0x190] sm:$0xff]
        %v2443 = vld [vmem:[%s2391 + $0x198] sm:$0xff]
        %v2444 = vld [vmem:[%s2391 + $0x1a0] sm:$0xff]
        %v2445 = vld [vmem:[%s2391 + $0x1a8] sm:$0xff]
        %v2446 = vld [vmem:[%s2391 + $0x1b0] sm:$0xff]
        %v2447 = vld [vmem:[%s2391 + $0x1b8] sm:$0xff]
        %v2448 = vld [vmem:[%s2391 + $0x1c0] sm:$0xff]
        %v2449 = vld [vmem:[%s2391 + $0x1c8] sm:$0xff]
        %v2450 = vld [vmem:[%s2391 + $0x1d0] sm:$0xff]
        %v2451 = vld [vmem:[%s2391 + $0x1d8] sm:$0xff]
        %v2452 = vld [vmem:[%s2391 + $0x1e0] sm:$0xff]
        %v2453 = vld [vmem:[%s2391 + $0x1e8] sm:$0xff]
        %v2454 = vld [vmem:[%s2391 + $0x1f0] sm:$0xff]
        %v2455 = vld [vmem:[%s2391 + $0x1f8] sm:$0xff]
        %v2456 = vld [vmem:[#allocation3] sm:$0xff]
        %v2457 = vld [vmem:[#allocation3 + $0x8] sm:$0xff]
        %v2458 = vld [vmem:[#allocation3 + $0x10] sm:$0xff]
        %v2459 = vld [vmem:[#allocation3 + $0x18] sm:$0xff]
        %v2460 = vld [vmem:[#allocation3 + $0x20] sm:$0xff]
        %v2461 = vld [vmem:[#allocation3 + $0x28] sm:$0xff]
        %v2462 = vld [vmem:[#allocation3 + $0x30] sm:$0xff]
        %v2463 = vld [vmem:[#allocation3 + $0x38] sm:$0xff]
        %v2464 = vld [vmem:[#allocation3 + $0x40] sm:$0xff]
        %v2465 = vld [vmem:[#allocation3 + $0x48] sm:$0xff]
        %v2466 = vld [vmem:[#allocation3 + $0x50] sm:$0xff]
        %v2467 = vld [vmem:[#allocation3 + $0x58] sm:$0xff]
        %v2468 = vld [vmem:[#allocation3 + $0x60] sm:$0xff]
        %v2469 = vld [vmem:[#allocation3 + $0x68] sm:$0xff]
        %v2470 = vld [vmem:[#allocation3 + $0x70] sm:$0xff]
        %v2471 = vld [vmem:[#allocation3 + $0x78] sm:$0xff]
        %v2472 = vld [vmem:[#allocation3 + $0x80] sm:$0xff]
        %v2473 = vld [vmem:[#allocation3 + $0x88] sm:$0xff]
        %v2474 = vld [vmem:[#allocation3 + $0x90] sm:$0xff]
        %v2475 = vld [vmem:[#allocation3 + $0x98] sm:$0xff]
        %v2476 = vld [vmem:[#allocation3 + $0xa0] sm:$0xff]
        %v2477 = vld [vmem:[#allocation3 + $0xa8] sm:$0xff]
        %v2478 = vld [vmem:[#allocation3 + $0xb0] sm:$0xff]
        %v2479 = vld [vmem:[#allocation3 + $0xb8] sm:$0xff]
        %v2480 = vld [vmem:[#allocation3 + $0xc0] sm:$0xff]
        %v2481 = vld [vmem:[#allocation3 + $0xc8] sm:$0xff]
        %v2482 = vld [vmem:[#allocation3 + $0xd0] sm:$0xff]
        %v2483 = vld [vmem:[#allocation3 + $0xd8] sm:$0xff]
        %v2484 = vld [vmem:[#allocation3 + $0xe0] sm:$0xff]
        %v2485 = vld [vmem:[#allocation3 + $0xe8] sm:$0xff]
        %v2486 = vld [vmem:[#allocation3 + $0xf0] sm:$0xff]
        %v2487 = vld [vmem:[#allocation3 + $0xf8] sm:$0xff]
        %2488 = vmatprep.subr.mxu0 0.0
        %2489 = vmatpush1.msra.mxu0 %v2392
        %2490 = vmatprep.subr.mxu0 0.0
        %2491 = vmatpush1.msra.mxu0 %v2393
        %2492 = vmatprep.subr.mxu0 0.0
        %2493 = vmatpush1.msra.mxu0 %v2394
        %2494 = vmatprep.subr.mxu0 0.0
        %2495 = vmatpush1.msra.mxu0 %v2395
        %2496 = vmatprep.subr.mxu0 0.0
        %2497 = vmatpush1.msra.mxu0 %v2396
        %2498 = vmatprep.subr.mxu0 0.0
        %2499 = vmatpush1.msra.mxu0 %v2397
        %2500 = vmatprep.subr.mxu0 0.0
        %2501 = vmatpush1.msra.mxu0 %v2398
        %2502 = vmatprep.subr.mxu0 0.0
        %2503 = vmatpush1.msra.mxu0 %v2399
        %2504 = vmatprep.subr.mxu0 0.0
        %2505 = vmatpush1.msra.mxu0 %v2400
        %2506 = vmatprep.subr.mxu0 0.0
        %2507 = vmatpush1.msra.mxu0 %v2401
        %2508 = vmatprep.subr.mxu0 0.0
        %2509 = vmatpush1.msra.mxu0 %v2402
        %2510 = vmatprep.subr.mxu0 0.0
        %2511 = vmatpush1.msra.mxu0 %v2403
        %2512 = vmatprep.subr.mxu0 0.0
        %2513 = vmatpush1.msra.mxu0 %v2404
        %2514 = vmatprep.subr.mxu0 0.0
        %2515 = vmatpush1.msra.mxu0 %v2405
        %2516 = vmatprep.subr.mxu0 0.0
        %2517 = vmatpush1.msra.mxu0 %v2406
        %2518 = vmatprep.subr.mxu0 0.0
        %2519 = vmatpush1.msra.mxu0 %v2407
        %2520 = vmatprep.subr.mxu0 0.0
        %2521 = vmatpush1.msra.mxu0 %v2408
        %2522 = vmatprep.subr.mxu0 0.0
        %2523 = vmatpush1.msra.mxu0 %v2409
        %2524 = vmatprep.subr.mxu0 0.0
        %2525 = vmatpush1.msra.mxu0 %v2410
        %2526 = vmatprep.subr.mxu0 0.0
        %2527 = vmatpush1.msra.mxu0 %v2411
        %2528 = vmatprep.subr.mxu0 0.0
        %2529 = vmatpush1.msra.mxu0 %v2412
        %2530 = vmatprep.subr.mxu0 0.0
        %2531 = vmatpush1.msra.mxu0 %v2413
        %2532 = vmatprep.subr.mxu0 0.0
        %2533 = vmatpush1.msra.mxu0 %v2414
        %2534 = vmatprep.subr.mxu0 0.0
        %2535 = vmatpush1.msra.mxu0 %v2415
        %2536 = vmatprep.subr.mxu0 0.0
        %2537 = vmatpush1.msra.mxu0 %v2416
        %2538 = vmatprep.subr.mxu0 0.0
        %2539 = vmatpush1.msra.mxu0 %v2417
        %2540 = vmatprep.subr.mxu0 0.0
        %2541 = vmatpush1.msra.mxu0 %v2418
        %2542 = vmatprep.subr.mxu0 0.0
        %2543 = vmatpush1.msra.mxu0 %v2419
        %2544 = vmatprep.subr.mxu0 0.0
        %2545 = vmatpush1.msra.mxu0 %v2420
        %2546 = vmatprep.subr.mxu0 0.0
        %2547 = vmatpush1.msra.mxu0 %v2421
        %2548 = vmatprep.subr.mxu0 0.0
        %2549 = vmatpush1.msra.mxu0 %v2422
        %2550 = vmatprep.subr.mxu0 0.0
        %2551 = vmatpush1.msra.mxu0 %v2423
        %2552 = vmatprep.mubr.f32.mxu0 %v2263
        %2553 = vmatmul.mubr.f32.gmra.mrb[0].mxu0 %v2262
        %v2554 = vpop.f32.mrb[0].mxu0
        %v2555 = vadd.f32 0.0, %v2554
        %v2556 = vpop.f32.mrb[0].mxu0
        %2557 = vmatprep.mubr.f32.mxu0 %v2267
        %2558 = vmatmul.mubr.f32.gmra.mrb[0].mxu0 %v2266
        %v2559 = vpop.f32.mrb[0].mxu0
        %v2560 = vadd.f32 0.0, %v2559
        %v2561 = vpop.f32.mrb[0].mxu0
        %2562 = vmatprep.mubr.f32.mxu0 %v2271
        %2563 = vmatmul.mubr.f32.gmra.mrb[0].mxu0 %v2270
        %v2564 = vpop.f32.mrb[0].mxu0
        %v2565 = vadd.f32 0.0, %v2564
        %v2566 = vpop.f32.mrb[0].mxu0
        %2567 = vmatprep.mubr.f32.mxu0 %v2275
        %2568 = vmatmul.mubr.f32.gmra.mrb[0].mxu0 %v2274
        %v2569 = vpop.f32.mrb[0].mxu0
        %v2570 = vadd.f32 0.0, %v2569
        %v2571 = vpop.f32.mrb[0].mxu0
        %2572 = vmatprep.mubr.f32.mxu0 %v2279
        %2573 = vmatmul.mubr.f32.gmra.mrb[0].mxu0 %v2278
        %v2574 = vpop.f32.mrb[0].mxu0
        %v2575 = vadd.f32 0.0, %v2574
        %v2576 = vpop.f32.mrb[0].mxu0
        %2577 = vmatprep.mubr.f32.mxu0 %v2283
        %2578 = vmatmul.mubr.f32.gmra.mrb[0].mxu0 %v2282
        %v2579 = vpop.f32.mrb[0].mxu0
        %v2580 = vadd.f32 0.0, %v2579
        %v2581 = vpop.f32.mrb[0].mxu0
        %2582 = vmatprep.mubr.f32.mxu0 %v2287
        %2583 = vmatmul.mubr.f32.gmra.mrb[0].mxu0 %v2286
        %v2584 = vpop.f32.mrb[0].mxu0
        %v2585 = vadd.f32 0.0, %v2584
        %v2586 = vpop.f32.mrb[0].mxu0
        %2587 = vmatprep.mubr.f32.mxu0 %v2291
        %2588 = vmatmul.mubr.f32.gmra.mrb[0].mxu0 %v2290
        %v2589 = vpop.f32.mrb[0].mxu0
        %v2590 = vadd.f32 0.0, %v2589
        %v2591 = vpop.f32.mrb[0].mxu0
        %2592 = vmatprep.mubr.f32.mxu0 %v2295
        %2593 = vmatmul.mubr.f32.gmra.mrb[0].mxu0 %v2294
        %v2594 = vpop.f32.mrb[0].mxu0
        %v2595 = vadd.f32 0.0, %v2594
        %v2596 = vpop.f32.mrb[0].mxu0
        %2597 = vmatprep.mubr.f32.mxu0 %v2299
        %2598 = vmatmul.mubr.f32.gmra.mrb[0].mxu0 %v2298
        %v2599 = vpop.f32.mrb[0].mxu0
        %v2600 = vadd.f32 0.0, %v2599
        %v2601 = vpop.f32.mrb[0].mxu0
        %2602 = vmatprep.mubr.f32.mxu0 %v2303
        %2603 = vmatmul.mubr.f32.gmra.mrb[0].mxu0 %v2302
        %v2604 = vpop.f32.mrb[0].mxu0
        %v2605 = vadd.f32 0.0, %v2604
        %v2606 = vpop.f32.mrb[0].mxu0
        %2607 = vmatprep.mubr.f32.mxu0 %v2307
        %2608 = vmatmul.mubr.f32.gmra.mrb[0].mxu0 %v2306
        %v2609 = vpop.f32.mrb[0].mxu0
        %v2610 = vadd.f32 0.0, %v2609
        %v2611 = vpop.f32.mrb[0].mxu0
        %2612 = vmatprep.mubr.f32.mxu0 %v2311
        %2613 = vmatmul.mubr.f32.gmra.mrb[0].mxu0 %v2310
        %v2614 = vpop.f32.mrb[0].mxu0
        %v2615 = vadd.f32 0.0, %v2614
        %v2616 = vpop.f32.mrb[0].mxu0
        %2617 = vmatprep.mubr.f32.mxu0 %v2315
        %2618 = vmatmul.mubr.f32.gmra.mrb[0].mxu0 %v2314
        %v2619 = vpop.f32.mrb[0].mxu0
        %v2620 = vadd.f32 0.0, %v2619
        %v2621 = vpop.f32.mrb[0].mxu0
        %2622 = vmatprep.mubr.f32.mxu0 %v2319
        %2623 = vmatmul.mubr.f32.gmra.mrb[0].mxu0 %v2318
        %v2624 = vpop.f32.mrb[0].mxu0
        %v2625 = vadd.f32 0.0, %v2624
        %v2626 = vpop.f32.mrb[0].mxu0
        %2627 = vmatprep.mubr.f32.mxu0 %v2323
        %2628 = vmatmul.mubr.f32.gmra.mrb[0].mxu0 %v2322
        %v2629 = vpop.f32.mrb[0].mxu0
        %v2630 = vadd.f32 0.0, %v2629
        %v2631 = vpop.f32.mrb[0].mxu0
        %2632 = vmatprep.mubr.f32.mxu0 %v2327
        %2633 = vmatmul.mubr.f32.gmra.mrb[0].mxu0 %v2326
        %v2634 = vpop.f32.mrb[0].mxu0
        %v2635 = vadd.f32 0.0, %v2634
        %v2636 = vpop.f32.mrb[0].mxu0
        %2637 = vmatprep.mubr.f32.mxu0 %v2331
        %2638 = vmatmul.mubr.f32.gmra.mrb[0].mxu0 %v2330
        %v2639 = vpop.f32.mrb[0].mxu0
        %v2640 = vadd.f32 0.0, %v2639
        %v2641 = vpop.f32.mrb[0].mxu0
        %2642 = vmatprep.mubr.f32.mxu0 %v2335
        %2643 = vmatmul.mubr.f32.gmra.mrb[0].mxu0 %v2334
        %v2644 = vpop.f32.mrb[0].mxu0
        %v2645 = vadd.f32 0.0, %v2644
        %v2646 = vpop.f32.mrb[0].mxu0
        %2647 = vmatprep.mubr.f32.mxu0 %v2339
        %2648 = vmatmul.mubr.f32.gmra.mrb[0].mxu0 %v2338
        %v2649 = vpop.f32.mrb[0].mxu0
        %v2650 = vadd.f32 0.0, %v2649
        %v2651 = vpop.f32.mrb[0].mxu0
        %2652 = vmatprep.mubr.f32.mxu0 %v2343
        %2653 = vmatmul.mubr.f32.gmra.mrb[0].mxu0 %v2342
        %v2654 = vpop.f32.mrb[0].mxu0
        %v2655 = vadd.f32 0.0, %v2654
        %v2656 = vpop.f32.mrb[0].mxu0
        %2657 = vmatprep.mubr.f32.mxu0 %v2347
        %2658 = vmatmul.mubr.f32.gmra.mrb[0].mxu0 %v2346
        %v2659 = vpop.f32.mrb[0].mxu0
        %v2660 = vadd.f32 0.0, %v2659
        %v2661 = vpop.f32.mrb[0].mxu0
        %2662 = vmatprep.mubr.f32.mxu0 %v2351
        %2663 = vmatmul.mubr.f32.gmra.mrb[0].mxu0 %v2350
        %v2664 = vpop.f32.mrb[0].mxu0
        %v2665 = vadd.f32 0.0, %v2664
        %v2666 = vpop.f32.mrb[0].mxu0
        %2667 = vmatprep.mubr.f32.mxu0 %v2355
        %2668 = vmatmul.mubr.f32.gmra.mrb[0].mxu0 %v2354
        %v2669 = vpop.f32.mrb[0].mxu0
        %v2670 = vadd.f32 0.0, %v2669
        %v2671 = vpop.f32.mrb[0].mxu0
        %2672 = vmatprep.mubr.f32.mxu0 %v2359
        %2673 = vmatmul.mubr.f32.gmra.mrb[0].mxu0 %v2358
        %v2674 = vpop.f32.mrb[0].mxu0
        %v2675 = vadd.f32 0.0, %v2674
        %v2676 = vpop.f32.mrb[0].mxu0
        %2677 = vmatprep.mubr.f32.mxu0 %v2363
        %2678 = vmatmul.mubr.f32.gmra.mrb[0].mxu0 %v2362
        %v2679 = vpop.f32.mrb[0].mxu0
        %v2680 = vadd.f32 0.0, %v2679
        %v2681 = vpop.f32.mrb[0].mxu0
        %2682 = vmatprep.mubr.f32.mxu0 %v2367
        %2683 = vmatmul.mubr.f32.gmra.mrb[0].mxu0 %v2366
        %v2684 = vpop.f32.mrb[0].mxu0
        %v2685 = vadd.f32 0.0, %v2684
        %v2686 = vpop.f32.mrb[0].mxu0
        %2687 = vmatprep.mubr.f32.mxu0 %v2371
        %2688 = vmatmul.mubr.f32.gmra.mrb[0].mxu0 %v2370
        %v2689 = vpop.f32.mrb[0].mxu0
        %v2690 = vadd.f32 0.0, %v2689
        %v2691 = vpop.f32.mrb[0].mxu0
        %2692 = vmatprep.mubr.f32.mxu0 %v2375
        %2693 = vmatmul.mubr.f32.gmra.mrb[0].mxu0 %v2374
        %v2694 = vpop.f32.mrb[0].mxu0
        %v2695 = vadd.f32 0.0, %v2694
        %v2696 = vpop.f32.mrb[0].mxu0
        %2697 = vmatprep.mubr.f32.mxu0 %v2379
        %2698 = vmatmul.mubr.f32.gmra.mrb[0].mxu0 %v2378
        %v2699 = vpop.f32.mrb[0].mxu0
        %v2700 = vadd.f32 0.0, %v2699
        %v2701 = vpop.f32.mrb[0].mxu0
        %2702 = vmatprep.mubr.f32.mxu0 %v2383
        %2703 = vmatmul.mubr.f32.gmra.mrb[0].mxu0 %v2382
        %v2704 = vpop.f32.mrb[0].mxu0
        %v2705 = vadd.f32 0.0, %v2704
        %v2706 = vpop.f32.mrb[0].mxu0
        %2707 = vmatprep.mubr.f32.mxu0 %v2387
        %2708 = vmatmul.mubr.f32.gmra.mrb[0].mxu0 %v2386
        %v2709 = vpop.f32.mrb[0].mxu0
        %v2710 = vadd.f32 0.0, %v2709
        %v2711 = vpop.f32.mrb[0].mxu0
        %2712 = vdwg.mxu0
        %2713 = vmatprep.subr.mxu0 0.0
        %2714 = vmatpush1.msra.mxu0 %v2424
        %2715 = vmatprep.subr.mxu0 0.0
        %2716 = vmatpush1.msra.mxu0 %v2425
        %2717 = vmatprep.subr.mxu0 0.0
        %2718 = vmatpush1.msra.mxu0 %v2426
        %2719 = vmatprep.subr.mxu0 0.0
        %2720 = vmatpush1.msra.mxu0 %v2427
        %2721 = vmatprep.subr.mxu0 0.0
        %2722 = vmatpush1.msra.mxu0 %v2428
        %2723 = vmatprep.subr.mxu0 0.0
        %2724 = vmatpush1.msra.mxu0 %v2429
        %2725 = vmatprep.subr.mxu0 0.0
        %2726 = vmatpush1.msra.mxu0 %v2430
        %2727 = vmatprep.subr.mxu0 0.0
        %2728 = vmatpush1.msra.mxu0 %v2431
        %2729 = vmatprep.subr.mxu0 0.0
        %2730 = vmatpush1.msra.mxu0 %v2432
        %2731 = vmatprep.subr.mxu0 0.0
        %2732 = vmatpush1.msra.mxu0 %v2433
        %2733 = vmatprep.subr.mxu0 0.0
        %2734 = vmatpush1.msra.mxu0 %v2434
        %2735 = vmatprep.subr.mxu0 0.0
        %2736 = vmatpush1.msra.mxu0 %v2435
        %2737 = vmatprep.subr.mxu0 0.0
        %2738 = vmatpush1.msra.mxu0 %v2436
        %2739 = vmatprep.subr.mxu0 0.0
        %2740 = vmatpush1.msra.mxu0 %v2437
        %2741 = vmatprep.subr.mxu0 0.0
        %2742 = vmatpush1.msra.mxu0 %v2438
        %2743 = vmatprep.subr.mxu0 0.0
        %2744 = vmatpush1.msra.mxu0 %v2439
        %2745 = vmatprep.subr.mxu0 0.0
        %2746 = vmatpush1.msra.mxu0 %v2440
        %2747 = vmatprep.subr.mxu0 0.0
        %2748 = vmatpush1.msra.mxu0 %v2441
        %2749 = vmatprep.subr.mxu0 0.0
        %2750 = vmatpush1.msra.mxu0 %v2442
        %2751 = vmatprep.subr.mxu0 0.0
        %2752 = vmatpush1.msra.mxu0 %v2443
        %2753 = vmatprep.subr.mxu0 0.0
        %2754 = vmatpush1.msra.mxu0 %v2444
        %2755 = vmatprep.subr.mxu0 0.0
        %2756 = vmatpush1.msra.mxu0 %v2445
        %2757 = vmatprep.subr.mxu0 0.0
        %2758 = vmatpush1.msra.mxu0 %v2446
        %2759 = vmatprep.subr.mxu0 0.0
        %2760 = vmatpush1.msra.mxu0 %v2447
        %2761 = vmatprep.subr.mxu0 0.0
        %2762 = vmatpush1.msra.mxu0 %v2448
        %2763 = vmatprep.subr.mxu0 0.0
        %2764 = vmatpush1.msra.mxu0 %v2449
        %2765 = vmatprep.subr.mxu0 0.0
        %2766 = vmatpush1.msra.mxu0 %v2450
        %2767 = vmatprep.subr.mxu0 0.0
        %2768 = vmatpush1.msra.mxu0 %v2451
        %2769 = vmatprep.subr.mxu0 0.0
        %2770 = vmatpush1.msra.mxu0 %v2452
        %2771 = vmatprep.subr.mxu0 0.0
        %2772 = vmatpush1.msra.mxu0 %v2453
        %2773 = vmatprep.subr.mxu0 0.0
        %2774 = vmatpush1.msra.mxu0 %v2454
        %2775 = vmatprep.subr.mxu0 0.0
        %2776 = vmatpush1.msra.mxu0 %v2455
        %2777 = vmatprep.mubr.f32.mxu0 %v2265
        %2778 = vmatmul.mubr.f32.gmra.mrb[0].mxu0 %v2264
        %v2779 = vpop.f32.mrb[0].mxu0
        %v2780 = vadd.f32 %v2555, %v2779
        %v2781 = vpop.f32.mrb[0].mxu0
        %2782 = vmatprep.mubr.f32.mxu0 %v2269
        %2783 = vmatmul.mubr.f32.gmra.mrb[0].mxu0 %v2268
        %v2784 = vpop.f32.mrb[0].mxu0
        %v2785 = vadd.f32 %v2560, %v2784
        %v2786 = vpop.f32.mrb[0].mxu0
        %2787 = vmatprep.mubr.f32.mxu0 %v2273
        %2788 = vmatmul.mubr.f32.gmra.mrb[0].mxu0 %v2272
        %v2789 = vpop.f32.mrb[0].mxu0
        %v2790 = vadd.f32 %v2565, %v2789
        %v2791 = vpop.f32.mrb[0].mxu0
        %2792 = vmatprep.mubr.f32.mxu0 %v2277
        %2793 = vmatmul.mubr.f32.gmra.mrb[0].mxu0 %v2276
        %v2794 = vpop.f32.mrb[0].mxu0
        %v2795 = vadd.f32 %v2570, %v2794
        %v2796 = vpop.f32.mrb[0].mxu0
        %2797 = vmatprep.mubr.f32.mxu0 %v2281
        %2798 = vmatmul.mubr.f32.gmra.mrb[0].mxu0 %v2280
        %v2799 = vpop.f32.mrb[0].mxu0
        %v2800 = vadd.f32 %v2575, %v2799
        %v2801 = vpop.f32.mrb[0].mxu0
        %2802 = vmatprep.mubr.f32.mxu0 %v2285
        %2803 = vmatmul.mubr.f32.gmra.mrb[0].mxu0 %v2284
        %v2804 = vpop.f32.mrb[0].mxu0
        %v2805 = vadd.f32 %v2580, %v2804
        %v2806 = vpop.f32.mrb[0].mxu0
        %2807 = vmatprep.mubr.f32.mxu0 %v2289
        %2808 = vmatmul.mubr.f32.gmra.mrb[0].mxu0 %v2288
        %v2809 = vpop.f32.mrb[0].mxu0
        %v2810 = vadd.f32 %v2585, %v2809
        %v2811 = vpop.f32.mrb[0].mxu0
        %2812 = vmatprep.mubr.f32.mxu0 %v2293
        %2813 = vmatmul.mubr.f32.gmra.mrb[0].mxu0 %v2292
        %v2814 = vpop.f32.mrb[0].mxu0
        %v2815 = vadd.f32 %v2590, %v2814
        %v2816 = vpop.f32.mrb[0].mxu0
        %2817 = vmatprep.mubr.f32.mxu0 %v2297
        %2818 = vmatmul.mubr.f32.gmra.mrb[0].mxu0 %v2296
        %v2819 = vpop.f32.mrb[0].mxu0
        %v2820 = vadd.f32 %v2595, %v2819
        %v2821 = vpop.f32.mrb[0].mxu0
        %2822 = vmatprep.mubr.f32.mxu0 %v2301
        %2823 = vmatmul.mubr.f32.gmra.mrb[0].mxu0 %v2300
        %v2824 = vpop.f32.mrb[0].mxu0
        %v2825 = vadd.f32 %v2600, %v2824
        %v2826 = vpop.f32.mrb[0].mxu0
        %2827 = vmatprep.mubr.f32.mxu0 %v2305
        %2828 = vmatmul.mubr.f32.gmra.mrb[0].mxu0 %v2304
        %v2829 = vpop.f32.mrb[0].mxu0
        %v2830 = vadd.f32 %v2605, %v2829
        %v2831 = vpop.f32.mrb[0].mxu0
        %2832 = vmatprep.mubr.f32.mxu0 %v2309
        %2833 = vmatmul.mubr.f32.gmra.mrb[0].mxu0 %v2308
        %v2834 = vpop.f32.mrb[0].mxu0
        %v2835 = vadd.f32 %v2610, %v2834
        %v2836 = vpop.f32.mrb[0].mxu0
        %2837 = vmatprep.mubr.f32.mxu0 %v2313
        %2838 = vmatmul.mubr.f32.gmra.mrb[0].mxu0 %v2312
        %v2839 = vpop.f32.mrb[0].mxu0
        %v2840 = vadd.f32 %v2615, %v2839
        %v2841 = vpop.f32.mrb[0].mxu0
        %2842 = vmatprep.mubr.f32.mxu0 %v2317
        %2843 = vmatmul.mubr.f32.gmra.mrb[0].mxu0 %v2316
        %v2844 = vpop.f32.mrb[0].mxu0
        %v2845 = vadd.f32 %v2620, %v2844
        %v2846 = vpop.f32.mrb[0].mxu0
        %2847 = vmatprep.mubr.f32.mxu0 %v2321
        %2848 = vmatmul.mubr.f32.gmra.mrb[0].mxu0 %v2320
        %v2849 = vpop.f32.mrb[0].mxu0
        %v2850 = vadd.f32 %v2625, %v2849
        %v2851 = vpop.f32.mrb[0].mxu0
        %2852 = vmatprep.mubr.f32.mxu0 %v2325
        %2853 = vmatmul.mubr.f32.gmra.mrb[0].mxu0 %v2324
        %v2854 = vpop.f32.mrb[0].mxu0
        %v2855 = vadd.f32 %v2630, %v2854
        %v2856 = vpop.f32.mrb[0].mxu0
        %2857 = vmatprep.mubr.f32.mxu0 %v2329
        %2858 = vmatmul.mubr.f32.gmra.mrb[0].mxu0 %v2328
        %v2859 = vpop.f32.mrb[0].mxu0
        %v2860 = vadd.f32 %v2635, %v2859
        %v2861 = vpop.f32.mrb[0].mxu0
        %2862 = vmatprep.mubr.f32.mxu0 %v2333
        %2863 = vmatmul.mubr.f32.gmra.mrb[0].mxu0 %v2332
        %v2864 = vpop.f32.mrb[0].mxu0
        %v2865 = vadd.f32 %v2640, %v2864
        %v2866 = vpop.f32.mrb[0].mxu0
        %2867 = vmatprep.mubr.f32.mxu0 %v2337
        %2868 = vmatmul.mubr.f32.gmra.mrb[0].mxu0 %v2336
        %v2869 = vpop.f32.mrb[0].mxu0
        %v2870 = vadd.f32 %v2645, %v2869
        %v2871 = vpop.f32.mrb[0].mxu0
        %2872 = vmatprep.mubr.f32.mxu0 %v2341
        %2873 = vmatmul.mubr.f32.gmra.mrb[0].mxu0 %v2340
        %v2874 = vpop.f32.mrb[0].mxu0
        %v2875 = vadd.f32 %v2650, %v2874
        %v2876 = vpop.f32.mrb[0].mxu0
        %2877 = vmatprep.mubr.f32.mxu0 %v2345
        %2878 = vmatmul.mubr.f32.gmra.mrb[0].mxu0 %v2344
        %v2879 = vpop.f32.mrb[0].mxu0
        %v2880 = vadd.f32 %v2655, %v2879
        %v2881 = vpop.f32.mrb[0].mxu0
        %2882 = vmatprep.mubr.f32.mxu0 %v2349
        %2883 = vmatmul.mubr.f32.gmra.mrb[0].mxu0 %v2348
        %v2884 = vpop.f32.mrb[0].mxu0
        %v2885 = vadd.f32 %v2660, %v2884
        %v2886 = vpop.f32.mrb[0].mxu0
        %2887 = vmatprep.mubr.f32.mxu0 %v2353
        %2888 = vmatmul.mubr.f32.gmra.mrb[0].mxu0 %v2352
        %v2889 = vpop.f32.mrb[0].mxu0
        %v2890 = vadd.f32 %v2665, %v2889
        %v2891 = vpop.f32.mrb[0].mxu0
        %2892 = vmatprep.mubr.f32.mxu0 %v2357
        %2893 = vmatmul.mubr.f32.gmra.mrb[0].mxu0 %v2356
        %v2894 = vpop.f32.mrb[0].mxu0
        %v2895 = vadd.f32 %v2670, %v2894
        %v2896 = vpop.f32.mrb[0].mxu0
        %2897 = vmatprep.mubr.f32.mxu0 %v2361
        %2898 = vmatmul.mubr.f32.gmra.mrb[0].mxu0 %v2360
        %v2899 = vpop.f32.mrb[0].mxu0
        %v2900 = vadd.f32 %v2675, %v2899
        %v2901 = vpop.f32.mrb[0].mxu0
        %2902 = vmatprep.mubr.f32.mxu0 %v2365
        %2903 = vmatmul.mubr.f32.gmra.mrb[0].mxu0 %v2364
        %v2904 = vpop.f32.mrb[0].mxu0
        %v2905 = vadd.f32 %v2680, %v2904
        %v2906 = vpop.f32.mrb[0].mxu0
        %2907 = vmatprep.mubr.f32.mxu0 %v2369
        %2908 = vmatmul.mubr.f32.gmra.mrb[0].mxu0 %v2368
        %v2909 = vpop.f32.mrb[0].mxu0
        %v2910 = vadd.f32 %v2685, %v2909
        %v2911 = vpop.f32.mrb[0].mxu0
        %2912 = vmatprep.mubr.f32.mxu0 %v2373
        %2913 = vmatmul.mubr.f32.gmra.mrb[0].mxu0 %v2372
        %v2914 = vpop.f32.mrb[0].mxu0
        %v2915 = vadd.f32 %v2690, %v2914
        %v2916 = vpop.f32.mrb[0].mxu0
        %2917 = vmatprep.mubr.f32.mxu0 %v2377
        %2918 = vmatmul.mubr.f32.gmra.mrb[0].mxu0 %v2376
        %v2919 = vpop.f32.mrb[0].mxu0
        %v2920 = vadd.f32 %v2695, %v2919
        %v2921 = vpop.f32.mrb[0].mxu0
        %2922 = vmatprep.mubr.f32.mxu0 %v2381
        %2923 = vmatmul.mubr.f32.gmra.mrb[0].mxu0 %v2380
        %v2924 = vpop.f32.mrb[0].mxu0
        %v2925 = vadd.f32 %v2700, %v2924
        %v2926 = vpop.f32.mrb[0].mxu0
        %2927 = vmatprep.mubr.f32.mxu0 %v2385
        %2928 = vmatmul.mubr.f32.gmra.mrb[0].mxu0 %v2384
        %v2929 = vpop.f32.mrb[0].mxu0
        %v2930 = vadd.f32 %v2705, %v2929
        %v2931 = vpop.f32.mrb[0].mxu0
        %2932 = vmatprep.mubr.f32.mxu0 %v2389
        %2933 = vmatmul.mubr.f32.gmra.mrb[0].mxu0 %v2388
        %v2934 = vpop.f32.mrb[0].mxu0
        %v2935 = vadd.f32 %v2710, %v2934
        %v2936 = vpop.f32.mrb[0].mxu0
        %2937 = vdwg.mxu0
        %v2938 = vadd.f32 %v2456, %v2780
        %v2939 = vadd.f32 %v2457, %v2785
        %v2940 = vadd.f32 %v2458, %v2790
        %v2941 = vadd.f32 %v2459, %v2795
        %v2942 = vadd.f32 %v2460, %v2800
        %v2943 = vadd.f32 %v2461, %v2805
        %v2944 = vadd.f32 %v2462, %v2810
        %v2945 = vadd.f32 %v2463, %v2815
        %v2946 = vadd.f32 %v2464, %v2820
        %v2947 = vadd.f32 %v2465, %v2825
        %v2948 = vadd.f32 %v2466, %v2830
        %v2949 = vadd.f32 %v2467, %v2835
        %v2950 = vadd.f32 %v2468, %v2840
        %v2951 = vadd.f32 %v2469, %v2845
        %v2952 = vadd.f32 %v2470, %v2850
        %v2953 = vadd.f32 %v2471, %v2855
        %v2954 = vadd.f32 %v2472, %v2860
        %v2955 = vadd.f32 %v2473, %v2865
        %v2956 = vadd.f32 %v2474, %v2870
        %v2957 = vadd.f32 %v2475, %v2875
        %v2958 = vadd.f32 %v2476, %v2880
        %v2959 = vadd.f32 %v2477, %v2885
        %v2960 = vadd.f32 %v2478, %v2890
        %v2961 = vadd.f32 %v2479, %v2895
        %v2962 = vadd.f32 %v2480, %v2900
        %v2963 = vadd.f32 %v2481, %v2905
        %v2964 = vadd.f32 %v2482, %v2910
        %v2965 = vadd.f32 %v2483, %v2915
        %v2966 = vadd.f32 %v2484, %v2920
        %v2967 = vadd.f32 %v2485, %v2925
        %v2968 = vadd.f32 %v2486, %v2930
        %v2969 = vadd.f32 %v2487, %v2935
        %vm2970 = vcmask 64512
        %2971 = vst.msk [vmem:[#allocation3] sm:$0xff] %vm2970, %v2938
        %2972 = vst.msk [vmem:[#allocation3 + $0x8] sm:$0xff] %vm2970, %v2939
        %2973 = vst.msk [vmem:[#allocation3 + $0x10] sm:$0xff] %vm2970, %v2940
        %2974 = vst.msk [vmem:[#allocation3 + $0x18] sm:$0xff] %vm2970, %v2941
        %2975 = vst.msk [vmem:[#allocation3 + $0x20] sm:$0xff] %vm2970, %v2942
        %2976 = vst.msk [vmem:[#allocation3 + $0x28] sm:$0xff] %vm2970, %v2943
        %2977 = vst.msk [vmem:[#allocation3 + $0x30] sm:$0xff] %vm2970, %v2944
        %2978 = vst.msk [vmem:[#allocation3 + $0x38] sm:$0xff] %vm2970, %v2945
        %2979 = vst.msk [vmem:[#allocation3 + $0x40] sm:$0xff] %vm2970, %v2946
        %2980 = vst.msk [vmem:[#allocation3 + $0x48] sm:$0xff] %vm2970, %v2947
        %2981 = vst.msk [vmem:[#allocation3 + $0x50] sm:$0xff] %vm2970, %v2948
        %2982 = vst.msk [vmem:[#allocation3 + $0x58] sm:$0xff] %vm2970, %v2949
        %2983 = vst.msk [vmem:[#allocation3 + $0x60] sm:$0xff] %vm2970, %v2950
        %2984 = vst.msk [vmem:[#allocation3 + $0x68] sm:$0xff] %vm2970, %v2951
        %2985 = vst.msk [vmem:[#allocation3 + $0x70] sm:$0xff] %vm2970, %v2952
        %2986 = vst.msk [vmem:[#allocation3 + $0x78] sm:$0xff] %vm2970, %v2953
        %2987 = vst.msk [vmem:[#allocation3 + $0x80] sm:$0xff] %vm2970, %v2954
        %2988 = vst.msk [vmem:[#allocation3 + $0x88] sm:$0xff] %vm2970, %v2955
        %2989 = vst.msk [vmem:[#allocation3 + $0x90] sm:$0xff] %vm2970, %v2956
        %2990 = vst.msk [vmem:[#allocation3 + $0x98] sm:$0xff] %vm2970, %v2957
        %2991 = vst.msk [vmem:[#allocation3 + $0xa0] sm:$0xff] %vm2970, %v2958
        %2992 = vst.msk [vmem:[#allocation3 + $0xa8] sm:$0xff] %vm2970, %v2959
        %2993 = vst.msk [vmem:[#allocation3 + $0xb0] sm:$0xff] %vm2970, %v2960
        %2994 = vst.msk [vmem:[#allocation3 + $0xb8] sm:$0xff] %vm2970, %v2961
        %2995 = vst.msk [vmem:[#allocation3 + $0xc0] sm:$0xff] %vm2970, %v2962
        %2996 = vst.msk [vmem:[#allocation3 + $0xc8] sm:$0xff] %vm2970, %v2963
        %2997 = vst.msk [vmem:[#allocation3 + $0xd0] sm:$0xff] %vm2970, %v2964
        %2998 = vst.msk [vmem:[#allocation3 + $0xd8] sm:$0xff] %vm2970, %v2965
        %2999 = vst.msk [vmem:[#allocation3 + $0xe0] sm:$0xff] %vm2970, %v2966
        %3000 = vst.msk [vmem:[#allocation3 + $0xe8] sm:$0xff] %vm2970, %v2967
        %3001 = vst.msk [vmem:[#allocation3 + $0xf0] sm:$0xff] %vm2970, %v2968
        %3002 = vst.msk [vmem:[#allocation3 + $0xf8] sm:$0xff] %vm2970, %v2969
        %p3003 = scmp.eq.s32.totalorder %s22, 1
        // Predicated region
        $region41: #{tpu_custom_call.1} parent=27 // pred_check
          %p3004 = pneg %p3003
        $region42: #{tpu_custom_call.1} parent=27 // pred_check_branch
          %3006 = sbr.rel (%p3004) target = $region44
        $region43: #{tpu_custom_call.1} parent=27 // pred_region
          %s3007 = smul.u32 %s21, 256
          %s3008 = scalar_lea.vmem [#allocation2], %s3007
          %v3009 = vld [vmem:[%s3008] sm:$0xff]
          %v3010 = vld [vmem:[%s3008 + $0x8] sm:$0xff]
          %v3011 = vld [vmem:[%s3008 + $0x10] sm:$0xff]
          %v3012 = vld [vmem:[%s3008 + $0x18] sm:$0xff]
          %v3013 = vld [vmem:[%s3008 + $0x20] sm:$0xff]
          %v3014 = vld [vmem:[%s3008 + $0x28] sm:$0xff]
          %v3015 = vld [vmem:[%s3008 + $0x30] sm:$0xff]
          %v3016 = vld [vmem:[%s3008 + $0x38] sm:$0xff]
          %v3017 = vld [vmem:[%s3008 + $0x40] sm:$0xff]
          %v3018 = vld [vmem:[%s3008 + $0x48] sm:$0xff]
          %v3019 = vld [vmem:[%s3008 + $0x50] sm:$0xff]
          %v3020 = vld [vmem:[%s3008 + $0x58] sm:$0xff]
          %v3021 = vld [vmem:[%s3008 + $0x60] sm:$0xff]
          %v3022 = vld [vmem:[%s3008 + $0x68] sm:$0xff]
          %v3023 = vld [vmem:[%s3008 + $0x70] sm:$0xff]
          %v3024 = vld [vmem:[%s3008 + $0x78] sm:$0xff]
          %v3025 = vld [vmem:[%s3008 + $0x80] sm:$0xff]
          %v3026 = vld [vmem:[%s3008 + $0x88] sm:$0xff]
          %v3027 = vld [vmem:[%s3008 + $0x90] sm:$0xff]
          %v3028 = vld [vmem:[%s3008 + $0x98] sm:$0xff]
          %v3029 = vld [vmem:[%s3008 + $0xa0] sm:$0xff]
          %v3030 = vld [vmem:[%s3008 + $0xa8] sm:$0xff]
          %v3031 = vld [vmem:[%s3008 + $0xb0] sm:$0xff]
          %v3032 = vld [vmem:[%s3008 + $0xb8] sm:$0xff]
          %v3033 = vld [vmem:[%s3008 + $0xc0] sm:$0xff]
          %v3034 = vld [vmem:[%s3008 + $0xc8] sm:$0xff]
          %v3035 = vld [vmem:[%s3008 + $0xd0] sm:$0xff]
          %v3036 = vld [vmem:[%s3008 + $0xd8] sm:$0xff]
          %v3037 = vld [vmem:[%s3008 + $0xe0] sm:$0xff]
          %v3038 = vld [vmem:[%s3008 + $0xe8] sm:$0xff]
          %v3039 = vld [vmem:[%s3008 + $0xf0] sm:$0xff]
          %v3040 = vld [vmem:[%s3008 + $0xf8] sm:$0xff]
          %v3041 = vld [vmem:[#allocation4] sm:$0xff]
          %v3042 = vld [vmem:[#allocation3] sm:$0xff]
          %v3043 = vld [vmem:[#allocation3 + $0x8] sm:$0xff]
          %v3044 = vld [vmem:[#allocation3 + $0x10] sm:$0xff]
          %v3045 = vld [vmem:[#allocation3 + $0x18] sm:$0xff]
          %v3046 = vld [vmem:[#allocation3 + $0x20] sm:$0xff]
          %v3047 = vld [vmem:[#allocation3 + $0x28] sm:$0xff]
          %v3048 = vld [vmem:[#allocation3 + $0x30] sm:$0xff]
          %v3049 = vld [vmem:[#allocation3 + $0x38] sm:$0xff]
          %v3050 = vld [vmem:[#allocation3 + $0x40] sm:$0xff]
          %v3051 = vld [vmem:[#allocation3 + $0x48] sm:$0xff]
          %v3052 = vld [vmem:[#allocation3 + $0x50] sm:$0xff]
          %v3053 = vld [vmem:[#allocation3 + $0x58] sm:$0xff]
          %v3054 = vld [vmem:[#allocation3 + $0x60] sm:$0xff]
          %v3055 = vld [vmem:[#allocation3 + $0x68] sm:$0xff]
          %v3056 = vld [vmem:[#allocation3 + $0x70] sm:$0xff]
          %v3057 = vld [vmem:[#allocation3 + $0x78] sm:$0xff]
          %v3058 = vld [vmem:[#allocation3 + $0x80] sm:$0xff]
          %v3059 = vld [vmem:[#allocation3 + $0x88] sm:$0xff]
          %v3060 = vld [vmem:[#allocation3 + $0x90] sm:$0xff]
          %v3061 = vld [vmem:[#allocation3 + $0x98] sm:$0xff]
          %v3062 = vld [vmem:[#allocation3 + $0xa0] sm:$0xff]
          %v3063 = vld [vmem:[#allocation3 + $0xa8] sm:$0xff]
          %v3064 = vld [vmem:[#allocation3 + $0xb0] sm:$0xff]
          %v3065 = vld [vmem:[#allocation3 + $0xb8] sm:$0xff]
          %v3066 = vld [vmem:[#allocation3 + $0xc0] sm:$0xff]
          %v3067 = vld [vmem:[#allocation3 + $0xc8] sm:$0xff]
          %v3068 = vld [vmem:[#allocation3 + $0xd0] sm:$0xff]
          %v3069 = vld [vmem:[#allocation3 + $0xd8] sm:$0xff]
          %v3070 = vld [vmem:[#allocation3 + $0xe0] sm:$0xff]
          %v3071 = vld [vmem:[#allocation3 + $0xe8] sm:$0xff]
          %v3072 = vld [vmem:[#allocation3 + $0xf0] sm:$0xff]
          %v3073 = vld [vmem:[#allocation3 + $0xf8] sm:$0xff]
          %3074 = vxpose.xlu0.b32.start [1/16] %v3009, 128
          %3075 = vxpose.xlu0.b32.cont [2/16] %v3010, 128
          %3076 = vxpose.xlu0.b32.cont [3/16] %v3011, 128
          %3077 = vxpose.xlu0.b32.cont [4/16] %v3012, 128
          %3078 = vxpose.xlu0.b32.cont [5/16] %v3013, 128
          %3079 = vxpose.xlu0.b32.cont [6/16] %v3014, 128
          %3080 = vxpose.xlu0.b32.cont [7/16] %v3015, 128
          %3081 = vxpose.xlu0.b32.cont [8/16] %v3016, 128
          %3082 = vxpose.xlu0.b32.cont [9/16] %v3017, 128
          %3083 = vxpose.xlu0.b32.cont [10/16] %v3018, 128
          %3084 = vxpose.xlu0.b32.cont [11/16] %v3019, 128
          %3085 = vxpose.xlu0.b32.cont [12/16] %v3020, 128
          %3086 = vxpose.xlu0.b32.cont [13/16] %v3021, 128
          %3087 = vxpose.xlu0.b32.cont [14/16] %v3022, 128
          %3088 = vxpose.xlu0.b32.cont [15/16] %v3023, 128
          %3089 = vxpose.xlu0.b32.end [16/16] %v3024, 128
          %v3090 = vpop.trf.xlu0
          %v3091 = vpop.trf.xlu0
          %v3092 = vpop.trf.xlu0
          %v3093 = vpop.trf.xlu0
          %v3094 = vpop.trf.xlu0
          %v3095 = vpop.trf.xlu0
          %v3096 = vpop.trf.xlu0
          %v3097 = vpop.trf.xlu0
          %v3098 = vpop.trf.xlu0
          %v3099 = vpop.trf.xlu0
          %v3100 = vpop.trf.xlu0
          %v3101 = vpop.trf.xlu0
          %v3102 = vpop.trf.xlu0
          %v3103 = vpop.trf.xlu0
          %v3104 = vpop.trf.xlu0
          %v3105 = vpop.trf.xlu0
          %3106 = vxpose.xlu0.b32.start [1/16] %v3025, 128
          %3107 = vxpose.xlu0.b32.cont [2/16] %v3026, 128
          %3108 = vxpose.xlu0.b32.cont [3/16] %v3027, 128
          %3109 = vxpose.xlu0.b32.cont [4/16] %v3028, 128
          %3110 = vxpose.xlu0.b32.cont [5/16] %v3029, 128
          %3111 = vxpose.xlu0.b32.cont [6/16] %v3030, 128
          %3112 = vxpose.xlu0.b32.cont [7/16] %v3031, 128
          %3113 = vxpose.xlu0.b32.cont [8/16] %v3032, 128
          %3114 = vxpose.xlu0.b32.cont [9/16] %v3033, 128
          %3115 = vxpose.xlu0.b32.cont [10/16] %v3034, 128
          %3116 = vxpose.xlu0.b32.cont [11/16] %v3035, 128
          %3117 = vxpose.xlu0.b32.cont [12/16] %v3036, 128
          %3118 = vxpose.xlu0.b32.cont [13/16] %v3037, 128
          %3119 = vxpose.xlu0.b32.cont [14/16] %v3038, 128
          %3120 = vxpose.xlu0.b32.cont [15/16] %v3039, 128
          %3121 = vxpose.xlu0.b32.end [16/16] %v3040, 128
          %v3122 = vpop.trf.xlu0
          %v3123 = vpop.trf.xlu0
          %v3124 = vpop.trf.xlu0
          %v3125 = vpop.trf.xlu0
          %v3126 = vpop.trf.xlu0
          %v3127 = vpop.trf.xlu0
          %v3128 = vpop.trf.xlu0
          %v3129 = vpop.trf.xlu0
          %v3130 = vpop.trf.xlu0
          %v3131 = vpop.trf.xlu0
          %v3132 = vpop.trf.xlu0
          %v3133 = vpop.trf.xlu0
          %v3134 = vpop.trf.xlu0
          %v3135 = vpop.trf.xlu0
          %v3136 = vpop.trf.xlu0
          %v3137 = vpop.trf.xlu0
          %3138 = vmatprep.subr.mxu0 0.0
          %3139 = vmatpush1.msra.mxu0 %v3042
          %3140 = vmatprep.subr.mxu0 0.0
          %3141 = vmatpush1.msra.mxu0 %v3043
          %3142 = vmatprep.subr.mxu0 0.0
          %3143 = vmatpush1.msra.mxu0 %v3044
          %3144 = vmatprep.subr.mxu0 0.0
          %3145 = vmatpush1.msra.mxu0 %v3045
          %3146 = vmatprep.subr.mxu0 0.0
          %3147 = vmatpush1.msra.mxu0 %v3046
          %3148 = vmatprep.subr.mxu0 0.0
          %3149 = vmatpush1.msra.mxu0 %v3047
          %3150 = vmatprep.subr.mxu0 0.0
          %3151 = vmatpush1.msra.mxu0 %v3048
          %3152 = vmatprep.subr.mxu0 0.0
          %3153 = vmatpush1.msra.mxu0 %v3049
          %3154 = vmatprep.subr.mxu0 0.0
          %3155 = vmatpush1.msra.mxu0 %v3050
          %3156 = vmatprep.subr.mxu0 0.0
          %3157 = vmatpush1.msra.mxu0 %v3051
          %3158 = vmatprep.subr.mxu0 0.0
          %3159 = vmatpush1.msra.mxu0 %v3052
          %3160 = vmatprep.subr.mxu0 0.0
          %3161 = vmatpush1.msra.mxu0 %v3053
          %3162 = vmatprep.subr.mxu0 0.0
          %3163 = vmatpush1.msra.mxu0 %v3054
          %3164 = vmatprep.subr.mxu0 0.0
          %3165 = vmatpush1.msra.mxu0 %v3055
          %3166 = vmatprep.subr.mxu0 0.0
          %3167 = vmatpush1.msra.mxu0 %v3056
          %3168 = vmatprep.subr.mxu0 0.0
          %3169 = vmatpush1.msra.mxu0 %v3057
          %3170 = vmatprep.subr.mxu0 0.0
          %3171 = vmatpush1.msra.mxu0 %v3058
          %3172 = vmatprep.subr.mxu0 0.0
          %3173 = vmatpush1.msra.mxu0 %v3059
          %3174 = vmatprep.subr.mxu0 0.0
          %3175 = vmatpush1.msra.mxu0 %v3060
          %3176 = vmatprep.subr.mxu0 0.0
          %3177 = vmatpush1.msra.mxu0 %v3061
          %3178 = vmatprep.subr.mxu0 0.0
          %3179 = vmatpush1.msra.mxu0 %v3062
          %3180 = vmatprep.subr.mxu0 0.0
          %3181 = vmatpush1.msra.mxu0 %v3063
          %3182 = vmatprep.subr.mxu0 0.0
          %3183 = vmatpush1.msra.mxu0 %v3064
          %3184 = vmatprep.subr.mxu0 0.0
          %3185 = vmatpush1.msra.mxu0 %v3065
          %3186 = vmatprep.subr.mxu0 0.0
          %3187 = vmatpush1.msra.mxu0 %v3066
          %3188 = vmatprep.subr.mxu0 0.0
          %3189 = vmatpush1.msra.mxu0 %v3067
          %3190 = vmatprep.subr.mxu0 0.0
          %3191 = vmatpush1.msra.mxu0 %v3068
          %3192 = vmatprep.subr.mxu0 0.0
          %3193 = vmatpush1.msra.mxu0 %v3069
          %3194 = vmatprep.subr.mxu0 0.0
          %3195 = vmatpush1.msra.mxu0 %v3070
          %3196 = vmatprep.subr.mxu0 0.0
          %3197 = vmatpush1.msra.mxu0 %v3071
          %3198 = vmatprep.subr.mxu0 0.0
          %3199 = vmatpush1.msra.mxu0 %v3072
          %3200 = vmatprep.subr.mxu0 0.0
          %3201 = vmatpush1.msra.mxu0 %v3073
          %3202 = vmatprep.mubr.f32.mxu0 %v3122
          %3203 = vmatmul.mubr.f32.gmra.mrb[0].mxu0 %v3090
          %v3204 = vpop.f32.mrb[0].mxu0
          %v3205 = vadd.f32 0.0, %v3204
          %v3206 = vpop.f32.mrb[0].mxu0
          %3207 = vdwg.mxu0
          %v3208 = vadd.f32 %v3041, %v3205
          %3209 = vst.msk [vmem:[#allocation4] sm:$0xff] %vm2970, %v3208
        $region44: #{tpu_custom_call.1} parent=27 // pred_fallthru
          _
        %p3210 = scmp.eq.s32.totalorder %s21, 3
        %p3211 = pnand %p3210, %p3003
        %p3212 = pneg %p3211
        // Predicated region
        $region45: #{tpu_custom_call.1} parent=27 // pred_check
          _
        $region46: #{tpu_custom_call.1} parent=27 // pred_check_branch
          %3214 = sbr.rel (%p3211) target = $region48
        $region47: #{tpu_custom_call.1} parent=27 // pred_region
          %v3215 = vld [vmem:[#allocation4] sm:$0xff]
          %v3216 = vld [vmem:[#allocation2] sm:$0xff]
          %v3217 = vld [vmem:[#allocation2 + $0x8] sm:$0xff]
          %v3218 = vld [vmem:[#allocation2 + $0x10] sm:$0xff]
          %v3219 = vld [vmem:[#allocation2 + $0x18] sm:$0xff]
          %v3220 = vld [vmem:[#allocation2 + $0x20] sm:$0xff]
          %v3221 = vld [vmem:[#allocation2 + $0x28] sm:$0xff]
          %v3222 = vld [vmem:[#allocation2 + $0x30] sm:$0xff]
          %v3223 = vld [vmem:[#allocation2 + $0x38] sm:$0xff]
          %v3224 = vld [vmem:[#allocation2 + $0x40] sm:$0xff]
          %v3225 = vld [vmem:[#allocation2 + $0x48] sm:$0xff]
          %v3226 = vld [vmem:[#allocation2 + $0x50] sm:$0xff]
          %v3227 = vld [vmem:[#allocation2 + $0x58] sm:$0xff]
          %v3228 = vld [vmem:[#allocation2 + $0x60] sm:$0xff]
          %v3229 = vld [vmem:[#allocation2 + $0x68] sm:$0xff]
          %v3230 = vld [vmem:[#allocation2 + $0x70] sm:$0xff]
          %v3231 = vld [vmem:[#allocation2 + $0x78] sm:$0xff]
          %v3232 = vld [vmem:[#allocation2 + $0x80] sm:$0xff]
          %v3233 = vld [vmem:[#allocation2 + $0x88] sm:$0xff]
          %v3234 = vld [vmem:[#allocation2 + $0x90] sm:$0xff]
          %v3235 = vld [vmem:[#allocation2 + $0x98] sm:$0xff]
          %v3236 = vld [vmem:[#allocation2 + $0xa0] sm:$0xff]
          %v3237 = vld [vmem:[#allocation2 + $0xa8] sm:$0xff]
          %v3238 = vld [vmem:[#allocation2 + $0xb0] sm:$0xff]
          %v3239 = vld [vmem:[#allocation2 + $0xb8] sm:$0xff]
          %v3240 = vld [vmem:[#allocation2 + $0xc0] sm:$0xff]
          %v3241 = vld [vmem:[#allocation2 + $0xc8] sm:$0xff]
          %v3242 = vld [vmem:[#allocation2 + $0xd0] sm:$0xff]
          %v3243 = vld [vmem:[#allocation2 + $0xd8] sm:$0xff]
          %v3244 = vld [vmem:[#allocation2 + $0xe0] sm:$0xff]
          %v3245 = vld [vmem:[#allocation2 + $0xe8] sm:$0xff]
          %v3246 = vld [vmem:[#allocation2 + $0xf0] sm:$0xff]
          %v3247 = vld [vmem:[#allocation2 + $0xf8] sm:$0xff]
          %v3248 = vld [vmem:[#allocation2 + $0x100] sm:$0xff]
          %v3249 = vld [vmem:[#allocation2 + $0x108] sm:$0xff]
          %v3250 = vld [vmem:[#allocation2 + $0x110] sm:$0xff]
          %v3251 = vld [vmem:[#allocation2 + $0x118] sm:$0xff]
          %v3252 = vld [vmem:[#allocation2 + $0x120] sm:$0xff]
          %v3253 = vld [vmem:[#allocation2 + $0x128] sm:$0xff]
          %v3254 = vld [vmem:[#allocation2 + $0x130] sm:$0xff]
          %v3255 = vld [vmem:[#allocation2 + $0x138] sm:$0xff]
          %v3256 = vld [vmem:[#allocation2 + $0x140] sm:$0xff]
          %v3257 = vld [vmem:[#allocation2 + $0x148] sm:$0xff]
          %v3258 = vld [vmem:[#allocation2 + $0x150] sm:$0xff]
          %v3259 = vld [vmem:[#allocation2 + $0x158] sm:$0xff]
          %v3260 = vld [vmem:[#allocation2 + $0x160] sm:$0xff]
          %v3261 = vld [vmem:[#allocation2 + $0x168] sm:$0xff]
          %v3262 = vld [vmem:[#allocation2 + $0x170] sm:$0xff]
          %v3263 = vld [vmem:[#allocation2 + $0x178] sm:$0xff]
          %v3264 = vld [vmem:[#allocation2 + $0x180] sm:$0xff]
          %v3265 = vld [vmem:[#allocation2 + $0x188] sm:$0xff]
          %v3266 = vld [vmem:[#allocation2 + $0x190] sm:$0xff]
          %v3267 = vld [vmem:[#allocation2 + $0x198] sm:$0xff]
          %v3268 = vld [vmem:[#allocation2 + $0x1a0] sm:$0xff]
          %v3269 = vld [vmem:[#allocation2 + $0x1a8] sm:$0xff]
          %v3270 = vld [vmem:[#allocation2 + $0x1b0] sm:$0xff]
          %v3271 = vld [vmem:[#allocation2 + $0x1b8] sm:$0xff]
          %v3272 = vld [vmem:[#allocation2 + $0x1c0] sm:$0xff]
          %v3273 = vld [vmem:[#allocation2 + $0x1c8] sm:$0xff]
          %v3274 = vld [vmem:[#allocation2 + $0x1d0] sm:$0xff]
          %v3275 = vld [vmem:[#allocation2 + $0x1d8] sm:$0xff]
          %v3276 = vld [vmem:[#allocation2 + $0x1e0] sm:$0xff]
          %v3277 = vld [vmem:[#allocation2 + $0x1e8] sm:$0xff]
          %v3278 = vld [vmem:[#allocation2 + $0x1f0] sm:$0xff]
          %v3279 = vld [vmem:[#allocation2 + $0x1f8] sm:$0xff]
          %v3280 = vld [vmem:[#allocation2 + $0x200] sm:$0xff]
          %v3281 = vld [vmem:[#allocation2 + $0x208] sm:$0xff]
          %v3282 = vld [vmem:[#allocation2 + $0x210] sm:$0xff]
          %v3283 = vld [vmem:[#allocation2 + $0x218] sm:$0xff]
          %v3284 = vld [vmem:[#allocation2 + $0x220] sm:$0xff]
          %v3285 = vld [vmem:[#allocation2 + $0x228] sm:$0xff]
          %v3286 = vld [vmem:[#allocation2 + $0x230] sm:$0xff]
          %v3287 = vld [vmem:[#allocation2 + $0x238] sm:$0xff]
          %v3288 = vld [vmem:[#allocation2 + $0x240] sm:$0xff]
          %v3289 = vld [vmem:[#allocation2 + $0x248] sm:$0xff]
          %v3290 = vld [vmem:[#allocation2 + $0x250] sm:$0xff]
          %v3291 = vld [vmem:[#allocation2 + $0x258] sm:$0xff]
          %v3292 = vld [vmem:[#allocation2 + $0x260] sm:$0xff]
          %v3293 = vld [vmem:[#allocation2 + $0x268] sm:$0xff]
          %v3294 = vld [vmem:[#allocation2 + $0x270] sm:$0xff]
          %v3295 = vld [vmem:[#allocation2 + $0x278] sm:$0xff]
          %v3296 = vld [vmem:[#allocation2 + $0x280] sm:$0xff]
          %v3297 = vld [vmem:[#allocation2 + $0x288] sm:$0xff]
          %v3298 = vld [vmem:[#allocation2 + $0x290] sm:$0xff]
          %v3299 = vld [vmem:[#allocation2 + $0x298] sm:$0xff]
          %v3300 = vld [vmem:[#allocation2 + $0x2a0] sm:$0xff]
          %v3301 = vld [vmem:[#allocation2 + $0x2a8] sm:$0xff]
          %v3302 = vld [vmem:[#allocation2 + $0x2b0] sm:$0xff]
          %v3303 = vld [vmem:[#allocation2 + $0x2b8] sm:$0xff]
          %v3304 = vld [vmem:[#allocation2 + $0x2c0] sm:$0xff]
          %v3305 = vld [vmem:[#allocation2 + $0x2c8] sm:$0xff]
          %v3306 = vld [vmem:[#allocation2 + $0x2d0] sm:$0xff]
          %v3307 = vld [vmem:[#allocation2 + $0x2d8] sm:$0xff]
          %v3308 = vld [vmem:[#allocation2 + $0x2e0] sm:$0xff]
          %v3309 = vld [vmem:[#allocation2 + $0x2e8] sm:$0xff]
          %v3310 = vld [vmem:[#allocation2 + $0x2f0] sm:$0xff]
          %v3311 = vld [vmem:[#allocation2 + $0x2f8] sm:$0xff]
          %v3312 = vld [vmem:[#allocation2 + $0x300] sm:$0xff]
          %v3313 = vld [vmem:[#allocation2 + $0x308] sm:$0xff]
          %v3314 = vld [vmem:[#allocation2 + $0x310] sm:$0xff]
          %v3315 = vld [vmem:[#allocation2 + $0x318] sm:$0xff]
          %v3316 = vld [vmem:[#allocation2 + $0x320] sm:$0xff]
          %v3317 = vld [vmem:[#allocation2 + $0x328] sm:$0xff]
          %v3318 = vld [vmem:[#allocation2 + $0x330] sm:$0xff]
          %v3319 = vld [vmem:[#allocation2 + $0x338] sm:$0xff]
          %v3320 = vld [vmem:[#allocation2 + $0x340] sm:$0xff]
          %v3321 = vld [vmem:[#allocation2 + $0x348] sm:$0xff]
          %v3322 = vld [vmem:[#allocation2 + $0x350] sm:$0xff]
          %v3323 = vld [vmem:[#allocation2 + $0x358] sm:$0xff]
          %v3324 = vld [vmem:[#allocation2 + $0x360] sm:$0xff]
          %v3325 = vld [vmem:[#allocation2 + $0x368] sm:$0xff]
          %v3326 = vld [vmem:[#allocation2 + $0x370] sm:$0xff]
          %v3327 = vld [vmem:[#allocation2 + $0x378] sm:$0xff]
          %v3328 = vld [vmem:[#allocation2 + $0x380] sm:$0xff]
          %v3329 = vld [vmem:[#allocation2 + $0x388] sm:$0xff]
          %v3330 = vld [vmem:[#allocation2 + $0x390] sm:$0xff]
          %v3331 = vld [vmem:[#allocation2 + $0x398] sm:$0xff]
          %v3332 = vld [vmem:[#allocation2 + $0x3a0] sm:$0xff]
          %v3333 = vld [vmem:[#allocation2 + $0x3a8] sm:$0xff]
          %v3334 = vld [vmem:[#allocation2 + $0x3b0] sm:$0xff]
          %v3335 = vld [vmem:[#allocation2 + $0x3b8] sm:$0xff]
          %v3336 = vld [vmem:[#allocation2 + $0x3c0] sm:$0xff]
          %v3337 = vld [vmem:[#allocation2 + $0x3c8] sm:$0xff]
          %v3338 = vld [vmem:[#allocation2 + $0x3d0] sm:$0xff]
          %v3339 = vld [vmem:[#allocation2 + $0x3d8] sm:$0xff]
          %v3340 = vld [vmem:[#allocation2 + $0x3e0] sm:$0xff]
          %v3341 = vld [vmem:[#allocation2 + $0x3e8] sm:$0xff]
          %v3342 = vld [vmem:[#allocation2 + $0x3f0] sm:$0xff]
          %v3343 = vld [vmem:[#allocation2 + $0x3f8] sm:$0xff]
          %v3344 = vsel %vm2970, %v3216, 0.0
          %v3345 = vsel %vm2970, %v3217, 0.0
          %v3346 = vadd.f32 %v3344, %v3345
          %v3347 = vsel %vm2970, %v3218, 0.0
          %v3348 = vadd.f32 %v3346, %v3347
          %v3349 = vsel %vm2970, %v3219, 0.0
          %v3350 = vadd.f32 %v3348, %v3349
          %v3351 = vsel %vm2970, %v3220, 0.0
          %v3352 = vadd.f32 %v3350, %v3351
          %v3353 = vsel %vm2970, %v3221, 0.0
          %v3354 = vadd.f32 %v3352, %v3353
          %v3355 = vsel %vm2970, %v3222, 0.0
          %v3356 = vadd.f32 %v3354, %v3355
          %v3357 = vsel %vm2970, %v3223, 0.0
          %v3358 = vadd.f32 %v3356, %v3357
          %v3359 = vsel %vm2970, %v3224, 0.0
          %v3360 = vadd.f32 %v3358, %v3359
          %v3361 = vsel %vm2970, %v3225, 0.0
          %v3362 = vadd.f32 %v3360, %v3361
          %v3363 = vsel %vm2970, %v3226, 0.0
          %v3364 = vadd.f32 %v3362, %v3363
          %v3365 = vsel %vm2970, %v3227, 0.0
          %v3366 = vadd.f32 %v3364, %v3365
          %v3367 = vsel %vm2970, %v3228, 0.0
          %v3368 = vadd.f32 %v3366, %v3367
          %v3369 = vsel %vm2970, %v3229, 0.0
          %v3370 = vadd.f32 %v3368, %v3369
          %v3371 = vsel %vm2970, %v3230, 0.0
          %v3372 = vadd.f32 %v3370, %v3371
          %v3373 = vsel %vm2970, %v3231, 0.0
          %v3374 = vadd.f32 %v3372, %v3373
          %v3375 = vsel %vm2970, %v3232, 0.0
          %v3376 = vadd.f32 %v3374, %v3375
          %v3377 = vsel %vm2970, %v3233, 0.0
          %v3378 = vadd.f32 %v3376, %v3377
          %v3379 = vsel %vm2970, %v3234, 0.0
          %v3380 = vadd.f32 %v3378, %v3379
          %v3381 = vsel %vm2970, %v3235, 0.0
          %v3382 = vadd.f32 %v3380, %v3381
          %v3383 = vsel %vm2970, %v3236, 0.0
          %v3384 = vadd.f32 %v3382, %v3383
          %v3385 = vsel %vm2970, %v3237, 0.0
          %v3386 = vadd.f32 %v3384, %v3385
          %v3387 = vsel %vm2970, %v3238, 0.0
          %v3388 = vadd.f32 %v3386, %v3387
          %v3389 = vsel %vm2970, %v3239, 0.0
          %v3390 = vadd.f32 %v3388, %v3389
          %v3391 = vsel %vm2970, %v3240, 0.0
          %v3392 = vadd.f32 %v3390, %v3391
          %v3393 = vsel %vm2970, %v3241, 0.0
          %v3394 = vadd.f32 %v3392, %v3393
          %v3395 = vsel %vm2970, %v3242, 0.0
          %v3396 = vadd.f32 %v3394, %v3395
          %v3397 = vsel %vm2970, %v3243, 0.0
          %v3398 = vadd.f32 %v3396, %v3397
          %v3399 = vsel %vm2970, %v3244, 0.0
          %v3400 = vadd.f32 %v3398, %v3399
          %v3401 = vsel %vm2970, %v3245, 0.0
          %v3402 = vadd.f32 %v3400, %v3401
          %v3403 = vsel %vm2970, %v3246, 0.0
          %v3404 = vadd.f32 %v3402, %v3403
          %v3405 = vsel %vm2970, %v3247, 0.0
          %v3406 = vadd.f32 %v3404, %v3405
          %v3407 = vsel %vm2970, %v3248, 0.0
          %v3408 = vadd.f32 %v3406, %v3407
          %v3409 = vsel %vm2970, %v3249, 0.0
          %v3410 = vadd.f32 %v3408, %v3409
          %v3411 = vsel %vm2970, %v3250, 0.0
          %v3412 = vadd.f32 %v3410, %v3411
          %v3413 = vsel %vm2970, %v3251, 0.0
          %v3414 = vadd.f32 %v3412, %v3413
          %v3415 = vsel %vm2970, %v3252, 0.0
          %v3416 = vadd.f32 %v3414, %v3415
          %v3417 = vsel %vm2970, %v3253, 0.0
          %v3418 = vadd.f32 %v3416, %v3417
          %v3419 = vsel %vm2970, %v3254, 0.0
          %v3420 = vadd.f32 %v3418, %v3419
          %v3421 = vsel %vm2970, %v3255, 0.0
          %v3422 = vadd.f32 %v3420, %v3421
          %v3423 = vsel %vm2970, %v3256, 0.0
          %v3424 = vadd.f32 %v3422, %v3423
          %v3425 = vsel %vm2970, %v3257, 0.0
          %v3426 = vadd.f32 %v3424, %v3425
          %v3427 = vsel %vm2970, %v3258, 0.0
          %v3428 = vadd.f32 %v3426, %v3427
          %v3429 = vsel %vm2970, %v3259, 0.0
          %v3430 = vadd.f32 %v3428, %v3429
          %v3431 = vsel %vm2970, %v3260, 0.0
          %v3432 = vadd.f32 %v3430, %v3431
          %v3433 = vsel %vm2970, %v3261, 0.0
          %v3434 = vadd.f32 %v3432, %v3433
          %v3435 = vsel %vm2970, %v3262, 0.0
          %v3436 = vadd.f32 %v3434, %v3435
          %v3437 = vsel %vm2970, %v3263, 0.0
          %v3438 = vadd.f32 %v3436, %v3437
          %v3439 = vsel %vm2970, %v3264, 0.0
          %v3440 = vadd.f32 %v3438, %v3439
          %v3441 = vsel %vm2970, %v3265, 0.0
          %v3442 = vadd.f32 %v3440, %v3441
          %v3443 = vsel %vm2970, %v3266, 0.0
          %v3444 = vadd.f32 %v3442, %v3443
          %v3445 = vsel %vm2970, %v3267, 0.0
          %v3446 = vadd.f32 %v3444, %v3445
          %v3447 = vsel %vm2970, %v3268, 0.0
          %v3448 = vadd.f32 %v3446, %v3447
          %v3449 = vsel %vm2970, %v3269, 0.0
          %v3450 = vadd.f32 %v3448, %v3449
          %v3451 = vsel %vm2970, %v3270, 0.0
          %v3452 = vadd.f32 %v3450, %v3451
          %v3453 = vsel %vm2970, %v3271, 0.0
          %v3454 = vadd.f32 %v3452, %v3453
          %v3455 = vsel %vm2970, %v3272, 0.0
          %v3456 = vadd.f32 %v3454, %v3455
          %v3457 = vsel %vm2970, %v3273, 0.0
          %v3458 = vadd.f32 %v3456, %v3457
          %v3459 = vsel %vm2970, %v3274, 0.0
          %v3460 = vadd.f32 %v3458, %v3459
          %v3461 = vsel %vm2970, %v3275, 0.0
          %v3462 = vadd.f32 %v3460, %v3461
          %v3463 = vsel %vm2970, %v3276, 0.0
          %v3464 = vadd.f32 %v3462, %v3463
          %v3465 = vsel %vm2970, %v3277, 0.0
          %v3466 = vadd.f32 %v3464, %v3465
          %v3467 = vsel %vm2970, %v3278, 0.0
          %v3468 = vadd.f32 %v3466, %v3467
          %v3469 = vsel %vm2970, %v3279, 0.0
          %v3470 = vadd.f32 %v3468, %v3469
          %v3471 = vsel %vm2970, %v3280, 0.0
          %v3472 = vadd.f32 %v3470, %v3471
          %v3473 = vsel %vm2970, %v3281, 0.0
          %v3474 = vadd.f32 %v3472, %v3473
          %v3475 = vsel %vm2970, %v3282, 0.0
          %v3476 = vadd.f32 %v3474, %v3475
          %v3477 = vsel %vm2970, %v3283, 0.0
          %v3478 = vadd.f32 %v3476, %v3477
          %v3479 = vsel %vm2970, %v3284, 0.0
          %v3480 = vadd.f32 %v3478, %v3479
          %v3481 = vsel %vm2970, %v3285, 0.0
          %v3482 = vadd.f32 %v3480, %v3481
          %v3483 = vsel %vm2970, %v3286, 0.0
          %v3484 = vadd.f32 %v3482, %v3483
          %v3485 = vsel %vm2970, %v3287, 0.0
          %v3486 = vadd.f32 %v3484, %v3485
          %v3487 = vsel %vm2970, %v3288, 0.0
          %v3488 = vadd.f32 %v3486, %v3487
          %v3489 = vsel %vm2970, %v3289, 0.0
          %v3490 = vadd.f32 %v3488, %v3489
          %v3491 = vsel %vm2970, %v3290, 0.0
          %v3492 = vadd.f32 %v3490, %v3491
          %v3493 = vsel %vm2970, %v3291, 0.0
          %v3494 = vadd.f32 %v3492, %v3493
          %v3495 = vsel %vm2970, %v3292, 0.0
          %v3496 = vadd.f32 %v3494, %v3495
          %v3497 = vsel %vm2970, %v3293, 0.0
          %v3498 = vadd.f32 %v3496, %v3497
          %v3499 = vsel %vm2970, %v3294, 0.0
          %v3500 = vadd.f32 %v3498, %v3499
          %v3501 = vsel %vm2970, %v3295, 0.0
          %v3502 = vadd.f32 %v3500, %v3501
          %v3503 = vsel %vm2970, %v3296, 0.0
          %v3504 = vadd.f32 %v3502, %v3503
          %v3505 = vsel %vm2970, %v3297, 0.0
          %v3506 = vadd.f32 %v3504, %v3505
          %v3507 = vsel %vm2970, %v3298, 0.0
          %v3508 = vadd.f32 %v3506, %v3507
          %v3509 = vsel %vm2970, %v3299, 0.0
          %v3510 = vadd.f32 %v3508, %v3509
          %v3511 = vsel %vm2970, %v3300, 0.0
          %v3512 = vadd.f32 %v3510, %v3511
          %v3513 = vsel %vm2970, %v3301, 0.0
          %v3514 = vadd.f32 %v3512, %v3513
          %v3515 = vsel %vm2970, %v3302, 0.0
          %v3516 = vadd.f32 %v3514, %v3515
          %v3517 = vsel %vm2970, %v3303, 0.0
          %v3518 = vadd.f32 %v3516, %v3517
          %v3519 = vsel %vm2970, %v3304, 0.0
          %v3520 = vadd.f32 %v3518, %v3519
          %v3521 = vsel %vm2970, %v3305, 0.0
          %v3522 = vadd.f32 %v3520, %v3521
          %v3523 = vsel %vm2970, %v3306, 0.0
          %v3524 = vadd.f32 %v3522, %v3523
          %v3525 = vsel %vm2970, %v3307, 0.0
          %v3526 = vadd.f32 %v3524, %v3525
          %v3527 = vsel %vm2970, %v3308, 0.0
          %v3528 = vadd.f32 %v3526, %v3527
          %v3529 = vsel %vm2970, %v3309, 0.0
          %v3530 = vadd.f32 %v3528, %v3529
          %v3531 = vsel %vm2970, %v3310, 0.0
          %v3532 = vadd.f32 %v3530, %v3531
          %v3533 = vsel %vm2970, %v3311, 0.0
          %v3534 = vadd.f32 %v3532, %v3533
          %v3535 = vsel %vm2970, %v3312, 0.0
          %v3536 = vadd.f32 %v3534, %v3535
          %v3537 = vsel %vm2970, %v3313, 0.0
          %v3538 = vadd.f32 %v3536, %v3537
          %v3539 = vsel %vm2970, %v3314, 0.0
          %v3540 = vadd.f32 %v3538, %v3539
          %v3541 = vsel %vm2970, %v3315, 0.0
          %v3542 = vadd.f32 %v3540, %v3541
          %v3543 = vsel %vm2970, %v3316, 0.0
          %v3544 = vadd.f32 %v3542, %v3543
          %v3545 = vsel %vm2970, %v3317, 0.0
          %v3546 = vadd.f32 %v3544, %v3545
          %v3547 = vsel %vm2970, %v3318, 0.0
          %v3548 = vadd.f32 %v3546, %v3547
          %v3549 = vsel %vm2970, %v3319, 0.0
          %v3550 = vadd.f32 %v3548, %v3549
          %v3551 = vsel %vm2970, %v3320, 0.0
          %v3552 = vadd.f32 %v3550, %v3551
          %v3553 = vsel %vm2970, %v3321, 0.0
          %v3554 = vadd.f32 %v3552, %v3553
          %v3555 = vsel %vm2970, %v3322, 0.0
          %v3556 = vadd.f32 %v3554, %v3555
          %v3557 = vsel %vm2970, %v3323, 0.0
          %v3558 = vadd.f32 %v3556, %v3557
          %v3559 = vsel %vm2970, %v3324, 0.0
          %v3560 = vadd.f32 %v3558, %v3559
          %v3561 = vsel %vm2970, %v3325, 0.0
          %v3562 = vadd.f32 %v3560, %v3561
          %v3563 = vsel %vm2970, %v3326, 0.0
          %v3564 = vadd.f32 %v3562, %v3563
          %v3565 = vsel %vm2970, %v3327, 0.0
          %v3566 = vadd.f32 %v3564, %v3565
          %v3567 = vsel %vm2970, %v3328, 0.0
          %v3568 = vadd.f32 %v3566, %v3567
          %v3569 = vsel %vm2970, %v3329, 0.0
          %v3570 = vadd.f32 %v3568, %v3569
          %v3571 = vsel %vm2970, %v3330, 0.0
          %v3572 = vadd.f32 %v3570, %v3571
          %v3573 = vsel %vm2970, %v3331, 0.0
          %v3574 = vadd.f32 %v3572, %v3573
          %v3575 = vsel %vm2970, %v3332, 0.0
          %v3576 = vadd.f32 %v3574, %v3575
          %v3577 = vsel %vm2970, %v3333, 0.0
          %v3578 = vadd.f32 %v3576, %v3577
          %v3579 = vsel %vm2970, %v3334, 0.0
          %v3580 = vadd.f32 %v3578, %v3579
          %v3581 = vsel %vm2970, %v3335, 0.0
          %v3582 = vadd.f32 %v3580, %v3581
          %v3583 = vsel %vm2970, %v3336, 0.0
          %v3584 = vadd.f32 %v3582, %v3583
          %v3585 = vsel %vm2970, %v3337, 0.0
          %v3586 = vadd.f32 %v3584, %v3585
          %v3587 = vsel %vm2970, %v3338, 0.0
          %v3588 = vadd.f32 %v3586, %v3587
          %v3589 = vsel %vm2970, %v3339, 0.0
          %v3590 = vadd.f32 %v3588, %v3589
          %v3591 = vsel %vm2970, %v3340, 0.0
          %v3592 = vadd.f32 %v3590, %v3591
          %v3593 = vsel %vm2970, %v3341, 0.0
          %v3594 = vadd.f32 %v3592, %v3593
          %v3595 = vsel %vm2970, %v3342, 0.0
          %v3596 = vadd.f32 %v3594, %v3595
          %v3597 = vsel %vm2970, %v3343, 0.0
          %v3598 = vadd.f32 %v3596, %v3597
          %v3599 = vrot.slane %v3598, 4
          %v3600 = vadd.f32 %v3598, %v3599
          %v3601 = vrot.slane %v3600, 2
          %v3602 = vadd.f32 %v3600, %v3601
          %v3603 = vrot.slane %v3602, 1
          %v3604 = vadd.f32 %v3602, %v3603
          %v3605 = vsub.f32 %v3604, 1.0
          %v3606 = vmul.f32 %v3604, %v3605
          %v3607 = vadd.f32 %v3606, 1e-08
          %v3608 = vmul.f32 %v3607, 0.5
          %v3609 = vlaneseq
          %v3610 = vshrl.u32 %v3609, 7
          %v3611 = vlaneseq
          %v3612 = vand.u32 %v3611, 127
          %vm3613 = vcmp.eq.s32.totalorder %v3610, %v3612
          %v3614 = vsel %vm3613, %v3215, 0.0
          %v3615 = vsel %vm2970, %v3614, 0.0
          %v3616 = vrot.slane %v3615, 4
          %v3617 = vadd.f32 %v3615, %v3616
          %v3618 = vrot.slane %v3617, 2
          %v3619 = vadd.f32 %v3617, %v3618
          %v3620 = vrot.slane %v3619, 1
          %v3621 = vadd.f32 %v3619, %v3620
          %v3622 = vrcp.pop %v3608
          %v3623 = vmul.f32 %v3621, %v3622
          %vm3624 = vcmask 57344
          %v3625 = vsel %vm3624, %v3623, 0.0
          %3626 = vadd.xlane.f32.xlu0 %v3625
          %v3627 = vpop.xlane.xlu0 %3626
          %v3628 = vrot.slane %v3627, 4
          %v3629 = vadd.f32 %v3627, %v3628
          %v3630 = vrot.slane %v3629, 2
          %v3631 = vadd.f32 %v3629, %v3630
          %v3632 = vrot.slane %v3631, 1
          %v3633 = vadd.f32 %v3631, %v3632
          %s3634 = vtos %v3633
          %vm3635 = vcmp.lt.s32.totalorder %v3610, %v3612
          %v3636 = vsel %vm3635, %v3215, 0.0
          %v3637 = vsel %vm2970, %v3636, 0.0
          %3638 = vadd.xlane.f32.xlu0 %v3637
          %v3639 = vpop.xlane.xlu0 %3638
          %v3640 = vrot.slane %v3639, 4
          %v3641 = vadd.f32 %v3639, %v3640
          %v3642 = vrot.slane %v3641, 2
          %v3643 = vadd.f32 %v3641, %v3642
          %v3644 = vrot.slane %v3643, 1
          %v3645 = vadd.f32 %v3643, %v3644
          %s3646 = vtos %v3645
          %v3647 = vsel %vm2970, %v3215, 0.0
          %3648 = vadd.xlane.f32.xlu0 %v3647
          %v3649 = vpop.xlane.xlu0 %3648
          %v3650 = vrot.slane %v3649, 4
          %v3651 = vadd.f32 %v3649, %v3650
          %v3652 = vrot.slane %v3651, 2
          %v3653 = vadd.f32 %v3651, %v3652
          %v3654 = vrot.slane %v3653, 1
          %v3655 = vadd.f32 %v3653, %v3654
          %s3656 = vtos %v3655
          %s3657 = sadd.f32 %s3656, 1e-09
          %v3658 = vstv %s3657
          %v3659 = vrcp.pop %v3658
          %s3660 = vtos %v3659
          %s3661 = smul.f32 %s3646, %s3660
          %s3662 = ssub.f32 0.0, %s3634
          %s3663 = sadd.f32 %s3662, %s3661
          %s3664 = scalar_lea.smem [#allocation8], 0
          %3665 = sst [smem:[%s3664]] %s3663
        $region48: #{tpu_custom_call.1} parent=27 // pred_fallthru
          _
        // Predicated region
        $region49: #{tpu_custom_call.1} parent=27 // pred_check
          %p3666 = pneg %p91
        $region50: #{tpu_custom_call.1} parent=27 // pred_check_branch
          %3668 = sbr.rel (%p3666) target = $region52
        $region51: #{tpu_custom_call.1} parent=27 // pred_region
          %s3670 = ssub.s32 16, 16
          %3671 = vsyncadd [#allocation7], %s3670
          %3674 = dma.smem_to_hbm [#allocation8], 16, %s2, [#allocation7]
        $region52: #{tpu_custom_call.1} parent=27 // pred_fallthru
          _
        // Predicated region
        $region53: #{tpu_custom_call.1} parent=27 // pred_check
          %p3675 = pneg %p91
        $region54: #{tpu_custom_call.1} parent=27 // pred_check_branch
          %3677 = sbr.rel (%p3675) target = $region56
        $region55: #{tpu_custom_call.1} parent=27 // pred_region
          %3678 = dma.done [#allocation7], 16
        $region56: #{tpu_custom_call.1} parent=27 // pred_fallthru
          _
        %3679 = sfence
      $region28: #{tpu_custom_call.1} parent=5 // pred_fallthru
        _
      %p3680 = scmp.le.s32.totalorder 2, %s12
      // Predicated region
      $region57: #{tpu_custom_call.1} parent=5 // pred_check
        %p3681 = pneg %p3680
      $region58: #{tpu_custom_call.1} parent=5 // pred_check_branch
        %3683 = sbr.rel (%p3681) target = $region60
      $region59: #{tpu_custom_call.1} parent=5 // pred_region
        %s3684 = ssub.s32 %s12, 2
      $region60: #{tpu_custom_call.1} parent=5 // pred_fallthru
        _
    $region6: #{tpu_custom_call.1} parent=1 // loop_footer
      %s16 = sadd.s32 1, %s12
    $region7: #{tpu_custom_call.1} parent=1 // loop_footer_branch
      %11 = sbr.rel target = $region3
    $region8: #{tpu_custom_call.1} parent=1 // loop_exit
      _
    %3685 = vsyncpa [#allocation6], 1
    %s3686 = scalar_lea.sflag [#allocation6], 1
    %3687 = vsyncpa %s3686, 1
    %3688 = vsyncpa [#allocation7], 1
    %s3689 = scalar_lea.sflag [#allocation7], 1
    %3690 = vsyncpa %s3689, 1

</llo_original>
